<compile_context>
chip_gen: v6e
topology: v6e:2x2x1
jax: 0.10.0
libtpu: 0.0.40
codegen_flags: <defaults>
</compile_context>

<pallas_src>
import jax
import jax.numpy as jnp
from jax.experimental import pallas as pl
from jax.experimental.pallas import tpu as pltpu


def _round_up(x, m):
    return (x + m - 1) // m * m


# ------------------------------------------------------------------ kernel


def _char_decoder_kernel(ids_ref, h0_ref, c0_ref, embwih_ref, whh_ref,
                         bias_ref, wproj_ref, bproj_ref,
                         scores_ref, hout_ref, cout_ref,
                         xg_sc, hall_sc, h_sc, c_sc):
    """Fused embedding -> LSTM recurrence -> output projection.

    ids_ref   : (T*B, 1)  int32   flattened character ids
    h0/c0     : (B, Hp)   f32     initial state (lane-padded)
    embwih_ref: (Vp, 4Hp) bf16    emb @ Wih^T, gate g at cols [g*Hp, g*Hp+H)
    whh_ref   : (Hp, 4Hp) bf16    Whh^T (padded)
    bias_ref  : (1, 4Hp)  f32     b_ih + b_hh (padded)
    wproj_ref : (Hp, Vp)  bf16    Wproj^T (padded)
    bproj_ref : (1, Vp)   f32     b_proj (padded)
    scores_ref: (T*B, Vp) f32     output logits (lane-dense)
    hout/cout : (B, Hp)   f32     final state
    """
    TB, Vp = scores_ref.shape
    B, Hp = h0_ref.shape
    T = TB // B

    # ---- hoisted input projection (embedding fused as a one-hot matmul) ----
    # xg[r, :] = emb_wih[ids[r], :] + bias   -- one (T*B,Vp)@(Vp,4Hp) MXU call.
    ids = ids_ref[...]                                          # (TB, 1) i32
    lane = jax.lax.broadcasted_iota(jnp.int32, (TB, Vp), 1)     # (TB, Vp)
    onehot = jnp.where(lane == ids, 1.0, 0.0).astype(jnp.bfloat16)
    xg_sc[...] = (jnp.dot(onehot, embwih_ref[...],
                          preferred_element_type=jnp.float32)
                  + bias_ref[...])

    h_sc[...] = h0_ref[...]
    c_sc[...] = c0_ref[...]

    # ---- serial recurrence: only h @ Whh^T remains on the per-step path ----
    # TODO(synk): for large T, cap the unroll (e.g. unroll=4) to bound vreg
    # live ranges; full unroll is fine at toy T=8.
    @pl.loop(0, T, unroll=True)
    def _(t):
        h_prev = h_sc[...]                                      # (B, Hp) f32
        c_prev = c_sc[...]
        gates = (xg_sc[pl.ds(t * B, B), :]
                 + jnp.dot(h_prev.astype(jnp.bfloat16), whh_ref[...],
                           preferred_element_type=jnp.float32))
        # Each gate slice is exactly one lane-aligned 128-wide block.
        i_g = jax.nn.sigmoid(gates[:, 0 * Hp:1 * Hp])
        f_g = jax.nn.sigmoid(gates[:, 1 * Hp:2 * Hp])
        g_g = jnp.tanh(gates[:, 2 * Hp:3 * Hp])
        o_g = jax.nn.sigmoid(gates[:, 3 * Hp:4 * Hp])
        c_new = f_g * c_prev + i_g * g_g
        h_new = o_g * jnp.tanh(c_new)
        h_sc[...] = h_new
        c_sc[...] = c_new
        hall_sc[pl.ds(t * B, B), :] = h_new                     # f32 scratch

    hout_ref[...] = h_sc[...]
    cout_ref[...] = c_sc[...]

    # ---- fused output projection: one (T*B,Hp)@(Hp,Vp) matmul, lane-dense ---
    scores_ref[...] = (jnp.dot(hall_sc[...].astype(jnp.bfloat16),
                               wproj_ref[...],
                               preferred_element_type=jnp.float32)
                       + bproj_ref[...])


# ------------------------------------------------------------------ wrapper


def _place_gate_cols(src, H, Hp):
    """src: (K, 4H), gate g at cols [g*H,(g+1)*H) -> (K, 4*Hp) with gate g at g*Hp."""
    K = src.shape[0]
    out = jnp.zeros((K, 4 * Hp), src.dtype)
    for g in range(4):
        out = out.at[:, g * Hp:g * Hp + H].set(src[:, g * H:(g + 1) * H])
    return out


def char_decoder_forward(input_ids, params, dec_hidden=None):
    """Pallas implementation of CharDecoder.forward.

    input_ids : (T, B) int32
    params    : dict with embedding / LSTM / projection weights (PyTorch shapes)
    dec_hidden: optional tuple of (1, B, H) float32 tensors
    returns   : scores (T, B, V), (h_n, c_n) each (1, B, H)
    """
    emb = params["emb"]            # (V, E)
    w_ih = params["w_ih"]          # (4H, E)
    w_hh = params["w_hh"]          # (4H, H)
    b_ih = params["b_ih"]          # (4H,)
    b_hh = params["b_hh"]          # (4H,)
    w_proj = params["w_proj"]      # (V, H)
    b_proj = params["b_proj"]      # (V,)

    T, B = input_ids.shape
    V, _E = emb.shape
    H = w_hh.shape[1]
    Hp = _round_up(H, 128)         # lane-aligned hidden size
    Vp = _round_up(V, 128)         # lane-dense scores / one-hot width
    TB = T * B

    ids = input_ids.reshape(TB, 1).astype(jnp.int32)

    if dec_hidden is None:
        h0 = jnp.zeros((B, Hp), jnp.float32)
        c0 = jnp.zeros((B, Hp), jnp.float32)
    else:
        h0 = jnp.pad(dec_hidden[0].reshape(B, H).astype(jnp.float32),
                     ((0, 0), (0, Hp - H)))
        c0 = jnp.pad(dec_hidden[1].reshape(B, H).astype(jnp.float32),
                     ((0, 0), (0, Hp - H)))

    # Weight preprocessing (done once; at training scale these are cached
    # outside the step function).  emb row at padding_idx is zero, so the
    # corresponding emb_wih row is zero too.
    emb_wih = jnp.dot(emb, w_ih.T)                                    # (V, 4H)
    embwih_p = jnp.pad(_place_gate_cols(emb_wih, H, Hp),
                       ((0, Vp - V), (0, 0))).astype(jnp.bfloat16)    # (Vp,4Hp)
    whh_p = jnp.pad(_place_gate_cols(w_hh.T, H, Hp),
                    ((0, Hp - H), (0, 0))).astype(jnp.bfloat16)       # (Hp,4Hp)
    bias = (b_ih + b_hh).reshape(1, 4 * H)
    bias_p = _place_gate_cols(bias, H, Hp).astype(jnp.float32)        # (1, 4Hp)
    wproj_p = jnp.pad(w_proj.T, ((0, Hp - H), (0, Vp - V))
                      ).astype(jnp.bfloat16)                          # (Hp, Vp)
    bproj_p = jnp.pad(b_proj, (0, Vp - V)).reshape(1, Vp)             # (1, Vp)

    # Single fused kernel invocation.
    # TODO(synk): on v7x with non-trivial B, split the batch over the two
    # TensorCores (leading "parallel" grid axis over B) and single-buffer the
    # constant weight operands (pipeline_mode=pl.Buffered(1), vmem_limit_bytes).
    scores_p, h_n_p, c_n_p = pl.pallas_call(
        _char_decoder_kernel,
        out_shape=(
            jax.ShapeDtypeStruct((TB, Vp), jnp.float32),
            jax.ShapeDtypeStruct((B, Hp), jnp.float32),
            jax.ShapeDtypeStruct((B, Hp), jnp.float32),
        ),
        grid=(1,),
        in_specs=[
            pl.BlockSpec((TB, 1), lambda i: (0, 0)),           # ids
            pl.BlockSpec((B, Hp), lambda i: (0, 0)),           # h0
            pl.BlockSpec((B, Hp), lambda i: (0, 0)),           # c0
            pl.BlockSpec((Vp, 4 * Hp), lambda i: (0, 0)),      # emb @ Wih^T
            pl.BlockSpec((Hp, 4 * Hp), lambda i: (0, 0)),      # Whh^T
            pl.BlockSpec((1, 4 * Hp), lambda i: (0, 0)),       # bias
            pl.BlockSpec((Hp, Vp), lambda i: (0, 0)),          # Wproj^T
            pl.BlockSpec((1, Vp), lambda i: (0, 0)),           # b_proj
        ],
        out_specs=[
            pl.BlockSpec((TB, Vp), lambda i: (0, 0)),          # scores
            pl.BlockSpec((B, Hp), lambda i: (0, 0)),           # h_n
            pl.BlockSpec((B, Hp), lambda i: (0, 0)),           # c_n
        ],
        scratch_shapes=[
            pltpu.VMEM((TB, 4 * Hp), jnp.float32),             # hoisted x-gates
            pltpu.VMEM((TB, Hp), jnp.float32),                 # all hidden states
            pltpu.VMEM((B, Hp), jnp.float32),                  # h carry
            pltpu.VMEM((B, Hp), jnp.float32),                  # c carry
        ],
        compiler_params=pltpu.CompilerParams(
            dimension_semantics=("arbitrary",),
        ),
    )(ids, h0, c0, embwih_p, whh_p, bias_p, wproj_p, bproj_p)

    scores = scores_p.reshape(T, B, Vp)[:, :, :V]
    h_n = h_n_p[:, :H].reshape(1, B, H)
    c_n = c_n_p[:, :H].reshape(1, B, H)
    return scores, (h_n, c_n)


# ------------------------------------------------------------------ references


def _reference_forward_f32(input_ids, params, dec_hidden):
    """Pure-f32 reference (mirrors nn.Embedding -> nn.LSTM -> nn.Linear)."""
    emb, w_ih, w_hh = params["emb"], params["w_ih"], params["w_hh"]
    b_ih, b_hh = params["b_ih"], params["b_hh"]
    w_proj, b_proj = params["w_proj"], params["b_proj"]
    H = w_hh.shape[1]
    B = input_ids.shape[1]

    X = emb[input_ids]
    h = dec_hidden[0].reshape(B, H).astype(jnp.float32)
    c = dec_hidden[1].reshape(B, H).astype(jnp.float32)

    def step(carry, x_t):
        h, c = carry
        gates = x_t @ w_ih.T + h @ w_hh.T + (b_ih + b_hh)
        i = jax.nn.sigmoid(gates[:, 0 * H:1 * H])
        f = jax.nn.sigmoid(gates[:, 1 * H:2 * H])
        g = jnp.tanh(gates[:, 2 * H:3 * H])
        o = jax.nn.sigmoid(gates[:, 3 * H:4 * H])
        c = f * c + i * g
        h = o * jnp.tanh(c)
        return (h, c), h @ w_proj.T + b_proj

    (h, c), scores = jax.lax.scan(step, (h, c), X)
    return scores, (h[None], c[None])


def _reference_kernel_math(input_ids, params, dec_hidden):
    """Reference mirroring the kernel's math exactly: embedding folded into the
    input projection, bf16 MXU operands with f32 accumulation, f32 gate math."""
    emb, w_ih, w_hh = params["emb"], params["w_ih"], params["w_hh"]
    b_ih, b_hh = params["b_ih"], params["b_hh"]
    w_proj, b_proj = params["w_proj"], params["b_proj"]
    H = w_hh.shape[1]
    B = input_ids.shape[1]
    bf = jnp.bfloat16

    emb_wih = jnp.dot(emb, w_ih.T).astype(bf).astype(jnp.float32)    # (V, 4H)
    xg = emb_wih[input_ids] + (b_ih + b_hh)                          # (T, B, 4H)
    whh_bf = w_hh.T.astype(bf)
    wproj_bf = w_proj.T.astype(bf)

    h = dec_hidden[0].reshape(B, H).astype(jnp.float32)
    c = dec_hidden[1].reshape(B, H).astype(jnp.float32)

    def step(carry, xg_t):
        h, c = carry
        gates = xg_t + jnp.dot(h.astype(bf), whh_bf,
                               preferred_element_type=jnp.float32)
        i = jax.nn.sigmoid(gates[:, 0 * H:1 * H])
        f = jax.nn.sigmoid(gates[:, 1 * H:2 * H])
        g = jnp.tanh(gates[:, 2 * H:3 * H])
        o = jax.nn.sigmoid(gates[:, 3 * H:4 * H])
        c = f * c + i * g
        h = o * jnp.tanh(c)
        s = jnp.dot(h.astype(bf), wproj_bf,
                    preferred_element_type=jnp.float32) + b_proj
        return (h, c), s

    (h, c), scores = jax.lax.scan(step, (h, c), xg)
    return scores, (h[None], c[None])


def init_params(key, hidden_size, char_embedding_size, vocab_size, pad_idx):
    """Deterministic synthetic parameters with PyTorch-module shapes."""
    ks = jax.random.split(key, 7)
    k = 1.0 / jnp.sqrt(hidden_size)
    emb = jax.random.normal(ks[0], (vocab_size, char_embedding_size), jnp.float32)
    emb = emb.at[pad_idx].set(0.0)   # nn.Embedding(padding_idx=...)
    return {
        "emb": emb,
        "w_ih": jax.random.uniform(ks[1], (4 * hidden_size, char_embedding_size),
                                   jnp.float32, -k, k),
        "w_hh": jax.random.uniform(ks[2], (4 * hidden_size, hidden_size),
                                   jnp.float32, -k, k),
        "b_ih": jax.random.uniform(ks[3], (4 * hidden_size,), jnp.float32, -k, k),
        "b_hh": jax.random.uniform(ks[4], (4 * hidden_size,), jnp.float32, -k, k),
        "w_proj": jax.random.uniform(ks[5], (vocab_size, hidden_size),
                                     jnp.float32, -k, k),
        "b_proj": jax.random.uniform(ks[6], (vocab_size,), jnp.float32, -k, k),
    }


if __name__ == "__main__":
    T, B = 8, 2                 # (length, batch_size)
    hidden_size = 32
    char_embedding_size = 50
    vocab_size = 30             # synthetic len(target_vocab.char2id)
    pad_idx = 0                 # synthetic target_vocab.char_pad

    key = jax.random.PRNGKey(0)
    k_param, k_inp, k_h, k_c = jax.random.split(key, 4)

    params = init_params(k_param, hidden_size, char_embedding_size,
                         vocab_size, pad_idx)

    input_ids = jax.random.randint(k_inp, (T, B), 0, vocab_size, jnp.int32)
    dec_hidden = (
        jax.random.normal(k_h, (1, B, hidden_size), jnp.float32),
        jax.random.normal(k_c, (1, B, hidden_size), jnp.float32),
    )

    scores, (h_n, c_n) = char_decoder_forward(input_ids, params, dec_hidden)
    jax.block_until_ready((scores, h_n, c_n))

    assert scores.shape == (T, B, vocab_size)
    assert h_n.shape == (1, B, hidden_size) and c_n.shape == (1, B, hidden_size)

    # Strict check vs a reference that mirrors the kernel's bf16-operand /
    # f32-accumulate scheme (validates padding/layout/fold/recurrence).
    ref_s_bf, (ref_h_bf, ref_c_bf) = _reference_kernel_math(
        input_ids, params, dec_hidden)
    assert jnp.allclose(scores, ref_s_bf, atol=2e-3, rtol=2e-3)
    assert jnp.allclose(h_n, ref_h_bf, atol=2e-3, rtol=2e-3)
    assert jnp.allclose(c_n, ref_c_bf, atol=2e-3, rtol=2e-3)

    # Loose check vs the full-f32 PyTorch-equivalent forward (bf16 MXU operands
    # introduce bounded rounding noise in the recurrence).
    ref_s, (ref_h, ref_c) = _reference_forward_f32(input_ids, params, dec_hidden)
    assert jnp.allclose(scores, ref_s, atol=1e-1, rtol=1e-1)
    assert jnp.allclose(h_n, ref_h, atol=1e-1, rtol=1e-1)
    assert jnp.allclose(c_n, ref_c, atol=1e-1, rtol=1e-1)

    print("KERNEL_OK")
</pallas_src>

<mosaic_0001>
module attributes {stable_mosaic.version = 11 : i64} {
  func.func @_char_decoder_kernel(%arg0: i32, %arg1: memref<16x1xi32, #tpu.memory_space<vmem>>, %arg2: memref<2x128xf32, #tpu.memory_space<vmem>>, %arg3: memref<2x128xf32, #tpu.memory_space<vmem>>, %arg4: memref<128x512xbf16, #tpu.memory_space<vmem>>, %arg5: memref<128x512xbf16, #tpu.memory_space<vmem>>, %arg6: memref<1x512xf32, #tpu.memory_space<vmem>>, %arg7: memref<128x128xbf16, #tpu.memory_space<vmem>>, %arg8: memref<1x128xf32, #tpu.memory_space<vmem>>, %arg9: memref<16x128xf32, #tpu.memory_space<vmem>>, %arg10: memref<2x128xf32, #tpu.memory_space<vmem>>, %arg11: memref<2x128xf32, #tpu.memory_space<vmem>>, %arg12: memref<16x512xf32, #tpu.memory_space<vmem>>, %arg13: memref<16x128xf32, #tpu.memory_space<vmem>>, %arg14: memref<2x128xf32, #tpu.memory_space<vmem>>, %arg15: memref<2x128xf32, #tpu.memory_space<vmem>>) attributes {dimension_semantics = [#tpu.dimension_semantics<arbitrary>], iteration_bounds = array<i64: 1>, scalar_prefetch = 0 : i64, scratch_operands = 4 : i64, tpu.core_type = #tpu.core_type<tc>, window_params = [{pipeline_mode = #tpu.pipeline_mode<synchronous>, transform_indices = @transform_0, window_bounds = array<i64: 16, 1>}, {pipeline_mode = #tpu.pipeline_mode<synchronous>, transform_indices = @transform_1, window_bounds = array<i64: 2, 128>}, {pipeline_mode = #tpu.pipeline_mode<synchronous>, transform_indices = @transform_2, window_bounds = array<i64: 2, 128>}, {pipeline_mode = #tpu.pipeline_mode<synchronous>, transform_indices = @transform_3, window_bounds = array<i64: 128, 512>}, {pipeline_mode = #tpu.pipeline_mode<synchronous>, transform_indices = @transform_4, window_bounds = array<i64: 128, 512>}, {pipeline_mode = #tpu.pipeline_mode<synchronous>, transform_indices = @transform_5, window_bounds = array<i64: 1, 512>}, {pipeline_mode = #tpu.pipeline_mode<synchronous>, transform_indices = @transform_6, window_bounds = array<i64: 128, 128>}, {pipeline_mode = #tpu.pipeline_mode<synchronous>, transform_indices = @transform_7, window_bounds = array<i64: 1, 128>}, {pipeline_mode = #tpu.pipeline_mode<synchronous>, transform_indices = @transform_8, window_bounds = array<i64: 16, 128>}, {pipeline_mode = #tpu.pipeline_mode<synchronous>, transform_indices = @transform_9, window_bounds = array<i64: 2, 128>}, {pipeline_mode = #tpu.pipeline_mode<synchronous>, transform_indices = @transform_10, window_bounds = array<i64: 2, 128>}]} {
    %c0 = arith.constant 0 : index
    %c0_0 = arith.constant 0 : index
    %0 = vector.load %arg1[%c0, %c0_0] : memref<16x1xi32, #tpu.memory_space<vmem>>, vector<16x1xi32>
    %1 = tpu.iota {dimensions = array<i32: 1>} : vector<16x128xi32>
    %2 = vector.broadcast %0 : vector<16x1xi32> to vector<16x128xi32>
    %3 = arith.cmpi eq, %1, %2 : vector<16x128xi32>
    %cst = arith.constant 1.000000e+00 : f32
    %cst_1 = arith.constant 0.000000e+00 : f32
    %4 = vector.broadcast %cst : f32 to vector<16x128xf32>
    %5 = vector.broadcast %cst_1 : f32 to vector<16x128xf32>
    %6 = arith.select %3, %4, %5 : vector<16x128xi1>, vector<16x128xf32>
    %7 = arith.truncf %6 : vector<16x128xf32> to vector<16x128xbf16>
    %c0_2 = arith.constant 0 : index
    %c0_3 = arith.constant 0 : index
    %8 = vector.load %arg4[%c0_2, %c0_3] : memref<128x512xbf16, #tpu.memory_space<vmem>>, vector<128x512xbf16>
    %cst_4 = arith.constant dense<0.000000e+00> : vector<16x512xf32>
    %9 = tpu.matmul %7, %8, %cst_4 {dimension_numbers = #tpu.dot_dimension_numbers<[1], [0], [0], [1], [0, 0, 1, 1], [], []>} : vector<16x128xbf16>, vector<128x512xbf16>, vector<16x512xf32> -> vector<16x512xf32>
    %c0_5 = arith.constant 0 : index
    %c0_6 = arith.constant 0 : index
    %10 = vector.load %arg6[%c0_5, %c0_6] : memref<1x512xf32, #tpu.memory_space<vmem>>, vector<1x512xf32>
    %11 = vector.broadcast %10 : vector<1x512xf32> to vector<16x512xf32>
    %12 = arith.addf %9, %11 : vector<16x512xf32>
    %c0_7 = arith.constant 0 : index
    %c0_8 = arith.constant 0 : index
    %13 = vector.load %arg12[%c0_7, %c0_8] : memref<16x512xf32, #tpu.memory_space<vmem>>, vector<16x512xf32>
    tpu.vector_store %arg12[%c0_7, %c0_8], %12 {strides = array<i32>} : memref<16x512xf32, #tpu.memory_space<vmem>>, vector<16x512xf32>,
    %c0_9 = arith.constant 0 : index
    %c0_10 = arith.constant 0 : index
    %14 = vector.load %arg2[%c0_9, %c0_10] : memref<2x128xf32, #tpu.memory_space<vmem>>, vector<2x128xf32>
    %c0_11 = arith.constant 0 : index
    %c0_12 = arith.constant 0 : index
    %15 = vector.load %arg14[%c0_11, %c0_12] : memref<2x128xf32, #tpu.memory_space<vmem>>, vector<2x128xf32>
    tpu.vector_store %arg14[%c0_11, %c0_12], %14 {strides = array<i32>} : memref<2x128xf32, #tpu.memory_space<vmem>>, vector<2x128xf32>,
    %c0_13 = arith.constant 0 : index
    %c0_14 = arith.constant 0 : index
    %16 = vector.load %arg3[%c0_13, %c0_14] : memref<2x128xf32, #tpu.memory_space<vmem>>, vector<2x128xf32>
    %c0_15 = arith.constant 0 : index
    %c0_16 = arith.constant 0 : index
    %17 = vector.load %arg15[%c0_15, %c0_16] : memref<2x128xf32, #tpu.memory_space<vmem>>, vector<2x128xf32>
    tpu.vector_store %arg15[%c0_15, %c0_16], %16 {strides = array<i32>} : memref<2x128xf32, #tpu.memory_space<vmem>>, vector<2x128xf32>,
    %c0_i32 = arith.constant 0 : i32
    %c1_i32 = arith.constant 1 : i32
    %18 = arith.muli %c0_i32, %c1_i32 : i32
    %c0_i32_17 = arith.constant 0 : i32
    %19 = arith.addi %c0_i32_17, %18 : i32
    %c0_18 = arith.constant 0 : index
    %c0_19 = arith.constant 0 : index
    %20 = vector.load %arg14[%c0_18, %c0_19] : memref<2x128xf32, #tpu.memory_space<vmem>>, vector<2x128xf32>
    %c0_20 = arith.constant 0 : index
    %c0_21 = arith.constant 0 : index
    %21 = vector.load %arg15[%c0_20, %c0_21] : memref<2x128xf32, #tpu.memory_space<vmem>>, vector<2x128xf32>
    %c2_i32 = arith.constant 2 : i32
    %22 = arith.muli %19, %c2_i32 : i32
    %23 = arith.index_cast %22 : i32 to index
    %c0_22 = arith.constant 0 : index
    %24 = vector.load %arg12[%23, %c0_22] : memref<16x512xf32, #tpu.memory_space<vmem>>, vector<2x512xf32>
    %25 = arith.truncf %20 : vector<2x128xf32> to vector<2x128xbf16>
    %c0_23 = arith.constant 0 : index
    %c0_24 = arith.constant 0 : index
    %26 = vector.load %arg5[%c0_23, %c0_24] : memref<128x512xbf16, #tpu.memory_space<vmem>>, vector<128x512xbf16>
    %cst_25 = arith.constant dense<0.000000e+00> : vector<2x512xf32>
    %27 = tpu.matmul %25, %26, %cst_25 {dimension_numbers = #tpu.dot_dimension_numbers<[1], [0], [0], [1], [0, 0, 1, 1], [], []>} : vector<2x128xbf16>, vector<128x512xbf16>, vector<2x512xf32> -> vector<2x512xf32>
    %28 = arith.addf %24, %27 : vector<2x512xf32>
    %29 = vector.extract_strided_slice %28 {offsets = [0, 0], sizes = [2, 128], strides = [1, 1]} : vector<2x512xf32> to vector<2x128xf32>
    %30 = arith.negf %29 : vector<2x128xf32>
    %31 = math.exp %30 : vector<2x128xf32>
    %cst_26 = arith.constant 1.000000e+00 : f32
    %32 = vector.broadcast %cst_26 : f32 to vector<2x128xf32>
    %33 = arith.addf %32, %31 : vector<2x128xf32>
    %34 = arith.divf %32, %33 : vector<2x128xf32>
    %35 = vector.extract_strided_slice %28 {offsets = [0, 128], sizes = [2, 128], strides = [1, 1]} : vector<2x512xf32> to vector<2x128xf32>
    %36 = arith.negf %35 : vector<2x128xf32>
    %37 = math.exp %36 : vector<2x128xf32>
    %cst_27 = arith.constant 1.000000e+00 : f32
    %38 = vector.broadcast %cst_27 : f32 to vector<2x128xf32>
    %39 = arith.addf %38, %37 : vector<2x128xf32>
    %40 = arith.divf %38, %39 : vector<2x128xf32>
    %41 = vector.extract_strided_slice %28 {offsets = [0, 256], sizes = [2, 128], strides = [1, 1]} : vector<2x512xf32> to vector<2x128xf32>
    %42 = math.tanh %41 : vector<2x128xf32>
    %43 = vector.extract_strided_slice %28 {offsets = [0, 384], sizes = [2, 128], strides = [1, 1]} : vector<2x512xf32> to vector<2x128xf32>
    %44 = arith.negf %43 : vector<2x128xf32>
    %45 = math.exp %44 : vector<2x128xf32>
    %cst_28 = arith.constant 1.000000e+00 : f32
    %46 = vector.broadcast %cst_28 : f32 to vector<2x128xf32>
    %47 = arith.addf %46, %45 : vector<2x128xf32>
    %48 = arith.divf %46, %47 : vector<2x128xf32>
    %49 = arith.mulf %40, %21 : vector<2x128xf32>
    %50 = arith.mulf %34, %42 : vector<2x128xf32>
    %51 = arith.addf %49, %50 : vector<2x128xf32>
    %52 = math.tanh %51 : vector<2x128xf32>
    %53 = arith.mulf %48, %52 : vector<2x128xf32>
    %c0_29 = arith.constant 0 : index
    %c0_30 = arith.constant 0 : index
    %54 = vector.load %arg14[%c0_29, %c0_30] : memref<2x128xf32, #tpu.memory_space<vmem>>, vector<2x128xf32>
    tpu.vector_store %arg14[%c0_29, %c0_30], %53 {strides = array<i32>} : memref<2x128xf32, #tpu.memory_space<vmem>>, vector<2x128xf32>,
    %c0_31 = arith.constant 0 : index
    %c0_32 = arith.constant 0 : index
    %55 = vector.load %arg15[%c0_31, %c0_32] : memref<2x128xf32, #tpu.memory_space<vmem>>, vector<2x128xf32>
    tpu.vector_store %arg15[%c0_31, %c0_32], %51 {strides = array<i32>} : memref<2x128xf32, #tpu.memory_space<vmem>>, vector<2x128xf32>,
    %c2_i32_33 = arith.constant 2 : i32
    %56 = arith.muli %19, %c2_i32_33 : i32
    %57 = arith.index_cast %56 : i32 to index
    %c0_34 = arith.constant 0 : index
    %58 = vector.load %arg13[%57, %c0_34] : memref<16x128xf32, #tpu.memory_space<vmem>>, vector<2x128xf32>
    tpu.vector_store %arg13[%57, %c0_34], %53 {strides = array<i32>} : memref<16x128xf32, #tpu.memory_space<vmem>>, vector<2x128xf32>,
    %c1_i32_35 = arith.constant 1 : i32
    %c1_i32_36 = arith.constant 1 : i32
    %59 = arith.muli %c1_i32_35, %c1_i32_36 : i32
    %c0_i32_37 = arith.constant 0 : i32
    %60 = arith.addi %c0_i32_37, %59 : i32
    %c0_38 = arith.constant 0 : index
    %c0_39 = arith.constant 0 : index
    %61 = vector.load %arg14[%c0_38, %c0_39] : memref<2x128xf32, #tpu.memory_space<vmem>>, vector<2x128xf32>
    %c0_40 = arith.constant 0 : index
    %c0_41 = arith.constant 0 : index
    %62 = vector.load %arg15[%c0_40, %c0_41] : memref<2x128xf32, #tpu.memory_space<vmem>>, vector<2x128xf32>
    %c2_i32_42 = arith.constant 2 : i32
    %63 = arith.muli %60, %c2_i32_42 : i32
    %64 = arith.index_cast %63 : i32 to index
    %c0_43 = arith.constant 0 : index
    %65 = vector.load %arg12[%64, %c0_43] : memref<16x512xf32, #tpu.memory_space<vmem>>, vector<2x512xf32>
    %66 = arith.truncf %61 : vector<2x128xf32> to vector<2x128xbf16>
    %c0_44 = arith.constant 0 : index
    %c0_45 = arith.constant 0 : index
    %67 = vector.load %arg5[%c0_44, %c0_45] : memref<128x512xbf16, #tpu.memory_space<vmem>>, vector<128x512xbf16>
    %cst_46 = arith.constant dense<0.000000e+00> : vector<2x512xf32>
    %68 = tpu.matmul %66, %67, %cst_46 {dimension_numbers = #tpu.dot_dimension_numbers<[1], [0], [0], [1], [0, 0, 1, 1], [], []>} : vector<2x128xbf16>, vector<128x512xbf16>, vector<2x512xf32> -> vector<2x512xf32>
    %69 = arith.addf %65, %68 : vector<2x512xf32>
    %70 = vector.extract_strided_slice %69 {offsets = [0, 0], sizes = [2, 128], strides = [1, 1]} : vector<2x512xf32> to vector<2x128xf32>
    %71 = arith.negf %70 : vector<2x128xf32>
    %72 = math.exp %71 : vector<2x128xf32>
    %cst_47 = arith.constant 1.000000e+00 : f32
    %73 = vector.broadcast %cst_47 : f32 to vector<2x128xf32>
    %74 = arith.addf %73, %72 : vector<2x128xf32>
    %75 = arith.divf %73, %74 : vector<2x128xf32>
    %76 = vector.extract_strided_slice %69 {offsets = [0, 128], sizes = [2, 128], strides = [1, 1]} : vector<2x512xf32> to vector<2x128xf32>
    %77 = arith.negf %76 : vector<2x128xf32>
    %78 = math.exp %77 : vector<2x128xf32>
    %cst_48 = arith.constant 1.000000e+00 : f32
    %79 = vector.broadcast %cst_48 : f32 to vector<2x128xf32>
    %80 = arith.addf %79, %78 : vector<2x128xf32>
    %81 = arith.divf %79, %80 : vector<2x128xf32>
    %82 = vector.extract_strided_slice %69 {offsets = [0, 256], sizes = [2, 128], strides = [1, 1]} : vector<2x512xf32> to vector<2x128xf32>
    %83 = math.tanh %82 : vector<2x128xf32>
    %84 = vector.extract_strided_slice %69 {offsets = [0, 384], sizes = [2, 128], strides = [1, 1]} : vector<2x512xf32> to vector<2x128xf32>
    %85 = arith.negf %84 : vector<2x128xf32>
    %86 = math.exp %85 : vector<2x128xf32>
    %cst_49 = arith.constant 1.000000e+00 : f32
    %87 = vector.broadcast %cst_49 : f32 to vector<2x128xf32>
    %88 = arith.addf %87, %86 : vector<2x128xf32>
    %89 = arith.divf %87, %88 : vector<2x128xf32>
    %90 = arith.mulf %81, %62 : vector<2x128xf32>
    %91 = arith.mulf %75, %83 : vector<2x128xf32>
    %92 = arith.addf %90, %91 : vector<2x128xf32>
    %93 = math.tanh %92 : vector<2x128xf32>
    %94 = arith.mulf %89, %93 : vector<2x128xf32>
    %c0_50 = arith.constant 0 : index
    %c0_51 = arith.constant 0 : index
    %95 = vector.load %arg14[%c0_50, %c0_51] : memref<2x128xf32, #tpu.memory_space<vmem>>, vector<2x128xf32>
    tpu.vector_store %arg14[%c0_50, %c0_51], %94 {strides = array<i32>} : memref<2x128xf32, #tpu.memory_space<vmem>>, vector<2x128xf32>,
    %c0_52 = arith.constant 0 : index
    %c0_53 = arith.constant 0 : index
    %96 = vector.load %arg15[%c0_52, %c0_53] : memref<2x128xf32, #tpu.memory_space<vmem>>, vector<2x128xf32>
    tpu.vector_store %arg15[%c0_52, %c0_53], %92 {strides = array<i32>} : memref<2x128xf32, #tpu.memory_space<vmem>>, vector<2x128xf32>,
    %c2_i32_54 = arith.constant 2 : i32
    %97 = arith.muli %60, %c2_i32_54 : i32
    %98 = arith.index_cast %97 : i32 to index
    %c0_55 = arith.constant 0 : index
    %99 = vector.load %arg13[%98, %c0_55] : memref<16x128xf32, #tpu.memory_space<vmem>>, vector<2x128xf32>
    tpu.vector_store %arg13[%98, %c0_55], %94 {strides = array<i32>} : memref<16x128xf32, #tpu.memory_space<vmem>>, vector<2x128xf32>,
    %c2_i32_56 = arith.constant 2 : i32
    %c1_i32_57 = arith.constant 1 : i32
    %100 = arith.muli %c2_i32_56, %c1_i32_57 : i32
    %c0_i32_58 = arith.constant 0 : i32
    %101 = arith.addi %c0_i32_58, %100 : i32
    %c0_59 = arith.constant 0 : index
    %c0_60 = arith.constant 0 : index
    %102 = vector.load %arg14[%c0_59, %c0_60] : memref<2x128xf32, #tpu.memory_space<vmem>>, vector<2x128xf32>
    %c0_61 = arith.constant 0 : index
    %c0_62 = arith.constant 0 : index
    %103 = vector.load %arg15[%c0_61, %c0_62] : memref<2x128xf32, #tpu.memory_space<vmem>>, vector<2x128xf32>
    %c2_i32_63 = arith.constant 2 : i32
    %104 = arith.muli %101, %c2_i32_63 : i32
    %105 = arith.index_cast %104 : i32 to index
    %c0_64 = arith.constant 0 : index
    %106 = vector.load %arg12[%105, %c0_64] : memref<16x512xf32, #tpu.memory_space<vmem>>, vector<2x512xf32>
    %107 = arith.truncf %102 : vector<2x128xf32> to vector<2x128xbf16>
    %c0_65 = arith.constant 0 : index
    %c0_66 = arith.constant 0 : index
    %108 = vector.load %arg5[%c0_65, %c0_66] : memref<128x512xbf16, #tpu.memory_space<vmem>>, vector<128x512xbf16>
    %cst_67 = arith.constant dense<0.000000e+00> : vector<2x512xf32>
    %109 = tpu.matmul %107, %108, %cst_67 {dimension_numbers = #tpu.dot_dimension_numbers<[1], [0], [0], [1], [0, 0, 1, 1], [], []>} : vector<2x128xbf16>, vector<128x512xbf16>, vector<2x512xf32> -> vector<2x512xf32>
    %110 = arith.addf %106, %109 : vector<2x512xf32>
    %111 = vector.extract_strided_slice %110 {offsets = [0, 0], sizes = [2, 128], strides = [1, 1]} : vector<2x512xf32> to vector<2x128xf32>
    %112 = arith.negf %111 : vector<2x128xf32>
    %113 = math.exp %112 : vector<2x128xf32>
    %cst_68 = arith.constant 1.000000e+00 : f32
    %114 = vector.broadcast %cst_68 : f32 to vector<2x128xf32>
    %115 = arith.addf %114, %113 : vector<2x128xf32>
    %116 = arith.divf %114, %115 : vector<2x128xf32>
    %117 = vector.extract_strided_slice %110 {offsets = [0, 128], sizes = [2, 128], strides = [1, 1]} : vector<2x512xf32> to vector<2x128xf32>
    %118 = arith.negf %117 : vector<2x128xf32>
    %119 = math.exp %118 : vector<2x128xf32>
    %cst_69 = arith.constant 1.000000e+00 : f32
    %120 = vector.broadcast %cst_69 : f32 to vector<2x128xf32>
    %121 = arith.addf %120, %119 : vector<2x128xf32>
    %122 = arith.divf %120, %121 : vector<2x128xf32>
    %123 = vector.extract_strided_slice %110 {offsets = [0, 256], sizes = [2, 128], strides = [1, 1]} : vector<2x512xf32> to vector<2x128xf32>
    %124 = math.tanh %123 : vector<2x128xf32>
    %125 = vector.extract_strided_slice %110 {offsets = [0, 384], sizes = [2, 128], strides = [1, 1]} : vector<2x512xf32> to vector<2x128xf32>
    %126 = arith.negf %125 : vector<2x128xf32>
    %127 = math.exp %126 : vector<2x128xf32>
    %cst_70 = arith.constant 1.000000e+00 : f32
    %128 = vector.broadcast %cst_70 : f32 to vector<2x128xf32>
    %129 = arith.addf %128, %127 : vector<2x128xf32>
    %130 = arith.divf %128, %129 : vector<2x128xf32>
    %131 = arith.mulf %122, %103 : vector<2x128xf32>
    %132 = arith.mulf %116, %124 : vector<2x128xf32>
    %133 = arith.addf %131, %132 : vector<2x128xf32>
    %134 = math.tanh %133 : vector<2x128xf32>
    %135 = arith.mulf %130, %134 : vector<2x128xf32>
    %c0_71 = arith.constant 0 : index
    %c0_72 = arith.constant 0 : index
    %136 = vector.load %arg14[%c0_71, %c0_72] : memref<2x128xf32, #tpu.memory_space<vmem>>, vector<2x128xf32>
    tpu.vector_store %arg14[%c0_71, %c0_72], %135 {strides = array<i32>} : memref<2x128xf32, #tpu.memory_space<vmem>>, vector<2x128xf32>,
    %c0_73 = arith.constant 0 : index
    %c0_74 = arith.constant 0 : index
    %137 = vector.load %arg15[%c0_73, %c0_74] : memref<2x128xf32, #tpu.memory_space<vmem>>, vector<2x128xf32>
    tpu.vector_store %arg15[%c0_73, %c0_74], %133 {strides = array<i32>} : memref<2x128xf32, #tpu.memory_space<vmem>>, vector<2x128xf32>,
    %c2_i32_75 = arith.constant 2 : i32
    %138 = arith.muli %101, %c2_i32_75 : i32
    %139 = arith.index_cast %138 : i32 to index
    %c0_76 = arith.constant 0 : index
    %140 = vector.load %arg13[%139, %c0_76] : memref<16x128xf32, #tpu.memory_space<vmem>>, vector<2x128xf32>
    tpu.vector_store %arg13[%139, %c0_76], %135 {strides = array<i32>} : memref<16x128xf32, #tpu.memory_space<vmem>>, vector<2x128xf32>,
    %c3_i32 = arith.constant 3 : i32
    %c1_i32_77 = arith.constant 1 : i32
    %141 = arith.muli %c3_i32, %c1_i32_77 : i32
    %c0_i32_78 = arith.constant 0 : i32
    %142 = arith.addi %c0_i32_78, %141 : i32
    %c0_79 = arith.constant 0 : index
    %c0_80 = arith.constant 0 : index
    %143 = vector.load %arg14[%c0_79, %c0_80] : memref<2x128xf32, #tpu.memory_space<vmem>>, vector<2x128xf32>
    %c0_81 = arith.constant 0 : index
    %c0_82 = arith.constant 0 : index
    %144 = vector.load %arg15[%c0_81, %c0_82] : memref<2x128xf32, #tpu.memory_space<vmem>>, vector<2x128xf32>
    %c2_i32_83 = arith.constant 2 : i32
    %145 = arith.muli %142, %c2_i32_83 : i32
    %146 = arith.index_cast %145 : i32 to index
    %c0_84 = arith.constant 0 : index
    %147 = vector.load %arg12[%146, %c0_84] : memref<16x512xf32, #tpu.memory_space<vmem>>, vector<2x512xf32>
    %148 = arith.truncf %143 : vector<2x128xf32> to vector<2x128xbf16>
    %c0_85 = arith.constant 0 : index
    %c0_86 = arith.constant 0 : index
    %149 = vector.load %arg5[%c0_85, %c0_86] : memref<128x512xbf16, #tpu.memory_space<vmem>>, vector<128x512xbf16>
    %cst_87 = arith.constant dense<0.000000e+00> : vector<2x512xf32>
    %150 = tpu.matmul %148, %149, %cst_87 {dimension_numbers = #tpu.dot_dimension_numbers<[1], [0], [0], [1], [0, 0, 1, 1], [], []>} : vector<2x128xbf16>, vector<128x512xbf16>, vector<2x512xf32> -> vector<2x512xf32>
    %151 = arith.addf %147, %150 : vector<2x512xf32>
    %152 = vector.extract_strided_slice %151 {offsets = [0, 0], sizes = [2, 128], strides = [1, 1]} : vector<2x512xf32> to vector<2x128xf32>
    %153 = arith.negf %152 : vector<2x128xf32>
    %154 = math.exp %153 : vector<2x128xf32>
    %cst_88 = arith.constant 1.000000e+00 : f32
    %155 = vector.broadcast %cst_88 : f32 to vector<2x128xf32>
    %156 = arith.addf %155, %154 : vector<2x128xf32>
    %157 = arith.divf %155, %156 : vector<2x128xf32>
    %158 = vector.extract_strided_slice %151 {offsets = [0, 128], sizes = [2, 128], strides = [1, 1]} : vector<2x512xf32> to vector<2x128xf32>
    %159 = arith.negf %158 : vector<2x128xf32>
    %160 = math.exp %159 : vector<2x128xf32>
    %cst_89 = arith.constant 1.000000e+00 : f32
    %161 = vector.broadcast %cst_89 : f32 to vector<2x128xf32>
    %162 = arith.addf %161, %160 : vector<2x128xf32>
    %163 = arith.divf %161, %162 : vector<2x128xf32>
    %164 = vector.extract_strided_slice %151 {offsets = [0, 256], sizes = [2, 128], strides = [1, 1]} : vector<2x512xf32> to vector<2x128xf32>
    %165 = math.tanh %164 : vector<2x128xf32>
    %166 = vector.extract_strided_slice %151 {offsets = [0, 384], sizes = [2, 128], strides = [1, 1]} : vector<2x512xf32> to vector<2x128xf32>
    %167 = arith.negf %166 : vector<2x128xf32>
    %168 = math.exp %167 : vector<2x128xf32>
    %cst_90 = arith.constant 1.000000e+00 : f32
    %169 = vector.broadcast %cst_90 : f32 to vector<2x128xf32>
    %170 = arith.addf %169, %168 : vector<2x128xf32>
    %171 = arith.divf %169, %170 : vector<2x128xf32>
    %172 = arith.mulf %163, %144 : vector<2x128xf32>
    %173 = arith.mulf %157, %165 : vector<2x128xf32>
    %174 = arith.addf %172, %173 : vector<2x128xf32>
    %175 = math.tanh %174 : vector<2x128xf32>
    %176 = arith.mulf %171, %175 : vector<2x128xf32>
    %c0_91 = arith.constant 0 : index
    %c0_92 = arith.constant 0 : index
    %177 = vector.load %arg14[%c0_91, %c0_92] : memref<2x128xf32, #tpu.memory_space<vmem>>, vector<2x128xf32>
    tpu.vector_store %arg14[%c0_91, %c0_92], %176 {strides = array<i32>} : memref<2x128xf32, #tpu.memory_space<vmem>>, vector<2x128xf32>,
    %c0_93 = arith.constant 0 : index
    %c0_94 = arith.constant 0 : index
    %178 = vector.load %arg15[%c0_93, %c0_94] : memref<2x128xf32, #tpu.memory_space<vmem>>, vector<2x128xf32>
    tpu.vector_store %arg15[%c0_93, %c0_94], %174 {strides = array<i32>} : memref<2x128xf32, #tpu.memory_space<vmem>>, vector<2x128xf32>,
    %c2_i32_95 = arith.constant 2 : i32
    %179 = arith.muli %142, %c2_i32_95 : i32
    %180 = arith.index_cast %179 : i32 to index
    %c0_96 = arith.constant 0 : index
    %181 = vector.load %arg13[%180, %c0_96] : memref<16x128xf32, #tpu.memory_space<vmem>>, vector<2x128xf32>
    tpu.vector_store %arg13[%180, %c0_96], %176 {strides = array<i32>} : memref<16x128xf32, #tpu.memory_space<vmem>>, vector<2x128xf32>,
    %c4_i32 = arith.constant 4 : i32
    %c1_i32_97 = arith.constant 1 : i32
    %182 = arith.muli %c4_i32, %c1_i32_97 : i32
    %c0_i32_98 = arith.constant 0 : i32
    %183 = arith.addi %c0_i32_98, %182 : i32
    %c0_99 = arith.constant 0 : index
    %c0_100 = arith.constant 0 : index
    %184 = vector.load %arg14[%c0_99, %c0_100] : memref<2x128xf32, #tpu.memory_space<vmem>>, vector<2x128xf32>
    %c0_101 = arith.constant 0 : index
    %c0_102 = arith.constant 0 : index
    %185 = vector.load %arg15[%c0_101, %c0_102] : memref<2x128xf32, #tpu.memory_space<vmem>>, vector<2x128xf32>
    %c2_i32_103 = arith.constant 2 : i32
    %186 = arith.muli %183, %c2_i32_103 : i32
    %187 = arith.index_cast %186 : i32 to index
    %c0_104 = arith.constant 0 : index
    %188 = vector.load %arg12[%187, %c0_104] : memref<16x512xf32, #tpu.memory_space<vmem>>, vector<2x512xf32>
    %189 = arith.truncf %184 : vector<2x128xf32> to vector<2x128xbf16>
    %c0_105 = arith.constant 0 : index
    %c0_106 = arith.constant 0 : index
    %190 = vector.load %arg5[%c0_105, %c0_106] : memref<128x512xbf16, #tpu.memory_space<vmem>>, vector<128x512xbf16>
    %cst_107 = arith.constant dense<0.000000e+00> : vector<2x512xf32>
    %191 = tpu.matmul %189, %190, %cst_107 {dimension_numbers = #tpu.dot_dimension_numbers<[1], [0], [0], [1], [0, 0, 1, 1], [], []>} : vector<2x128xbf16>, vector<128x512xbf16>, vector<2x512xf32> -> vector<2x512xf32>
    %192 = arith.addf %188, %191 : vector<2x512xf32>
    %193 = vector.extract_strided_slice %192 {offsets = [0, 0], sizes = [2, 128], strides = [1, 1]} : vector<2x512xf32> to vector<2x128xf32>
    %194 = arith.negf %193 : vector<2x128xf32>
    %195 = math.exp %194 : vector<2x128xf32>
    %cst_108 = arith.constant 1.000000e+00 : f32
    %196 = vector.broadcast %cst_108 : f32 to vector<2x128xf32>
    %197 = arith.addf %196, %195 : vector<2x128xf32>
    %198 = arith.divf %196, %197 : vector<2x128xf32>
    %199 = vector.extract_strided_slice %192 {offsets = [0, 128], sizes = [2, 128], strides = [1, 1]} : vector<2x512xf32> to vector<2x128xf32>
    %200 = arith.negf %199 : vector<2x128xf32>
    %201 = math.exp %200 : vector<2x128xf32>
    %cst_109 = arith.constant 1.000000e+00 : f32
    %202 = vector.broadcast %cst_109 : f32 to vector<2x128xf32>
    %203 = arith.addf %202, %201 : vector<2x128xf32>
    %204 = arith.divf %202, %203 : vector<2x128xf32>
    %205 = vector.extract_strided_slice %192 {offsets = [0, 256], sizes = [2, 128], strides = [1, 1]} : vector<2x512xf32> to vector<2x128xf32>
    %206 = math.tanh %205 : vector<2x128xf32>
    %207 = vector.extract_strided_slice %192 {offsets = [0, 384], sizes = [2, 128], strides = [1, 1]} : vector<2x512xf32> to vector<2x128xf32>
    %208 = arith.negf %207 : vector<2x128xf32>
    %209 = math.exp %208 : vector<2x128xf32>
    %cst_110 = arith.constant 1.000000e+00 : f32
    %210 = vector.broadcast %cst_110 : f32 to vector<2x128xf32>
    %211 = arith.addf %210, %209 : vector<2x128xf32>
    %212 = arith.divf %210, %211 : vector<2x128xf32>
    %213 = arith.mulf %204, %185 : vector<2x128xf32>
    %214 = arith.mulf %198, %206 : vector<2x128xf32>
    %215 = arith.addf %213, %214 : vector<2x128xf32>
    %216 = math.tanh %215 : vector<2x128xf32>
    %217 = arith.mulf %212, %216 : vector<2x128xf32>
    %c0_111 = arith.constant 0 : index
    %c0_112 = arith.constant 0 : index
    %218 = vector.load %arg14[%c0_111, %c0_112] : memref<2x128xf32, #tpu.memory_space<vmem>>, vector<2x128xf32>
    tpu.vector_store %arg14[%c0_111, %c0_112], %217 {strides = array<i32>} : memref<2x128xf32, #tpu.memory_space<vmem>>, vector<2x128xf32>,
    %c0_113 = arith.constant 0 : index
    %c0_114 = arith.constant 0 : index
    %219 = vector.load %arg15[%c0_113, %c0_114] : memref<2x128xf32, #tpu.memory_space<vmem>>, vector<2x128xf32>
    tpu.vector_store %arg15[%c0_113, %c0_114], %215 {strides = array<i32>} : memref<2x128xf32, #tpu.memory_space<vmem>>, vector<2x128xf32>,
    %c2_i32_115 = arith.constant 2 : i32
    %220 = arith.muli %183, %c2_i32_115 : i32
    %221 = arith.index_cast %220 : i32 to index
    %c0_116 = arith.constant 0 : index
    %222 = vector.load %arg13[%221, %c0_116] : memref<16x128xf32, #tpu.memory_space<vmem>>, vector<2x128xf32>
    tpu.vector_store %arg13[%221, %c0_116], %217 {strides = array<i32>} : memref<16x128xf32, #tpu.memory_space<vmem>>, vector<2x128xf32>,
    %c5_i32 = arith.constant 5 : i32
    %c1_i32_117 = arith.constant 1 : i32
    %223 = arith.muli %c5_i32, %c1_i32_117 : i32
    %c0_i32_118 = arith.constant 0 : i32
    %224 = arith.addi %c0_i32_118, %223 : i32
    %c0_119 = arith.constant 0 : index
    %c0_120 = arith.constant 0 : index
    %225 = vector.load %arg14[%c0_119, %c0_120] : memref<2x128xf32, #tpu.memory_space<vmem>>, vector<2x128xf32>
    %c0_121 = arith.constant 0 : index
    %c0_122 = arith.constant 0 : index
    %226 = vector.load %arg15[%c0_121, %c0_122] : memref<2x128xf32, #tpu.memory_space<vmem>>, vector<2x128xf32>
    %c2_i32_123 = arith.constant 2 : i32
    %227 = arith.muli %224, %c2_i32_123 : i32
    %228 = arith.index_cast %227 : i32 to index
    %c0_124 = arith.constant 0 : index
    %229 = vector.load %arg12[%228, %c0_124] : memref<16x512xf32, #tpu.memory_space<vmem>>, vector<2x512xf32>
    %230 = arith.truncf %225 : vector<2x128xf32> to vector<2x128xbf16>
    %c0_125 = arith.constant 0 : index
    %c0_126 = arith.constant 0 : index
    %231 = vector.load %arg5[%c0_125, %c0_126] : memref<128x512xbf16, #tpu.memory_space<vmem>>, vector<128x512xbf16>
    %cst_127 = arith.constant dense<0.000000e+00> : vector<2x512xf32>
    %232 = tpu.matmul %230, %231, %cst_127 {dimension_numbers = #tpu.dot_dimension_numbers<[1], [0], [0], [1], [0, 0, 1, 1], [], []>} : vector<2x128xbf16>, vector<128x512xbf16>, vector<2x512xf32> -> vector<2x512xf32>
    %233 = arith.addf %229, %232 : vector<2x512xf32>
    %234 = vector.extract_strided_slice %233 {offsets = [0, 0], sizes = [2, 128], strides = [1, 1]} : vector<2x512xf32> to vector<2x128xf32>
    %235 = arith.negf %234 : vector<2x128xf32>
    %236 = math.exp %235 : vector<2x128xf32>
    %cst_128 = arith.constant 1.000000e+00 : f32
    %237 = vector.broadcast %cst_128 : f32 to vector<2x128xf32>
    %238 = arith.addf %237, %236 : vector<2x128xf32>
    %239 = arith.divf %237, %238 : vector<2x128xf32>
    %240 = vector.extract_strided_slice %233 {offsets = [0, 128], sizes = [2, 128], strides = [1, 1]} : vector<2x512xf32> to vector<2x128xf32>
    %241 = arith.negf %240 : vector<2x128xf32>
    %242 = math.exp %241 : vector<2x128xf32>
    %cst_129 = arith.constant 1.000000e+00 : f32
    %243 = vector.broadcast %cst_129 : f32 to vector<2x128xf32>
    %244 = arith.addf %243, %242 : vector<2x128xf32>
    %245 = arith.divf %243, %244 : vector<2x128xf32>
    %246 = vector.extract_strided_slice %233 {offsets = [0, 256], sizes = [2, 128], strides = [1, 1]} : vector<2x512xf32> to vector<2x128xf32>
    %247 = math.tanh %246 : vector<2x128xf32>
    %248 = vector.extract_strided_slice %233 {offsets = [0, 384], sizes = [2, 128], strides = [1, 1]} : vector<2x512xf32> to vector<2x128xf32>
    %249 = arith.negf %248 : vector<2x128xf32>
    %250 = math.exp %249 : vector<2x128xf32>
    %cst_130 = arith.constant 1.000000e+00 : f32
    %251 = vector.broadcast %cst_130 : f32 to vector<2x128xf32>
    %252 = arith.addf %251, %250 : vector<2x128xf32>
    %253 = arith.divf %251, %252 : vector<2x128xf32>
    %254 = arith.mulf %245, %226 : vector<2x128xf32>
    %255 = arith.mulf %239, %247 : vector<2x128xf32>
    %256 = arith.addf %254, %255 : vector<2x128xf32>
    %257 = math.tanh %256 : vector<2x128xf32>
    %258 = arith.mulf %253, %257 : vector<2x128xf32>
    %c0_131 = arith.constant 0 : index
    %c0_132 = arith.constant 0 : index
    %259 = vector.load %arg14[%c0_131, %c0_132] : memref<2x128xf32, #tpu.memory_space<vmem>>, vector<2x128xf32>
    tpu.vector_store %arg14[%c0_131, %c0_132], %258 {strides = array<i32>} : memref<2x128xf32, #tpu.memory_space<vmem>>, vector<2x128xf32>,
    %c0_133 = arith.constant 0 : index
    %c0_134 = arith.constant 0 : index
    %260 = vector.load %arg15[%c0_133, %c0_134] : memref<2x128xf32, #tpu.memory_space<vmem>>, vector<2x128xf32>
    tpu.vector_store %arg15[%c0_133, %c0_134], %256 {strides = array<i32>} : memref<2x128xf32, #tpu.memory_space<vmem>>, vector<2x128xf32>,
    %c2_i32_135 = arith.constant 2 : i32
    %261 = arith.muli %224, %c2_i32_135 : i32
    %262 = arith.index_cast %261 : i32 to index
    %c0_136 = arith.constant 0 : index
    %263 = vector.load %arg13[%262, %c0_136] : memref<16x128xf32, #tpu.memory_space<vmem>>, vector<2x128xf32>
    tpu.vector_store %arg13[%262, %c0_136], %258 {strides = array<i32>} : memref<16x128xf32, #tpu.memory_space<vmem>>, vector<2x128xf32>,
    %c6_i32 = arith.constant 6 : i32
    %c1_i32_137 = arith.constant 1 : i32
    %264 = arith.muli %c6_i32, %c1_i32_137 : i32
    %c0_i32_138 = arith.constant 0 : i32
    %265 = arith.addi %c0_i32_138, %264 : i32
    %c0_139 = arith.constant 0 : index
    %c0_140 = arith.constant 0 : index
    %266 = vector.load %arg14[%c0_139, %c0_140] : memref<2x128xf32, #tpu.memory_space<vmem>>, vector<2x128xf32>
    %c0_141 = arith.constant 0 : index
    %c0_142 = arith.constant 0 : index
    %267 = vector.load %arg15[%c0_141, %c0_142] : memref<2x128xf32, #tpu.memory_space<vmem>>, vector<2x128xf32>
    %c2_i32_143 = arith.constant 2 : i32
    %268 = arith.muli %265, %c2_i32_143 : i32
    %269 = arith.index_cast %268 : i32 to index
    %c0_144 = arith.constant 0 : index
    %270 = vector.load %arg12[%269, %c0_144] : memref<16x512xf32, #tpu.memory_space<vmem>>, vector<2x512xf32>
    %271 = arith.truncf %266 : vector<2x128xf32> to vector<2x128xbf16>
    %c0_145 = arith.constant 0 : index
    %c0_146 = arith.constant 0 : index
    %272 = vector.load %arg5[%c0_145, %c0_146] : memref<128x512xbf16, #tpu.memory_space<vmem>>, vector<128x512xbf16>
    %cst_147 = arith.constant dense<0.000000e+00> : vector<2x512xf32>
    %273 = tpu.matmul %271, %272, %cst_147 {dimension_numbers = #tpu.dot_dimension_numbers<[1], [0], [0], [1], [0, 0, 1, 1], [], []>} : vector<2x128xbf16>, vector<128x512xbf16>, vector<2x512xf32> -> vector<2x512xf32>
    %274 = arith.addf %270, %273 : vector<2x512xf32>
    %275 = vector.extract_strided_slice %274 {offsets = [0, 0], sizes = [2, 128], strides = [1, 1]} : vector<2x512xf32> to vector<2x128xf32>
    %276 = arith.negf %275 : vector<2x128xf32>
    %277 = math.exp %276 : vector<2x128xf32>
    %cst_148 = arith.constant 1.000000e+00 : f32
    %278 = vector.broadcast %cst_148 : f32 to vector<2x128xf32>
    %279 = arith.addf %278, %277 : vector<2x128xf32>
    %280 = arith.divf %278, %279 : vector<2x128xf32>
    %281 = vector.extract_strided_slice %274 {offsets = [0, 128], sizes = [2, 128], strides = [1, 1]} : vector<2x512xf32> to vector<2x128xf32>
    %282 = arith.negf %281 : vector<2x128xf32>
    %283 = math.exp %282 : vector<2x128xf32>
    %cst_149 = arith.constant 1.000000e+00 : f32
    %284 = vector.broadcast %cst_149 : f32 to vector<2x128xf32>
    %285 = arith.addf %284, %283 : vector<2x128xf32>
    %286 = arith.divf %284, %285 : vector<2x128xf32>
    %287 = vector.extract_strided_slice %274 {offsets = [0, 256], sizes = [2, 128], strides = [1, 1]} : vector<2x512xf32> to vector<2x128xf32>
    %288 = math.tanh %287 : vector<2x128xf32>
    %289 = vector.extract_strided_slice %274 {offsets = [0, 384], sizes = [2, 128], strides = [1, 1]} : vector<2x512xf32> to vector<2x128xf32>
    %290 = arith.negf %289 : vector<2x128xf32>
    %291 = math.exp %290 : vector<2x128xf32>
    %cst_150 = arith.constant 1.000000e+00 : f32
    %292 = vector.broadcast %cst_150 : f32 to vector<2x128xf32>
    %293 = arith.addf %292, %291 : vector<2x128xf32>
    %294 = arith.divf %292, %293 : vector<2x128xf32>
    %295 = arith.mulf %286, %267 : vector<2x128xf32>
    %296 = arith.mulf %280, %288 : vector<2x128xf32>
    %297 = arith.addf %295, %296 : vector<2x128xf32>
    %298 = math.tanh %297 : vector<2x128xf32>
    %299 = arith.mulf %294, %298 : vector<2x128xf32>
    %c0_151 = arith.constant 0 : index
    %c0_152 = arith.constant 0 : index
    %300 = vector.load %arg14[%c0_151, %c0_152] : memref<2x128xf32, #tpu.memory_space<vmem>>, vector<2x128xf32>
    tpu.vector_store %arg14[%c0_151, %c0_152], %299 {strides = array<i32>} : memref<2x128xf32, #tpu.memory_space<vmem>>, vector<2x128xf32>,
    %c0_153 = arith.constant 0 : index
    %c0_154 = arith.constant 0 : index
    %301 = vector.load %arg15[%c0_153, %c0_154] : memref<2x128xf32, #tpu.memory_space<vmem>>, vector<2x128xf32>
    tpu.vector_store %arg15[%c0_153, %c0_154], %297 {strides = array<i32>} : memref<2x128xf32, #tpu.memory_space<vmem>>, vector<2x128xf32>,
    %c2_i32_155 = arith.constant 2 : i32
    %302 = arith.muli %265, %c2_i32_155 : i32
    %303 = arith.index_cast %302 : i32 to index
    %c0_156 = arith.constant 0 : index
    %304 = vector.load %arg13[%303, %c0_156] : memref<16x128xf32, #tpu.memory_space<vmem>>, vector<2x128xf32>
    tpu.vector_store %arg13[%303, %c0_156], %299 {strides = array<i32>} : memref<16x128xf32, #tpu.memory_space<vmem>>, vector<2x128xf32>,
    %c7_i32 = arith.constant 7 : i32
    %c1_i32_157 = arith.constant 1 : i32
    %305 = arith.muli %c7_i32, %c1_i32_157 : i32
    %c0_i32_158 = arith.constant 0 : i32
    %306 = arith.addi %c0_i32_158, %305 : i32
    %c0_159 = arith.constant 0 : index
    %c0_160 = arith.constant 0 : index
    %307 = vector.load %arg14[%c0_159, %c0_160] : memref<2x128xf32, #tpu.memory_space<vmem>>, vector<2x128xf32>
    %c0_161 = arith.constant 0 : index
    %c0_162 = arith.constant 0 : index
    %308 = vector.load %arg15[%c0_161, %c0_162] : memref<2x128xf32, #tpu.memory_space<vmem>>, vector<2x128xf32>
    %c2_i32_163 = arith.constant 2 : i32
    %309 = arith.muli %306, %c2_i32_163 : i32
    %310 = arith.index_cast %309 : i32 to index
    %c0_164 = arith.constant 0 : index
    %311 = vector.load %arg12[%310, %c0_164] : memref<16x512xf32, #tpu.memory_space<vmem>>, vector<2x512xf32>
    %312 = arith.truncf %307 : vector<2x128xf32> to vector<2x128xbf16>
    %c0_165 = arith.constant 0 : index
    %c0_166 = arith.constant 0 : index
    %313 = vector.load %arg5[%c0_165, %c0_166] : memref<128x512xbf16, #tpu.memory_space<vmem>>, vector<128x512xbf16>
    %cst_167 = arith.constant dense<0.000000e+00> : vector<2x512xf32>
    %314 = tpu.matmul %312, %313, %cst_167 {dimension_numbers = #tpu.dot_dimension_numbers<[1], [0], [0], [1], [0, 0, 1, 1], [], []>} : vector<2x128xbf16>, vector<128x512xbf16>, vector<2x512xf32> -> vector<2x512xf32>
    %315 = arith.addf %311, %314 : vector<2x512xf32>
    %316 = vector.extract_strided_slice %315 {offsets = [0, 0], sizes = [2, 128], strides = [1, 1]} : vector<2x512xf32> to vector<2x128xf32>
    %317 = arith.negf %316 : vector<2x128xf32>
    %318 = math.exp %317 : vector<2x128xf32>
    %cst_168 = arith.constant 1.000000e+00 : f32
    %319 = vector.broadcast %cst_168 : f32 to vector<2x128xf32>
    %320 = arith.addf %319, %318 : vector<2x128xf32>
    %321 = arith.divf %319, %320 : vector<2x128xf32>
    %322 = vector.extract_strided_slice %315 {offsets = [0, 128], sizes = [2, 128], strides = [1, 1]} : vector<2x512xf32> to vector<2x128xf32>
    %323 = arith.negf %322 : vector<2x128xf32>
    %324 = math.exp %323 : vector<2x128xf32>
    %cst_169 = arith.constant 1.000000e+00 : f32
    %325 = vector.broadcast %cst_169 : f32 to vector<2x128xf32>
    %326 = arith.addf %325, %324 : vector<2x128xf32>
    %327 = arith.divf %325, %326 : vector<2x128xf32>
    %328 = vector.extract_strided_slice %315 {offsets = [0, 256], sizes = [2, 128], strides = [1, 1]} : vector<2x512xf32> to vector<2x128xf32>
    %329 = math.tanh %328 : vector<2x128xf32>
    %330 = vector.extract_strided_slice %315 {offsets = [0, 384], sizes = [2, 128], strides = [1, 1]} : vector<2x512xf32> to vector<2x128xf32>
    %331 = arith.negf %330 : vector<2x128xf32>
    %332 = math.exp %331 : vector<2x128xf32>
    %cst_170 = arith.constant 1.000000e+00 : f32
    %333 = vector.broadcast %cst_170 : f32 to vector<2x128xf32>
    %334 = arith.addf %333, %332 : vector<2x128xf32>
    %335 = arith.divf %333, %334 : vector<2x128xf32>
    %336 = arith.mulf %327, %308 : vector<2x128xf32>
    %337 = arith.mulf %321, %329 : vector<2x128xf32>
    %338 = arith.addf %336, %337 : vector<2x128xf32>
    %339 = math.tanh %338 : vector<2x128xf32>
    %340 = arith.mulf %335, %339 : vector<2x128xf32>
    %c0_171 = arith.constant 0 : index
    %c0_172 = arith.constant 0 : index
    %341 = vector.load %arg14[%c0_171, %c0_172] : memref<2x128xf32, #tpu.memory_space<vmem>>, vector<2x128xf32>
    tpu.vector_store %arg14[%c0_171, %c0_172], %340 {strides = array<i32>} : memref<2x128xf32, #tpu.memory_space<vmem>>, vector<2x128xf32>,
    %c0_173 = arith.constant 0 : index
    %c0_174 = arith.constant 0 : index
    %342 = vector.load %arg15[%c0_173, %c0_174] : memref<2x128xf32, #tpu.memory_space<vmem>>, vector<2x128xf32>
    tpu.vector_store %arg15[%c0_173, %c0_174], %338 {strides = array<i32>} : memref<2x128xf32, #tpu.memory_space<vmem>>, vector<2x128xf32>,
    %c2_i32_175 = arith.constant 2 : i32
    %343 = arith.muli %306, %c2_i32_175 : i32
    %344 = arith.index_cast %343 : i32 to index
    %c0_176 = arith.constant 0 : index
    %345 = vector.load %arg13[%344, %c0_176] : memref<16x128xf32, #tpu.memory_space<vmem>>, vector<2x128xf32>
    tpu.vector_store %arg13[%344, %c0_176], %340 {strides = array<i32>} : memref<16x128xf32, #tpu.memory_space<vmem>>, vector<2x128xf32>,
    %c8_i32 = arith.constant 8 : i32
    %c0_177 = arith.constant 0 : index
    %c0_178 = arith.constant 0 : index
    %346 = vector.load %arg14[%c0_177, %c0_178] : memref<2x128xf32, #tpu.memory_space<vmem>>, vector<2x128xf32>
    %c0_179 = arith.constant 0 : index
    %c0_180 = arith.constant 0 : index
    %347 = vector.load %arg10[%c0_179, %c0_180] : memref<2x128xf32, #tpu.memory_space<vmem>>, vector<2x128xf32>
    tpu.vector_store %arg10[%c0_179, %c0_180], %346 {strides = array<i32>} : memref<2x128xf32, #tpu.memory_space<vmem>>, vector<2x128xf32>,
    %c0_181 = arith.constant 0 : index
    %c0_182 = arith.constant 0 : index
    %348 = vector.load %arg15[%c0_181, %c0_182] : memref<2x128xf32, #tpu.memory_space<vmem>>, vector<2x128xf32>
    %c0_183 = arith.constant 0 : index
    %c0_184 = arith.constant 0 : index
    %349 = vector.load %arg11[%c0_183, %c0_184] : memref<2x128xf32, #tpu.memory_space<vmem>>, vector<2x128xf32>
    tpu.vector_store %arg11[%c0_183, %c0_184], %348 {strides = array<i32>} : memref<2x128xf32, #tpu.memory_space<vmem>>, vector<2x128xf32>,
    %c0_185 = arith.constant 0 : index
    %c0_186 = arith.constant 0 : index
    %350 = vector.load %arg13[%c0_185, %c0_186] : memref<16x128xf32, #tpu.memory_space<vmem>>, vector<16x128xf32>
    %351 = arith.truncf %350 : vector<16x128xf32> to vector<16x128xbf16>
    %c0_187 = arith.constant 0 : index
    %c0_188 = arith.constant 0 : index
    %352 = vector.load %arg7[%c0_187, %c0_188] : memref<128x128xbf16, #tpu.memory_space<vmem>>, vector<128x128xbf16>
    %cst_189 = arith.constant dense<0.000000e+00> : vector<16x128xf32>
    %353 = tpu.matmul %351, %352, %cst_189 {dimension_numbers = #tpu.dot_dimension_numbers<[1], [0], [0], [1], [0, 0, 1, 1], [], []>} : vector<16x128xbf16>, vector<128x128xbf16>, vector<16x128xf32> -> vector<16x128xf32>
    %c0_190 = arith.constant 0 : index
    %c0_191 = arith.constant 0 : index
    %354 = vector.load %arg8[%c0_190, %c0_191] : memref<1x128xf32, #tpu.memory_space<vmem>>, vector<1x128xf32>
    %355 = vector.broadcast %354 : vector<1x128xf32> to vector<16x128xf32>
    %356 = arith.addf %353, %355 : vector<16x128xf32>
    %c0_192 = arith.constant 0 : index
    %c0_193 = arith.constant 0 : index
    %357 = vector.load %arg9[%c0_192, %c0_193] : memref<16x128xf32, #tpu.memory_space<vmem>>, vector<16x128xf32>
    tpu.vector_store %arg9[%c0_192, %c0_193], %356 {strides = array<i32>} : memref<16x128xf32, #tpu.memory_space<vmem>>, vector<16x128xf32>,
    return
  }
  func.func @transform_0(%arg0: i32) -> (i32, i32) {
    %c0_i32 = arith.constant 0 : i32
    %c0_i32_0 = arith.constant 0 : i32
    %c0_i32_1 = arith.constant 0 : i32
    return %c0_i32, %c0_i32_0 : i32, i32
  }
  func.func @transform_1(%arg0: i32) -> (i32, i32) {
    %c0_i32 = arith.constant 0 : i32
    %c0_i32_0 = arith.constant 0 : i32
    %c0_i32_1 = arith.constant 0 : i32
    return %c0_i32, %c0_i32_0 : i32, i32
  }
  func.func @transform_2(%arg0: i32) -> (i32, i32) {
    %c0_i32 = arith.constant 0 : i32
    %c0_i32_0 = arith.constant 0 : i32
    %c0_i32_1 = arith.constant 0 : i32
    return %c0_i32, %c0_i32_0 : i32, i32
  }
  func.func @transform_3(%arg0: i32) -> (i32, i32) {
    %c0_i32 = arith.constant 0 : i32
    %c0_i32_0 = arith.constant 0 : i32
    %c0_i32_1 = arith.constant 0 : i32
    return %c0_i32, %c0_i32_0 : i32, i32
  }
  func.func @transform_4(%arg0: i32) -> (i32, i32) {
    %c0_i32 = arith.constant 0 : i32
    %c0_i32_0 = arith.constant 0 : i32
    %c0_i32_1 = arith.constant 0 : i32
    return %c0_i32, %c0_i32_0 : i32, i32
  }
  func.func @transform_5(%arg0: i32) -> (i32, i32) {
    %c0_i32 = arith.constant 0 : i32
    %c0_i32_0 = arith.constant 0 : i32
    %c0_i32_1 = arith.constant 0 : i32
    return %c0_i32, %c0_i32_0 : i32, i32
  }
  func.func @transform_6(%arg0: i32) -> (i32, i32) {
    %c0_i32 = arith.constant 0 : i32
    %c0_i32_0 = arith.constant 0 : i32
    %c0_i32_1 = arith.constant 0 : i32
    return %c0_i32, %c0_i32_0 : i32, i32
  }
  func.func @transform_7(%arg0: i32) -> (i32, i32) {
    %c0_i32 = arith.constant 0 : i32
    %c0_i32_0 = arith.constant 0 : i32
    %c0_i32_1 = arith.constant 0 : i32
    return %c0_i32, %c0_i32_0 : i32, i32
  }
  func.func @transform_8(%arg0: i32) -> (i32, i32) {
    %c0_i32 = arith.constant 0 : i32
    %c0_i32_0 = arith.constant 0 : i32
    %c0_i32_1 = arith.constant 0 : i32
    return %c0_i32, %c0_i32_0 : i32, i32
  }
  func.func @transform_9(%arg0: i32) -> (i32, i32) {
    %c0_i32 = arith.constant 0 : i32
    %c0_i32_0 = arith.constant 0 : i32
    %c0_i32_1 = arith.constant 0 : i32
    return %c0_i32, %c0_i32_0 : i32, i32
  }
  func.func @transform_10(%arg0: i32) -> (i32, i32) {
    %c0_i32 = arith.constant 0 : i32
    %c0_i32_0 = arith.constant 0 : i32
    %c0_i32_1 = arith.constant 0 : i32
    return %c0_i32, %c0_i32_0 : i32, i32
  }
}

</mosaic_0001>

<llo_original>
// kernel: tpu_custom_call.1
$region0: #{tpu_custom_call.1}
  #allocation0 [shape = 'u32[]', space=smem, size = 0x4, offset = 0x4, fixed_abs, tag = 'smem constant byte address 0x4 - core index']
  #allocation1 [shape = 'u32[144,128]{1,0:T(1,128)}', space=vmem, size = 0x12000, scoped, tag = 'internal scratch']
  #allocation2 [shape = 'f32[16,512]{1,0:T(8,128)}', space=vmem, size = 0x8000, scoped, tag = 'scratch operand']
  #allocation3 [shape = 'f32[16,128]{1,0:T(8,128)}', space=vmem, size = 0x2000, scoped, tag = 'scratch operand']
  #allocation4 [shape = 'f32[2,128]{1,0:T(2,128)}', space=vmem, size = 0x400, scoped, tag = 'scratch operand']
  #allocation5 [shape = 'f32[2,128]{1,0:T(2,128)}', space=vmem, size = 0x400, scoped, tag = 'scratch operand']
  %s0 = inlined_call_operand.vmem [shape: s32[16,1], index: 0, kind: input, shape index: {}]
  %s1 = inlined_call_operand.vmem [shape: f32[2,128], index: 1, kind: input, shape index: {}]
  %s2 = inlined_call_operand.vmem [shape: f32[2,128], index: 2, kind: input, shape index: {}]
  %s3 = inlined_call_operand.hbm [shape: bf16[128,512], index: 3, kind: input, shape index: {}]
  %s4 = inlined_call_operand.hbm [shape: bf16[128,512], index: 4, kind: input, shape index: {}]
  %s5 = inlined_call_operand.vmem [shape: f32[1,512], index: 5, kind: input, shape index: {}]
  %s6 = inlined_call_operand.hbm [shape: bf16[128,128], index: 6, kind: input, shape index: {}]
  %s7 = inlined_call_operand.vmem [shape: f32[1,128], index: 7, kind: input, shape index: {}]
  %s8 = inlined_call_operand.hbm [shape: f32[16,128], index: 8, kind: output, shape index: {0}]
  %s9 = inlined_call_operand.hbm [shape: f32[2,128], index: 9, kind: output, shape index: {1}]
  %s10 = inlined_call_operand.hbm [shape: f32[2,128], index: 10, kind: output, shape index: {2}]
  %11 = xla_tuple %s8, %s9, %s10
  %s12 = sld [smem:[#allocation0]]
  $region70: #{tpu_custom_call.1} parent=0
    _
  %s14 = ssub.s32 1, %s12
  %s15 = scalar_select 0, %s14, %s12
  $region1: #{tpu_custom_call.1} parent=0
    #allocation6 [shape = 'u8[131072]{0}', space=vmem, size = 0x20000, scoped, tag = 'input window, operand 3, single buffered']
    #allocation7 [shape = 's32[1]{0}', space=sflag, size = 0x4, scoped, tag = 'scoped memory for tpu_custom_call.1']
    #allocation8 [shape = 's32[1]{0}', space=sflag, size = 0x4, scoped, tag = 'scoped memory for tpu_custom_call.1']
    #allocation9 [shape = 'u8[131072]{0}', space=vmem, size = 0x20000, scoped, tag = 'input window, operand 4, single buffered']
    #allocation10 [shape = 's32[1]{0}', space=sflag, size = 0x4, scoped, tag = 'scoped memory for tpu_custom_call.1']
    #allocation11 [shape = 'u8[32768]{0}', space=vmem, size = 0x8000, scoped, tag = 'input window, operand 6, single buffered']
    #allocation12 [shape = 'u8[8192]{0}', space=vmem, size = 0x2000, scoped, tag = 'output window, operand 0, single buffered']
    #allocation13 [shape = 'u8[1024]{0}', space=vmem, size = 0x400, scoped, tag = 'output window, operand 1, single buffered']
    #allocation14 [shape = 's32[1]{0}', space=sflag, size = 0x4, scoped, tag = 'scoped memory for tpu_custom_call.1']
    #allocation15 [shape = 'u8[1024]{0}', space=vmem, size = 0x400, scoped, tag = 'output window, operand 2, single buffered']
    %16 = vsyncpa [#allocation7], 0
    %17 = vsyncpa [#allocation10], 0
    %18 = vsyncpa [#allocation8], 0
    %19 = vsyncpa [#allocation14], 0
    // Predicated region
    $region2: #{tpu_custom_call.1} parent=1 // pred_check
      _
    $region3: #{tpu_custom_call.1} parent=1 // pred_check_branch
      %21 = sbr.rel (0) target = $region5
    $region4: #{tpu_custom_call.1} parent=1 // pred_region
      _
    $region5: #{tpu_custom_call.1} parent=1 // pred_fallthru
      _
    // Predicated region
    $region6: #{tpu_custom_call.1} parent=1 // pred_check
      _
    $region7: #{tpu_custom_call.1} parent=1 // pred_check_branch
      %23 = sbr.rel (0) target = $region9
    $region8: #{tpu_custom_call.1} parent=1 // pred_region
      _
    $region9: #{tpu_custom_call.1} parent=1 // pred_fallthru
      _
    // Predicated region
    $region10: #{tpu_custom_call.1} parent=1 // pred_check
      _
    $region11: #{tpu_custom_call.1} parent=1 // pred_check_branch
      %25 = sbr.rel (0) target = $region13
    $region12: #{tpu_custom_call.1} parent=1 // pred_region
      _
    $region13: #{tpu_custom_call.1} parent=1 // pred_fallthru
      _
    // Predicated region
    $region14: #{tpu_custom_call.1} parent=1 // pred_check
      _
    $region15: #{tpu_custom_call.1} parent=1 // pred_check_branch
      %27 = sbr.rel (0) target = $region17
    $region16: #{tpu_custom_call.1} parent=1 // pred_region
      %s29 = ssub.s32 4096, 4096
      %30 = vsyncadd [#allocation7], %s29
      %s31 = sshll.u32 [#allocation6], 4
      %s32 = int_to_ptr.vmem [resolvable:$true] %s31
      %37 = dma.hbm_to_vmem [thread:$0]  %s3, 4096, %s32, [#allocation7], 256, 256, 16
    $region17: #{tpu_custom_call.1} parent=1 // pred_fallthru
      _
    // Predicated region
    $region18: #{tpu_custom_call.1} parent=1 // pred_check
      _
    $region19: #{tpu_custom_call.1} parent=1 // pred_check_branch
      %39 = sbr.rel (0) target = $region21
    $region20: #{tpu_custom_call.1} parent=1 // pred_region
      %s41 = ssub.s32 4096, 4096
      %42 = vsyncadd [#allocation10], %s41
      %s43 = sshll.u32 [#allocation9], 4
      %s44 = int_to_ptr.vmem [resolvable:$true] %s43
      %49 = dma.hbm_to_vmem [thread:$0]  %s4, 4096, %s44, [#allocation10], 256, 256, 16
    $region21: #{tpu_custom_call.1} parent=1 // pred_fallthru
      _
    // Predicated region
    $region22: #{tpu_custom_call.1} parent=1 // pred_check
      _
    $region23: #{tpu_custom_call.1} parent=1 // pred_check_branch
      %51 = sbr.rel (0) target = $region25
    $region24: #{tpu_custom_call.1} parent=1 // pred_region
      _
    $region25: #{tpu_custom_call.1} parent=1 // pred_fallthru
      _
    // Predicated region
    $region26: #{tpu_custom_call.1} parent=1 // pred_check
      _
    $region27: #{tpu_custom_call.1} parent=1 // pred_check_branch
      %53 = sbr.rel (0) target = $region29
    $region28: #{tpu_custom_call.1} parent=1 // pred_region
      %s55 = ssub.s32 1024, 1024
      %56 = vsyncadd [#allocation10], %s55
      %s57 = sshll.u32 [#allocation11], 4
      %s58 = int_to_ptr.vmem [resolvable:$true] %s57
      %63 = dma.hbm_to_vmem [thread:$0]  %s6, 1024, %s58, [#allocation10], 64, 64, 4
    $region29: #{tpu_custom_call.1} parent=1 // pred_fallthru
      _
    // Predicated region
    $region30: #{tpu_custom_call.1} parent=1 // pred_check
      _
    $region31: #{tpu_custom_call.1} parent=1 // pred_check_branch
      %65 = sbr.rel (0) target = $region33
    $region32: #{tpu_custom_call.1} parent=1 // pred_region
      _
    $region33: #{tpu_custom_call.1} parent=1 // pred_fallthru
      _
    // Predicated region
    $region34: #{tpu_custom_call.1} parent=1 // pred_check
      _
    $region35: #{tpu_custom_call.1} parent=1 // pred_check_branch
      %67 = sbr.rel (0) target = $region37
    $region36: #{tpu_custom_call.1} parent=1 // pred_region
      %68 = dma.done [#allocation7], 4096
    $region37: #{tpu_custom_call.1} parent=1 // pred_fallthru
      _
    // Predicated region
    $region38: #{tpu_custom_call.1} parent=1 // pred_check
      _
    $region39: #{tpu_custom_call.1} parent=1 // pred_check_branch
      %70 = sbr.rel (0) target = $region41
    $region40: #{tpu_custom_call.1} parent=1 // pred_region
      %71 = dma.done [#allocation10], 4096
    $region41: #{tpu_custom_call.1} parent=1 // pred_fallthru
      _
    // Predicated region
    $region42: #{tpu_custom_call.1} parent=1 // pred_check
      _
    $region43: #{tpu_custom_call.1} parent=1 // pred_check_branch
      %73 = sbr.rel (0) target = $region45
    $region44: #{tpu_custom_call.1} parent=1 // pred_region
      %74 = dma.done [#allocation10], 1024
    $region45: #{tpu_custom_call.1} parent=1 // pred_fallthru
      _
    %v76 = vld [vmem:[%s0] sm:$0xff]
    %v77 = vld [vmem:[%s0 + $0x8] sm:$0xff]
    %v78 = vlaneseq
    %v79 = vand.u32 %v78, 127
    %80 = vset.pattern.permute.xlu0 0
    %81 = vperm.xlu0 %80, %v76
    %v82 = vpop.permute.xlu0 %81
    %83 = vset.pattern.permute.xlu0 0
    %84 = vperm.xlu0 %83, %v77
    %v85 = vpop.permute.xlu0 %84
    %vm86 = vcmp.eq.s32.totalorder %v79, %v82
    %vm87 = vcmp.eq.s32.totalorder %v79, %v85
    %v88 = vsel %vm86, 1.0, 0.0
    %v89 = vsel %vm87, 1.0, 0.0
    %v90 = vpack.c.bf16 %v89, %v88
    %v91 = vld [vmem:[#allocation6] sm:$0xff]
    %v92 = vld [vmem:[#allocation6 + $0x8] sm:$0xff]
    %v93 = vld [vmem:[#allocation6 + $0x10] sm:$0xff]
    %v94 = vld [vmem:[#allocation6 + $0x18] sm:$0xff]
    %v95 = vld [vmem:[#allocation6 + $0x20] sm:$0xff]
    %v96 = vld [vmem:[#allocation6 + $0x28] sm:$0xff]
    %v97 = vld [vmem:[#allocation6 + $0x30] sm:$0xff]
    %v98 = vld [vmem:[#allocation6 + $0x38] sm:$0xff]
    %v99 = vld [vmem:[#allocation6 + $0x40] sm:$0xff]
    %v100 = vld [vmem:[#allocation6 + $0x48] sm:$0xff]
    %v101 = vld [vmem:[#allocation6 + $0x50] sm:$0xff]
    %v102 = vld [vmem:[#allocation6 + $0x58] sm:$0xff]
    %v103 = vld [vmem:[#allocation6 + $0x60] sm:$0xff]
    %v104 = vld [vmem:[#allocation6 + $0x68] sm:$0xff]
    %v105 = vld [vmem:[#allocation6 + $0x70] sm:$0xff]
    %v106 = vld [vmem:[#allocation6 + $0x78] sm:$0xff]
    %v107 = vld [vmem:[#allocation6 + $0x80] sm:$0xff]
    %v108 = vld [vmem:[#allocation6 + $0x88] sm:$0xff]
    %v109 = vld [vmem:[#allocation6 + $0x90] sm:$0xff]
    %v110 = vld [vmem:[#allocation6 + $0x98] sm:$0xff]
    %v111 = vld [vmem:[#allocation6 + $0xa0] sm:$0xff]
    %v112 = vld [vmem:[#allocation6 + $0xa8] sm:$0xff]
    %v113 = vld [vmem:[#allocation6 + $0xb0] sm:$0xff]
    %v114 = vld [vmem:[#allocation6 + $0xb8] sm:$0xff]
    %v115 = vld [vmem:[#allocation6 + $0xc0] sm:$0xff]
    %v116 = vld [vmem:[#allocation6 + $0xc8] sm:$0xff]
    %v117 = vld [vmem:[#allocation6 + $0xd0] sm:$0xff]
    %v118 = vld [vmem:[#allocation6 + $0xd8] sm:$0xff]
    %v119 = vld [vmem:[#allocation6 + $0xe0] sm:$0xff]
    %v120 = vld [vmem:[#allocation6 + $0xe8] sm:$0xff]
    %v121 = vld [vmem:[#allocation6 + $0xf0] sm:$0xff]
    %v122 = vld [vmem:[#allocation6 + $0xf8] sm:$0xff]
    %v123 = vld [vmem:[%s5] sm:$0xf]
    %v125 = vlaneseq
    %v126 = vshrl.u32 %v125, 7
    %v127 = vsub.s32 0, %v126
    %v128 = vrot.slane %v123, %v127
    %v129 = vlaneseq
    %v130 = vshrl.u32 %v129, 7
    %v131 = vsub.s32 1, %v130
    %v132 = vrot.slane %v123, %v131
    %v133 = vlaneseq
    %v134 = vshrl.u32 %v133, 7
    %v135 = vsub.s32 2, %v134
    %v136 = vrot.slane %v123, %v135
    %v137 = vlaneseq
    %v138 = vshrl.u32 %v137, 7
    %v139 = vsub.s32 3, %v138
    %v140 = vrot.slane %v123, %v139
    %v177 = vunpack.c.l.b16 %v91
    %v178 = vunpack.c.h.b16 %v91
    %v179 = vunpack.c.l.b16 %v92
    %v180 = vunpack.c.h.b16 %v92
    %v181 = vunpack.c.l.b16 %v93
    %v182 = vunpack.c.h.b16 %v93
    %v183 = vunpack.c.l.b16 %v94
    %v184 = vunpack.c.h.b16 %v94
    %v185 = vunpack.c.l.b16 %v95
    %v186 = vunpack.c.h.b16 %v95
    %v187 = vunpack.c.l.b16 %v96
    %v188 = vunpack.c.h.b16 %v96
    %v189 = vunpack.c.l.b16 %v97
    %v190 = vunpack.c.h.b16 %v97
    %v191 = vunpack.c.l.b16 %v98
    %v192 = vunpack.c.h.b16 %v98
    %v193 = vunpack.c.l.b16 %v99
    %v194 = vunpack.c.h.b16 %v99
    %v195 = vunpack.c.l.b16 %v100
    %v196 = vunpack.c.h.b16 %v100
    %v197 = vunpack.c.l.b16 %v101
    %v198 = vunpack.c.h.b16 %v101
    %v199 = vunpack.c.l.b16 %v102
    %v200 = vunpack.c.h.b16 %v102
    %v201 = vunpack.c.l.b16 %v103
    %v202 = vunpack.c.h.b16 %v103
    %v203 = vunpack.c.l.b16 %v104
    %v204 = vunpack.c.h.b16 %v104
    %v205 = vunpack.c.l.b16 %v105
    %v206 = vunpack.c.h.b16 %v105
    %v207 = vunpack.c.l.b16 %v106
    %v208 = vunpack.c.h.b16 %v106
    %v209 = vunpack.c.l.b16 %v107
    %v210 = vunpack.c.h.b16 %v107
    %v211 = vunpack.c.l.b16 %v108
    %v212 = vunpack.c.h.b16 %v108
    %v213 = vunpack.c.l.b16 %v109
    %v214 = vunpack.c.h.b16 %v109
    %v215 = vunpack.c.l.b16 %v110
    %v216 = vunpack.c.h.b16 %v110
    %v217 = vunpack.c.l.b16 %v111
    %v218 = vunpack.c.h.b16 %v111
    %v219 = vunpack.c.l.b16 %v112
    %v220 = vunpack.c.h.b16 %v112
    %v221 = vunpack.c.l.b16 %v113
    %v222 = vunpack.c.h.b16 %v113
    %v223 = vunpack.c.l.b16 %v114
    %v224 = vunpack.c.h.b16 %v114
    %v225 = vunpack.c.l.b16 %v115
    %v226 = vunpack.c.h.b16 %v115
    %v227 = vunpack.c.l.b16 %v116
    %v228 = vunpack.c.h.b16 %v116
    %v229 = vunpack.c.l.b16 %v117
    %v230 = vunpack.c.h.b16 %v117
    %v231 = vunpack.c.l.b16 %v118
    %v232 = vunpack.c.h.b16 %v118
    %v233 = vunpack.c.l.b16 %v119
    %v234 = vunpack.c.h.b16 %v119
    %v235 = vunpack.c.l.b16 %v120
    %v236 = vunpack.c.h.b16 %v120
    %v237 = vunpack.c.l.b16 %v121
    %v238 = vunpack.c.h.b16 %v121
    %v239 = vunpack.c.l.b16 %v122
    %v240 = vunpack.c.h.b16 %v122
    %v241 = vpack.c.b16 %v181, %v177
    %v242 = vpack.c.b16 %v182, %v178
    %v243 = vpack.c.b16 %v183, %v179
    %v244 = vpack.c.b16 %v184, %v180
    %v245 = vpack.c.b16 %v189, %v185
    %v246 = vpack.c.b16 %v190, %v186
    %v247 = vpack.c.b16 %v191, %v187
    %v248 = vpack.c.b16 %v192, %v188
    %v249 = vpack.c.b16 %v197, %v193
    %v250 = vpack.c.b16 %v198, %v194
    %v251 = vpack.c.b16 %v199, %v195
    %v252 = vpack.c.b16 %v200, %v196
    %v253 = vpack.c.b16 %v205, %v201
    %v254 = vpack.c.b16 %v206, %v202
    %v255 = vpack.c.b16 %v207, %v203
    %v256 = vpack.c.b16 %v208, %v204
    %v257 = vpack.c.b16 %v213, %v209
    %v258 = vpack.c.b16 %v214, %v210
    %v259 = vpack.c.b16 %v215, %v211
    %v260 = vpack.c.b16 %v216, %v212
    %v261 = vpack.c.b16 %v221, %v217
    %v262 = vpack.c.b16 %v222, %v218
    %v263 = vpack.c.b16 %v223, %v219
    %v264 = vpack.c.b16 %v224, %v220
    %v265 = vpack.c.b16 %v229, %v225
    %v266 = vpack.c.b16 %v230, %v226
    %v267 = vpack.c.b16 %v231, %v227
    %v268 = vpack.c.b16 %v232, %v228
    %v269 = vpack.c.b16 %v237, %v233
    %v270 = vpack.c.b16 %v238, %v234
    %v271 = vpack.c.b16 %v239, %v235
    %v272 = vpack.c.b16 %v240, %v236
    %305 = vmatprep.subr.bf16.mxu0 %v270
    %306 = vmatpush1.bf16.msra.mxu0 %v269
    %307 = vmatprep.subr.bf16.mxu0 %v266
    %308 = vmatpush1.bf16.msra.mxu0 %v265
    %309 = vmatprep.subr.bf16.mxu0 %v262
    %310 = vmatpush1.bf16.msra.mxu0 %v261
    %311 = vmatprep.subr.bf16.mxu0 %v258
    %312 = vmatpush1.bf16.msra.mxu0 %v257
    %313 = vmatprep.subr.bf16.mxu0 %v254
    %314 = vmatpush1.bf16.msra.mxu0 %v253
    %315 = vmatprep.subr.bf16.mxu0 %v250
    %316 = vmatpush1.bf16.msra.mxu0 %v249
    %317 = vmatprep.subr.bf16.mxu0 %v246
    %318 = vmatpush1.bf16.msra.mxu0 %v245
    %319 = vmatprep.subr.bf16.mxu0 %v242
    %320 = vmatpush1.bf16.msra.mxu0 %v241
    %321 = vmatprep.subr.bf16.mxu0 0
    %322 = vmatpush2.bf16.msra.mxu0 0
    %323 = vmatprep.subr.bf16.mxu0 0
    %324 = vmatpush2.bf16.msra.mxu0 0
    %325 = vmatprep.subr.bf16.mxu0 0
    %326 = vmatpush2.bf16.msra.mxu0 0
    %327 = vmatprep.subr.bf16.mxu0 0
    %328 = vmatpush2.bf16.msra.mxu0 0
    %329 = vmatprep.subr.bf16.mxu0 0
    %330 = vmatpush2.bf16.msra.mxu0 0
    %331 = vmatprep.subr.bf16.mxu0 0
    %332 = vmatpush2.bf16.msra.mxu0 0
    %333 = vmatprep.subr.bf16.mxu0 0
    %334 = vmatpush2.bf16.msra.mxu0 0
    %335 = vmatprep.subr.bf16.mxu0 0
    %336 = vmatpush2.bf16.msra.mxu0 0
    %337 = vmatprep.mubr.bf16.mxu0 0
    %338 = vmatmul.mubr.bf16.gmra.mxu0 %v90
    %v339 = vpop.f32.mrf.mxu0
    %v340 = vadd.f32 %v128, %v339
    %v341 = vpop.f32.mrf.mxu0
    %v342 = vadd.f32 %v132, %v341
    %v343 = vpop.f32.mrf.mxu0
    %v344 = vadd.f32 %v128, %v343
    %v345 = vpop.f32.mrf.mxu0
    %v346 = vadd.f32 %v132, %v345
    %347 = vdwg.mxu0
    %348 = vmatprep.subr.bf16.mxu0 %v272
    %349 = vmatpush1.bf16.msra.mxu0 %v271
    %350 = vmatprep.subr.bf16.mxu0 %v268
    %351 = vmatpush1.bf16.msra.mxu0 %v267
    %352 = vmatprep.subr.bf16.mxu0 %v264
    %353 = vmatpush1.bf16.msra.mxu0 %v263
    %354 = vmatprep.subr.bf16.mxu0 %v260
    %355 = vmatpush1.bf16.msra.mxu0 %v259
    %356 = vmatprep.subr.bf16.mxu0 %v256
    %357 = vmatpush1.bf16.msra.mxu0 %v255
    %358 = vmatprep.subr.bf16.mxu0 %v252
    %359 = vmatpush1.bf16.msra.mxu0 %v251
    %360 = vmatprep.subr.bf16.mxu0 %v248
    %361 = vmatpush1.bf16.msra.mxu0 %v247
    %362 = vmatprep.subr.bf16.mxu0 %v244
    %363 = vmatpush1.bf16.msra.mxu0 %v243
    %364 = vmatprep.subr.bf16.mxu0 0
    %365 = vmatpush2.bf16.msra.mxu0 0
    %366 = vmatprep.subr.bf16.mxu0 0
    %367 = vmatpush2.bf16.msra.mxu0 0
    %368 = vmatprep.subr.bf16.mxu0 0
    %369 = vmatpush2.bf16.msra.mxu0 0
    %370 = vmatprep.subr.bf16.mxu0 0
    %371 = vmatpush2.bf16.msra.mxu0 0
    %372 = vmatprep.subr.bf16.mxu0 0
    %373 = vmatpush2.bf16.msra.mxu0 0
    %374 = vmatprep.subr.bf16.mxu0 0
    %375 = vmatpush2.bf16.msra.mxu0 0
    %376 = vmatprep.subr.bf16.mxu0 0
    %377 = vmatpush2.bf16.msra.mxu0 0
    %378 = vmatprep.subr.bf16.mxu0 0
    %379 = vmatpush2.bf16.msra.mxu0 0
    %380 = vmatprep.mubr.bf16.mxu0 0
    %381 = vmatmul.mubr.bf16.gmra.mxu0 %v90
    %v382 = vpop.f32.mrf.mxu0
    %v383 = vadd.f32 %v136, %v382
    %v384 = vpop.f32.mrf.mxu0
    %v385 = vadd.f32 %v140, %v384
    %v386 = vpop.f32.mrf.mxu0
    %v387 = vadd.f32 %v136, %v386
    %v388 = vpop.f32.mrf.mxu0
    %v389 = vadd.f32 %v140, %v388
    %390 = vdwg.mxu0
    %391 = vst [vmem:[#allocation2] sm:$0xff] %v340
    %392 = vst [vmem:[#allocation2 + $0x8] sm:$0xff] %v342
    %393 = vst [vmem:[#allocation2 + $0x10] sm:$0xff] %v383
    %394 = vst [vmem:[#allocation2 + $0x18] sm:$0xff] %v385
    %395 = vst [vmem:[#allocation2 + $0x20] sm:$0xff] %v344
    %396 = vst [vmem:[#allocation2 + $0x28] sm:$0xff] %v346
    %397 = vst [vmem:[#allocation2 + $0x30] sm:$0xff] %v387
    %398 = vst [vmem:[#allocation2 + $0x38] sm:$0xff] %v389
    %v399 = vld [vmem:[%s1] sm:$0x3]
    %400 = vst [vmem:[#allocation4] sm:$0x3] %v399
    %v401 = vld [vmem:[%s2] sm:$0x3]
    %402 = vst [vmem:[#allocation5] sm:$0x3] %v401
    %v403 = vld [vmem:[#allocation4] sm:$0x3]
    %v404 = vld [vmem:[#allocation5] sm:$0x3]
    %v405 = vld [vmem:[#allocation2] sm:$0x3]
    %v406 = vld [vmem:[#allocation2 + $0x8] sm:$0x3]
    %v407 = vld [vmem:[#allocation2 + $0x10] sm:$0x3]
    %v408 = vld [vmem:[#allocation2 + $0x18] sm:$0x3]
    %v409 = vpack.c.bf16 %v403, %v403
    %v410 = vld [vmem:[#allocation9] sm:$0xff]
    %v411 = vld [vmem:[#allocation9 + $0x8] sm:$0xff]
    %v412 = vld [vmem:[#allocation9 + $0x10] sm:$0xff]
    %v413 = vld [vmem:[#allocation9 + $0x18] sm:$0xff]
    %v414 = vld [vmem:[#allocation9 + $0x20] sm:$0xff]
    %v415 = vld [vmem:[#allocation9 + $0x28] sm:$0xff]
    %v416 = vld [vmem:[#allocation9 + $0x30] sm:$0xff]
    %v417 = vld [vmem:[#allocation9 + $0x38] sm:$0xff]
    %v418 = vld [vmem:[#allocation9 + $0x40] sm:$0xff]
    %v419 = vld [vmem:[#allocation9 + $0x48] sm:$0xff]
    %v420 = vld [vmem:[#allocation9 + $0x50] sm:$0xff]
    %v421 = vld [vmem:[#allocation9 + $0x58] sm:$0xff]
    %v422 = vld [vmem:[#allocation9 + $0x60] sm:$0xff]
    %v423 = vld [vmem:[#allocation9 + $0x68] sm:$0xff]
    %v424 = vld [vmem:[#allocation9 + $0x70] sm:$0xff]
    %v425 = vld [vmem:[#allocation9 + $0x78] sm:$0xff]
    %v426 = vld [vmem:[#allocation9 + $0x80] sm:$0xff]
    %v427 = vld [vmem:[#allocation9 + $0x88] sm:$0xff]
    %v428 = vld [vmem:[#allocation9 + $0x90] sm:$0xff]
    %v429 = vld [vmem:[#allocation9 + $0x98] sm:$0xff]
    %v430 = vld [vmem:[#allocation9 + $0xa0] sm:$0xff]
    %v431 = vld [vmem:[#allocation9 + $0xa8] sm:$0xff]
    %v432 = vld [vmem:[#allocation9 + $0xb0] sm:$0xff]
    %v433 = vld [vmem:[#allocation9 + $0xb8] sm:$0xff]
    %v434 = vld [vmem:[#allocation9 + $0xc0] sm:$0xff]
    %v435 = vld [vmem:[#allocation9 + $0xc8] sm:$0xff]
    %v436 = vld [vmem:[#allocation9 + $0xd0] sm:$0xff]
    %v437 = vld [vmem:[#allocation9 + $0xd8] sm:$0xff]
    %v438 = vld [vmem:[#allocation9 + $0xe0] sm:$0xff]
    %v439 = vld [vmem:[#allocation9 + $0xe8] sm:$0xff]
    %v440 = vld [vmem:[#allocation9 + $0xf0] sm:$0xff]
    %v441 = vld [vmem:[#allocation9 + $0xf8] sm:$0xff]
    %v474 = vunpack.c.l.b16 %v410
    %v475 = vunpack.c.h.b16 %v410
    %v476 = vunpack.c.l.b16 %v411
    %v477 = vunpack.c.h.b16 %v411
    %v478 = vunpack.c.l.b16 %v412
    %v479 = vunpack.c.h.b16 %v412
    %v480 = vunpack.c.l.b16 %v413
    %v481 = vunpack.c.h.b16 %v413
    %v482 = vunpack.c.l.b16 %v414
    %v483 = vunpack.c.h.b16 %v414
    %v484 = vunpack.c.l.b16 %v415
    %v485 = vunpack.c.h.b16 %v415
    %v486 = vunpack.c.l.b16 %v416
    %v487 = vunpack.c.h.b16 %v416
    %v488 = vunpack.c.l.b16 %v417
    %v489 = vunpack.c.h.b16 %v417
    %v490 = vunpack.c.l.b16 %v418
    %v491 = vunpack.c.h.b16 %v418
    %v492 = vunpack.c.l.b16 %v419
    %v493 = vunpack.c.h.b16 %v419
    %v494 = vunpack.c.l.b16 %v420
    %v495 = vunpack.c.h.b16 %v420
    %v496 = vunpack.c.l.b16 %v421
    %v497 = vunpack.c.h.b16 %v421
    %v498 = vunpack.c.l.b16 %v422
    %v499 = vunpack.c.h.b16 %v422
    %v500 = vunpack.c.l.b16 %v423
    %v501 = vunpack.c.h.b16 %v423
    %v502 = vunpack.c.l.b16 %v424
    %v503 = vunpack.c.h.b16 %v424
    %v504 = vunpack.c.l.b16 %v425
    %v505 = vunpack.c.h.b16 %v425
    %v506 = vunpack.c.l.b16 %v426
    %v507 = vunpack.c.h.b16 %v426
    %v508 = vunpack.c.l.b16 %v427
    %v509 = vunpack.c.h.b16 %v427
    %v510 = vunpack.c.l.b16 %v428
    %v511 = vunpack.c.h.b16 %v428
    %v512 = vunpack.c.l.b16 %v429
    %v513 = vunpack.c.h.b16 %v429
    %v514 = vunpack.c.l.b16 %v430
    %v515 = vunpack.c.h.b16 %v430
    %v516 = vunpack.c.l.b16 %v431
    %v517 = vunpack.c.h.b16 %v431
    %v518 = vunpack.c.l.b16 %v432
    %v519 = vunpack.c.h.b16 %v432
    %v520 = vunpack.c.l.b16 %v433
    %v521 = vunpack.c.h.b16 %v433
    %v522 = vunpack.c.l.b16 %v434
    %v523 = vunpack.c.h.b16 %v434
    %v524 = vunpack.c.l.b16 %v435
    %v525 = vunpack.c.h.b16 %v435
    %v526 = vunpack.c.l.b16 %v436
    %v527 = vunpack.c.h.b16 %v436
    %v528 = vunpack.c.l.b16 %v437
    %v529 = vunpack.c.h.b16 %v437
    %v530 = vunpack.c.l.b16 %v438
    %v531 = vunpack.c.h.b16 %v438
    %v532 = vunpack.c.l.b16 %v439
    %v533 = vunpack.c.h.b16 %v439
    %v534 = vunpack.c.l.b16 %v440
    %v535 = vunpack.c.h.b16 %v440
    %v536 = vunpack.c.l.b16 %v441
    %v537 = vunpack.c.h.b16 %v441
    %v538 = vpack.c.b16 %v478, %v474
    %v539 = vpack.c.b16 %v479, %v475
    %v540 = vpack.c.b16 %v480, %v476
    %v541 = vpack.c.b16 %v481, %v477
    %v542 = vpack.c.b16 %v486, %v482
    %v543 = vpack.c.b16 %v487, %v483
    %v544 = vpack.c.b16 %v488, %v484
    %v545 = vpack.c.b16 %v489, %v485
    %v546 = vpack.c.b16 %v494, %v490
    %v547 = vpack.c.b16 %v495, %v491
    %v548 = vpack.c.b16 %v496, %v492
    %v549 = vpack.c.b16 %v497, %v493
    %v550 = vpack.c.b16 %v502, %v498
    %v551 = vpack.c.b16 %v503, %v499
    %v552 = vpack.c.b16 %v504, %v500
    %v553 = vpack.c.b16 %v505, %v501
    %v554 = vpack.c.b16 %v510, %v506
    %v555 = vpack.c.b16 %v511, %v507
    %v556 = vpack.c.b16 %v512, %v508
    %v557 = vpack.c.b16 %v513, %v509
    %v558 = vpack.c.b16 %v518, %v514
    %v559 = vpack.c.b16 %v519, %v515
    %v560 = vpack.c.b16 %v520, %v516
    %v561 = vpack.c.b16 %v521, %v517
    %v562 = vpack.c.b16 %v526, %v522
    %v563 = vpack.c.b16 %v527, %v523
    %v564 = vpack.c.b16 %v528, %v524
    %v565 = vpack.c.b16 %v529, %v525
    %v566 = vpack.c.b16 %v534, %v530
    %v567 = vpack.c.b16 %v535, %v531
    %v568 = vpack.c.b16 %v536, %v532
    %v569 = vpack.c.b16 %v537, %v533
    %602 = vmatprep.subr.bf16.mxu0 %v567
    %603 = vmatpush1.bf16.msra.mxu0 %v566
    %604 = vmatprep.subr.bf16.mxu0 %v563
    %605 = vmatpush1.bf16.msra.mxu0 %v562
    %606 = vmatprep.subr.bf16.mxu0 %v559
    %607 = vmatpush1.bf16.msra.mxu0 %v558
    %608 = vmatprep.subr.bf16.mxu0 %v555
    %609 = vmatpush1.bf16.msra.mxu0 %v554
    %610 = vmatprep.subr.bf16.mxu0 %v551
    %611 = vmatpush1.bf16.msra.mxu0 %v550
    %612 = vmatprep.subr.bf16.mxu0 %v547
    %613 = vmatpush1.bf16.msra.mxu0 %v546
    %614 = vmatprep.subr.bf16.mxu0 %v543
    %615 = vmatpush1.bf16.msra.mxu0 %v542
    %616 = vmatprep.subr.bf16.mxu0 %v539
    %617 = vmatpush1.bf16.msra.mxu0 %v538
    %618 = vmatprep.subr.bf16.mxu0 0
    %619 = vmatpush2.bf16.msra.mxu0 0
    %620 = vmatprep.subr.bf16.mxu0 0
    %621 = vmatpush2.bf16.msra.mxu0 0
    %622 = vmatprep.subr.bf16.mxu0 0
    %623 = vmatpush2.bf16.msra.mxu0 0
    %624 = vmatprep.subr.bf16.mxu0 0
    %625 = vmatpush2.bf16.msra.mxu0 0
    %626 = vmatprep.subr.bf16.mxu0 0
    %627 = vmatpush2.bf16.msra.mxu0 0
    %628 = vmatprep.subr.bf16.mxu0 0
    %629 = vmatpush2.bf16.msra.mxu0 0
    %630 = vmatprep.subr.bf16.mxu0 0
    %631 = vmatpush2.bf16.msra.mxu0 0
    %632 = vmatprep.subr.bf16.mxu0 0
    %633 = vmatpush2.bf16.msra.mxu0 0
    %634 = vmatprep.mubr.bf16.mxu0 0
    %635 = vmatmul.mubr.bf16.gmra.mxu0 %v409
    %v636 = vpop.f32.mrf.mxu0
    %v637 = vadd.f32 0.0, %v636
    %v638 = vpop.f32.mrf.mxu0
    %v639 = vadd.f32 0.0, %v638
    %v640 = vpop.f32.mrf.mxu0
    %v641 = vpop.f32.mrf.mxu0
    %642 = vdwg.mxu0
    %643 = vmatprep.subr.bf16.mxu0 %v569
    %644 = vmatpush1.bf16.msra.mxu0 %v568
    %645 = vmatprep.subr.bf16.mxu0 %v565
    %646 = vmatpush1.bf16.msra.mxu0 %v564
    %647 = vmatprep.subr.bf16.mxu0 %v561
    %648 = vmatpush1.bf16.msra.mxu0 %v560
    %649 = vmatprep.subr.bf16.mxu0 %v557
    %650 = vmatpush1.bf16.msra.mxu0 %v556
    %651 = vmatprep.subr.bf16.mxu0 %v553
    %652 = vmatpush1.bf16.msra.mxu0 %v552
    %653 = vmatprep.subr.bf16.mxu0 %v549
    %654 = vmatpush1.bf16.msra.mxu0 %v548
    %655 = vmatprep.subr.bf16.mxu0 %v545
    %656 = vmatpush1.bf16.msra.mxu0 %v544
    %657 = vmatprep.subr.bf16.mxu0 %v541
    %658 = vmatpush1.bf16.msra.mxu0 %v540
    %659 = vmatprep.subr.bf16.mxu0 0
    %660 = vmatpush2.bf16.msra.mxu0 0
    %661 = vmatprep.subr.bf16.mxu0 0
    %662 = vmatpush2.bf16.msra.mxu0 0
    %663 = vmatprep.subr.bf16.mxu0 0
    %664 = vmatpush2.bf16.msra.mxu0 0
    %665 = vmatprep.subr.bf16.mxu0 0
    %666 = vmatpush2.bf16.msra.mxu0 0
    %667 = vmatprep.subr.bf16.mxu0 0
    %668 = vmatpush2.bf16.msra.mxu0 0
    %669 = vmatprep.subr.bf16.mxu0 0
    %670 = vmatpush2.bf16.msra.mxu0 0
    %671 = vmatprep.subr.bf16.mxu0 0
    %672 = vmatpush2.bf16.msra.mxu0 0
    %673 = vmatprep.subr.bf16.mxu0 0
    %674 = vmatpush2.bf16.msra.mxu0 0
    %675 = vmatprep.mubr.bf16.mxu0 0
    %676 = vmatmul.mubr.bf16.gmra.mxu0 %v409
    %v677 = vpop.f32.mrf.mxu0
    %v678 = vadd.f32 0.0, %v677
    %v679 = vpop.f32.mrf.mxu0
    %v680 = vadd.f32 0.0, %v679
    %v681 = vpop.f32.mrf.mxu0
    %v682 = vpop.f32.mrf.mxu0
    %683 = vdwg.mxu0
    %v684 = vadd.f32 %v405, %v637
    %v685 = vadd.f32 %v406, %v639
    %v686 = vadd.f32 %v407, %v678
    %v687 = vadd.f32 %v408, %v680
    %v688 = vxor.u32 %v684, 2147483648
    %v689 = vmul.f32 %v688, 1.442695
    %v690 = vpow.pop %v689
    %v691 = vadd.f32 %v690, 1.0
    %v692 = vrcp.pop %v691
    %v693 = vmul.f32 1.0, %v692
    %v694 = vxor.u32 %v685, 2147483648
    %v695 = vmul.f32 %v694, 1.442695
    %v696 = vpow.pop %v695
    %v697 = vadd.f32 %v696, 1.0
    %v698 = vrcp.pop %v697
    %v699 = vmul.f32 1.0, %v698
    %v700 = vtanh.pop %v686
    %v701 = vxor.u32 %v687, 2147483648
    %v702 = vmul.f32 %v701, 1.442695
    %v703 = vpow.pop %v702
    %v704 = vadd.f32 %v703, 1.0
    %v705 = vrcp.pop %v704
    %v706 = vmul.f32 1.0, %v705
    %v707 = vmul.f32 %v699, %v404
    %v708 = vmul.f32 %v693, %v700
    %v709 = vadd.f32 %v707, %v708
    %v710 = vtanh.pop %v709
    %v711 = vmul.f32 %v706, %v710
    %712 = vst [vmem:[#allocation4] sm:$0x3] %v711
    %713 = vst [vmem:[#allocation5] sm:$0x3] %v709
    %714 = vst [vmem:[#allocation3] sm:$0x3] %v711
    %v715 = vld [vmem:[#allocation4] sm:$0x3]
    %v716 = vld [vmem:[#allocation5] sm:$0x3]
    %v717 = vld [vmem:[#allocation2] sm:$0xc]
    %v718 = vld [vmem:[#allocation2 + $0x8] sm:$0xc]
    %v719 = vld [vmem:[#allocation2 + $0x10] sm:$0xc]
    %v720 = vld [vmem:[#allocation2 + $0x18] sm:$0xc]
    %v721 = vpack.c.bf16 %v715, %v715
    %v722 = vld [vmem:[#allocation9] sm:$0xff]
    %v723 = vld [vmem:[#allocation9 + $0x8] sm:$0xff]
    %v724 = vld [vmem:[#allocation9 + $0x10] sm:$0xff]
    %v725 = vld [vmem:[#allocation9 + $0x18] sm:$0xff]
    %v726 = vld [vmem:[#allocation9 + $0x20] sm:$0xff]
    %v727 = vld [vmem:[#allocation9 + $0x28] sm:$0xff]
    %v728 = vld [vmem:[#allocation9 + $0x30] sm:$0xff]
    %v729 = vld [vmem:[#allocation9 + $0x38] sm:$0xff]
    %v730 = vld [vmem:[#allocation9 + $0x40] sm:$0xff]
    %v731 = vld [vmem:[#allocation9 + $0x48] sm:$0xff]
    %v732 = vld [vmem:[#allocation9 + $0x50] sm:$0xff]
    %v733 = vld [vmem:[#allocation9 + $0x58] sm:$0xff]
    %v734 = vld [vmem:[#allocation9 + $0x60] sm:$0xff]
    %v735 = vld [vmem:[#allocation9 + $0x68] sm:$0xff]
    %v736 = vld [vmem:[#allocation9 + $0x70] sm:$0xff]
    %v737 = vld [vmem:[#allocation9 + $0x78] sm:$0xff]
    %v738 = vld [vmem:[#allocation9 + $0x80] sm:$0xff]
    %v739 = vld [vmem:[#allocation9 + $0x88] sm:$0xff]
    %v740 = vld [vmem:[#allocation9 + $0x90] sm:$0xff]
    %v741 = vld [vmem:[#allocation9 + $0x98] sm:$0xff]
    %v742 = vld [vmem:[#allocation9 + $0xa0] sm:$0xff]
    %v743 = vld [vmem:[#allocation9 + $0xa8] sm:$0xff]
    %v744 = vld [vmem:[#allocation9 + $0xb0] sm:$0xff]
    %v745 = vld [vmem:[#allocation9 + $0xb8] sm:$0xff]
    %v746 = vld [vmem:[#allocation9 + $0xc0] sm:$0xff]
    %v747 = vld [vmem:[#allocation9 + $0xc8] sm:$0xff]
    %v748 = vld [vmem:[#allocation9 + $0xd0] sm:$0xff]
    %v749 = vld [vmem:[#allocation9 + $0xd8] sm:$0xff]
    %v750 = vld [vmem:[#allocation9 + $0xe0] sm:$0xff]
    %v751 = vld [vmem:[#allocation9 + $0xe8] sm:$0xff]
    %v752 = vld [vmem:[#allocation9 + $0xf0] sm:$0xff]
    %v753 = vld [vmem:[#allocation9 + $0xf8] sm:$0xff]
    %v786 = vunpack.c.l.b16 %v722
    %v787 = vunpack.c.h.b16 %v722
    %v788 = vunpack.c.l.b16 %v723
    %v789 = vunpack.c.h.b16 %v723
    %v790 = vunpack.c.l.b16 %v724
    %v791 = vunpack.c.h.b16 %v724
    %v792 = vunpack.c.l.b16 %v725
    %v793 = vunpack.c.h.b16 %v725
    %v794 = vunpack.c.l.b16 %v726
    %v795 = vunpack.c.h.b16 %v726
    %v796 = vunpack.c.l.b16 %v727
    %v797 = vunpack.c.h.b16 %v727
    %v798 = vunpack.c.l.b16 %v728
    %v799 = vunpack.c.h.b16 %v728
    %v800 = vunpack.c.l.b16 %v729
    %v801 = vunpack.c.h.b16 %v729
    %v802 = vunpack.c.l.b16 %v730
    %v803 = vunpack.c.h.b16 %v730
    %v804 = vunpack.c.l.b16 %v731
    %v805 = vunpack.c.h.b16 %v731
    %v806 = vunpack.c.l.b16 %v732
    %v807 = vunpack.c.h.b16 %v732
    %v808 = vunpack.c.l.b16 %v733
    %v809 = vunpack.c.h.b16 %v733
    %v810 = vunpack.c.l.b16 %v734
    %v811 = vunpack.c.h.b16 %v734
    %v812 = vunpack.c.l.b16 %v735
    %v813 = vunpack.c.h.b16 %v735
    %v814 = vunpack.c.l.b16 %v736
    %v815 = vunpack.c.h.b16 %v736
    %v816 = vunpack.c.l.b16 %v737
    %v817 = vunpack.c.h.b16 %v737
    %v818 = vunpack.c.l.b16 %v738
    %v819 = vunpack.c.h.b16 %v738
    %v820 = vunpack.c.l.b16 %v739
    %v821 = vunpack.c.h.b16 %v739
    %v822 = vunpack.c.l.b16 %v740
    %v823 = vunpack.c.h.b16 %v740
    %v824 = vunpack.c.l.b16 %v741
    %v825 = vunpack.c.h.b16 %v741
    %v826 = vunpack.c.l.b16 %v742
    %v827 = vunpack.c.h.b16 %v742
    %v828 = vunpack.c.l.b16 %v743
    %v829 = vunpack.c.h.b16 %v743
    %v830 = vunpack.c.l.b16 %v744
    %v831 = vunpack.c.h.b16 %v744
    %v832 = vunpack.c.l.b16 %v745
    %v833 = vunpack.c.h.b16 %v745
    %v834 = vunpack.c.l.b16 %v746
    %v835 = vunpack.c.h.b16 %v746
    %v836 = vunpack.c.l.b16 %v747
    %v837 = vunpack.c.h.b16 %v747
    %v838 = vunpack.c.l.b16 %v748
    %v839 = vunpack.c.h.b16 %v748
    %v840 = vunpack.c.l.b16 %v749
    %v841 = vunpack.c.h.b16 %v749
    %v842 = vunpack.c.l.b16 %v750
    %v843 = vunpack.c.h.b16 %v750
    %v844 = vunpack.c.l.b16 %v751
    %v845 = vunpack.c.h.b16 %v751
    %v846 = vunpack.c.l.b16 %v752
    %v847 = vunpack.c.h.b16 %v752
    %v848 = vunpack.c.l.b16 %v753
    %v849 = vunpack.c.h.b16 %v753
    %v850 = vpack.c.b16 %v790, %v786
    %v851 = vpack.c.b16 %v791, %v787
    %v852 = vpack.c.b16 %v792, %v788
    %v853 = vpack.c.b16 %v793, %v789
    %v854 = vpack.c.b16 %v798, %v794
    %v855 = vpack.c.b16 %v799, %v795
    %v856 = vpack.c.b16 %v800, %v796
    %v857 = vpack.c.b16 %v801, %v797
    %v858 = vpack.c.b16 %v806, %v802
    %v859 = vpack.c.b16 %v807, %v803
    %v860 = vpack.c.b16 %v808, %v804
    %v861 = vpack.c.b16 %v809, %v805
    %v862 = vpack.c.b16 %v814, %v810
    %v863 = vpack.c.b16 %v815, %v811
    %v864 = vpack.c.b16 %v816, %v812
    %v865 = vpack.c.b16 %v817, %v813
    %v866 = vpack.c.b16 %v822, %v818
    %v867 = vpack.c.b16 %v823, %v819
    %v868 = vpack.c.b16 %v824, %v820
    %v869 = vpack.c.b16 %v825, %v821
    %v870 = vpack.c.b16 %v830, %v826
    %v871 = vpack.c.b16 %v831, %v827
    %v872 = vpack.c.b16 %v832, %v828
    %v873 = vpack.c.b16 %v833, %v829
    %v874 = vpack.c.b16 %v838, %v834
    %v875 = vpack.c.b16 %v839, %v835
    %v876 = vpack.c.b16 %v840, %v836
    %v877 = vpack.c.b16 %v841, %v837
    %v878 = vpack.c.b16 %v846, %v842
    %v879 = vpack.c.b16 %v847, %v843
    %v880 = vpack.c.b16 %v848, %v844
    %v881 = vpack.c.b16 %v849, %v845
    %914 = vmatprep.subr.bf16.mxu0 %v879
    %915 = vmatpush1.bf16.msra.mxu0 %v878
    %916 = vmatprep.subr.bf16.mxu0 %v875
    %917 = vmatpush1.bf16.msra.mxu0 %v874
    %918 = vmatprep.subr.bf16.mxu0 %v871
    %919 = vmatpush1.bf16.msra.mxu0 %v870
    %920 = vmatprep.subr.bf16.mxu0 %v867
    %921 = vmatpush1.bf16.msra.mxu0 %v866
    %922 = vmatprep.subr.bf16.mxu0 %v863
    %923 = vmatpush1.bf16.msra.mxu0 %v862
    %924 = vmatprep.subr.bf16.mxu0 %v859
    %925 = vmatpush1.bf16.msra.mxu0 %v858
    %926 = vmatprep.subr.bf16.mxu0 %v855
    %927 = vmatpush1.bf16.msra.mxu0 %v854
    %928 = vmatprep.subr.bf16.mxu0 %v851
    %929 = vmatpush1.bf16.msra.mxu0 %v850
    %930 = vmatprep.subr.bf16.mxu0 0
    %931 = vmatpush2.bf16.msra.mxu0 0
    %932 = vmatprep.subr.bf16.mxu0 0
    %933 = vmatpush2.bf16.msra.mxu0 0
    %934 = vmatprep.subr.bf16.mxu0 0
    %935 = vmatpush2.bf16.msra.mxu0 0
    %936 = vmatprep.subr.bf16.mxu0 0
    %937 = vmatpush2.bf16.msra.mxu0 0
    %938 = vmatprep.subr.bf16.mxu0 0
    %939 = vmatpush2.bf16.msra.mxu0 0
    %940 = vmatprep.subr.bf16.mxu0 0
    %941 = vmatpush2.bf16.msra.mxu0 0
    %942 = vmatprep.subr.bf16.mxu0 0
    %943 = vmatpush2.bf16.msra.mxu0 0
    %944 = vmatprep.subr.bf16.mxu0 0
    %945 = vmatpush2.bf16.msra.mxu0 0
    %946 = vmatprep.mubr.bf16.mxu0 0
    %947 = vmatmul.mubr.bf16.gmra.mxu0 %v721
    %v948 = vpop.f32.mrf.mxu0
    %v949 = vadd.f32 0.0, %v948
    %v950 = vpop.f32.mrf.mxu0
    %v951 = vadd.f32 0.0, %v950
    %v952 = vpop.f32.mrf.mxu0
    %v953 = vpop.f32.mrf.mxu0
    %954 = vdwg.mxu0
    %955 = vmatprep.subr.bf16.mxu0 %v881
    %956 = vmatpush1.bf16.msra.mxu0 %v880
    %957 = vmatprep.subr.bf16.mxu0 %v877
    %958 = vmatpush1.bf16.msra.mxu0 %v876
    %959 = vmatprep.subr.bf16.mxu0 %v873
    %960 = vmatpush1.bf16.msra.mxu0 %v872
    %961 = vmatprep.subr.bf16.mxu0 %v869
    %962 = vmatpush1.bf16.msra.mxu0 %v868
    %963 = vmatprep.subr.bf16.mxu0 %v865
    %964 = vmatpush1.bf16.msra.mxu0 %v864
    %965 = vmatprep.subr.bf16.mxu0 %v861
    %966 = vmatpush1.bf16.msra.mxu0 %v860
    %967 = vmatprep.subr.bf16.mxu0 %v857
    %968 = vmatpush1.bf16.msra.mxu0 %v856
    %969 = vmatprep.subr.bf16.mxu0 %v853
    %970 = vmatpush1.bf16.msra.mxu0 %v852
    %971 = vmatprep.subr.bf16.mxu0 0
    %972 = vmatpush2.bf16.msra.mxu0 0
    %973 = vmatprep.subr.bf16.mxu0 0
    %974 = vmatpush2.bf16.msra.mxu0 0
    %975 = vmatprep.subr.bf16.mxu0 0
    %976 = vmatpush2.bf16.msra.mxu0 0
    %977 = vmatprep.subr.bf16.mxu0 0
    %978 = vmatpush2.bf16.msra.mxu0 0
    %979 = vmatprep.subr.bf16.mxu0 0
    %980 = vmatpush2.bf16.msra.mxu0 0
    %981 = vmatprep.subr.bf16.mxu0 0
    %982 = vmatpush2.bf16.msra.mxu0 0
    %983 = vmatprep.subr.bf16.mxu0 0
    %984 = vmatpush2.bf16.msra.mxu0 0
    %985 = vmatprep.subr.bf16.mxu0 0
    %986 = vmatpush2.bf16.msra.mxu0 0
    %987 = vmatprep.mubr.bf16.mxu0 0
    %988 = vmatmul.mubr.bf16.gmra.mxu0 %v721
    %v989 = vpop.f32.mrf.mxu0
    %v990 = vadd.f32 0.0, %v989
    %v991 = vpop.f32.mrf.mxu0
    %v992 = vadd.f32 0.0, %v991
    %v993 = vpop.f32.mrf.mxu0
    %v994 = vpop.f32.mrf.mxu0
    %995 = vdwg.mxu0
    %v1000 = vrot.slane %v949, 6
    %v1001 = vrot.slane %v951, 6
    %v1002 = vrot.slane %v990, 6
    %v1003 = vrot.slane %v992, 6
    %v1008 = vadd.f32 %v717, %v1000
    %v1009 = vadd.f32 %v718, %v1001
    %v1010 = vadd.f32 %v719, %v1002
    %v1011 = vadd.f32 %v720, %v1003
    %v1012 = vxor.u32 %v1008, 2147483648
    %v1013 = vmul.f32 %v1012, 1.442695
    %v1014 = vpow.pop %v1013
    %v1015 = vadd.f32 %v1014, 1.0
    %v1016 = vrcp.pop %v1015
    %v1017 = vmul.f32 1.0, %v1016
    %v1018 = vxor.u32 %v1009, 2147483648
    %v1019 = vmul.f32 %v1018, 1.442695
    %v1020 = vpow.pop %v1019
    %v1021 = vadd.f32 %v1020, 1.0
    %v1022 = vrcp.pop %v1021
    %v1023 = vmul.f32 1.0, %v1022
    %v1024 = vtanh.pop %v1010
    %v1025 = vxor.u32 %v1011, 2147483648
    %v1026 = vmul.f32 %v1025, 1.442695
    %v1027 = vpow.pop %v1026
    %v1028 = vadd.f32 %v1027, 1.0
    %v1029 = vrcp.pop %v1028
    %v1030 = vmul.f32 1.0, %v1029
    %v1032 = vrot.slane %v716, 6
    %v1034 = vmul.f32 %v1023, %v1032
    %v1035 = vmul.f32 %v1017, %v1024
    %v1036 = vadd.f32 %v1034, %v1035
    %v1037 = vtanh.pop %v1036
    %v1038 = vmul.f32 %v1030, %v1037
    %1039 = vst [vmem:[#allocation4 - $0x2] sm:$0xc] %v1038
    %1040 = vst [vmem:[#allocation5 - $0x2] sm:$0xc] %v1036
    %1041 = vst [vmem:[#allocation3] sm:$0xc] %v1038
    %v1042 = vld [vmem:[#allocation4] sm:$0x3]
    %v1043 = vld [vmem:[#allocation5] sm:$0x3]
    %v1044 = vld [vmem:[#allocation2] sm:$0x30]
    %v1045 = vld [vmem:[#allocation2 + $0x8] sm:$0x30]
    %v1046 = vld [vmem:[#allocation2 + $0x10] sm:$0x30]
    %v1047 = vld [vmem:[#allocation2 + $0x18] sm:$0x30]
    %v1048 = vpack.c.bf16 %v1042, %v1042
    %v1049 = vld [vmem:[#allocation9] sm:$0xff]
    %v1050 = vld [vmem:[#allocation9 + $0x8] sm:$0xff]
    %v1051 = vld [vmem:[#allocation9 + $0x10] sm:$0xff]
    %v1052 = vld [vmem:[#allocation9 + $0x18] sm:$0xff]
    %v1053 = vld [vmem:[#allocation9 + $0x20] sm:$0xff]
    %v1054 = vld [vmem:[#allocation9 + $0x28] sm:$0xff]
    %v1055 = vld [vmem:[#allocation9 + $0x30] sm:$0xff]
    %v1056 = vld [vmem:[#allocation9 + $0x38] sm:$0xff]
    %v1057 = vld [vmem:[#allocation9 + $0x40] sm:$0xff]
    %v1058 = vld [vmem:[#allocation9 + $0x48] sm:$0xff]
    %v1059 = vld [vmem:[#allocation9 + $0x50] sm:$0xff]
    %v1060 = vld [vmem:[#allocation9 + $0x58] sm:$0xff]
    %v1061 = vld [vmem:[#allocation9 + $0x60] sm:$0xff]
    %v1062 = vld [vmem:[#allocation9 + $0x68] sm:$0xff]
    %v1063 = vld [vmem:[#allocation9 + $0x70] sm:$0xff]
    %v1064 = vld [vmem:[#allocation9 + $0x78] sm:$0xff]
    %v1065 = vld [vmem:[#allocation9 + $0x80] sm:$0xff]
    %v1066 = vld [vmem:[#allocation9 + $0x88] sm:$0xff]
    %v1067 = vld [vmem:[#allocation9 + $0x90] sm:$0xff]
    %v1068 = vld [vmem:[#allocation9 + $0x98] sm:$0xff]
    %v1069 = vld [vmem:[#allocation9 + $0xa0] sm:$0xff]
    %v1070 = vld [vmem:[#allocation9 + $0xa8] sm:$0xff]
    %v1071 = vld [vmem:[#allocation9 + $0xb0] sm:$0xff]
    %v1072 = vld [vmem:[#allocation9 + $0xb8] sm:$0xff]
    %v1073 = vld [vmem:[#allocation9 + $0xc0] sm:$0xff]
    %v1074 = vld [vmem:[#allocation9 + $0xc8] sm:$0xff]
    %v1075 = vld [vmem:[#allocation9 + $0xd0] sm:$0xff]
    %v1076 = vld [vmem:[#allocation9 + $0xd8] sm:$0xff]
    %v1077 = vld [vmem:[#allocation9 + $0xe0] sm:$0xff]
    %v1078 = vld [vmem:[#allocation9 + $0xe8] sm:$0xff]
    %v1079 = vld [vmem:[#allocation9 + $0xf0] sm:$0xff]
    %v1080 = vld [vmem:[#allocation9 + $0xf8] sm:$0xff]
    %v1113 = vunpack.c.l.b16 %v1049
    %v1114 = vunpack.c.h.b16 %v1049
    %v1115 = vunpack.c.l.b16 %v1050
    %v1116 = vunpack.c.h.b16 %v1050
    %v1117 = vunpack.c.l.b16 %v1051
    %v1118 = vunpack.c.h.b16 %v1051
    %v1119 = vunpack.c.l.b16 %v1052
    %v1120 = vunpack.c.h.b16 %v1052
    %v1121 = vunpack.c.l.b16 %v1053
    %v1122 = vunpack.c.h.b16 %v1053
    %v1123 = vunpack.c.l.b16 %v1054
    %v1124 = vunpack.c.h.b16 %v1054
    %v1125 = vunpack.c.l.b16 %v1055
    %v1126 = vunpack.c.h.b16 %v1055
    %v1127 = vunpack.c.l.b16 %v1056
    %v1128 = vunpack.c.h.b16 %v1056
    %v1129 = vunpack.c.l.b16 %v1057
    %v1130 = vunpack.c.h.b16 %v1057
    %v1131 = vunpack.c.l.b16 %v1058
    %v1132 = vunpack.c.h.b16 %v1058
    %v1133 = vunpack.c.l.b16 %v1059
    %v1134 = vunpack.c.h.b16 %v1059
    %v1135 = vunpack.c.l.b16 %v1060
    %v1136 = vunpack.c.h.b16 %v1060
    %v1137 = vunpack.c.l.b16 %v1061
    %v1138 = vunpack.c.h.b16 %v1061
    %v1139 = vunpack.c.l.b16 %v1062
    %v1140 = vunpack.c.h.b16 %v1062
    %v1141 = vunpack.c.l.b16 %v1063
    %v1142 = vunpack.c.h.b16 %v1063
    %v1143 = vunpack.c.l.b16 %v1064
    %v1144 = vunpack.c.h.b16 %v1064
    %v1145 = vunpack.c.l.b16 %v1065
    %v1146 = vunpack.c.h.b16 %v1065
    %v1147 = vunpack.c.l.b16 %v1066
    %v1148 = vunpack.c.h.b16 %v1066
    %v1149 = vunpack.c.l.b16 %v1067
    %v1150 = vunpack.c.h.b16 %v1067
    %v1151 = vunpack.c.l.b16 %v1068
    %v1152 = vunpack.c.h.b16 %v1068
    %v1153 = vunpack.c.l.b16 %v1069
    %v1154 = vunpack.c.h.b16 %v1069
    %v1155 = vunpack.c.l.b16 %v1070
    %v1156 = vunpack.c.h.b16 %v1070
    %v1157 = vunpack.c.l.b16 %v1071
    %v1158 = vunpack.c.h.b16 %v1071
    %v1159 = vunpack.c.l.b16 %v1072
    %v1160 = vunpack.c.h.b16 %v1072
    %v1161 = vunpack.c.l.b16 %v1073
    %v1162 = vunpack.c.h.b16 %v1073
    %v1163 = vunpack.c.l.b16 %v1074
    %v1164 = vunpack.c.h.b16 %v1074
    %v1165 = vunpack.c.l.b16 %v1075
    %v1166 = vunpack.c.h.b16 %v1075
    %v1167 = vunpack.c.l.b16 %v1076
    %v1168 = vunpack.c.h.b16 %v1076
    %v1169 = vunpack.c.l.b16 %v1077
    %v1170 = vunpack.c.h.b16 %v1077
    %v1171 = vunpack.c.l.b16 %v1078
    %v1172 = vunpack.c.h.b16 %v1078
    %v1173 = vunpack.c.l.b16 %v1079
    %v1174 = vunpack.c.h.b16 %v1079
    %v1175 = vunpack.c.l.b16 %v1080
    %v1176 = vunpack.c.h.b16 %v1080
    %v1177 = vpack.c.b16 %v1117, %v1113
    %v1178 = vpack.c.b16 %v1118, %v1114
    %v1179 = vpack.c.b16 %v1119, %v1115
    %v1180 = vpack.c.b16 %v1120, %v1116
    %v1181 = vpack.c.b16 %v1125, %v1121
    %v1182 = vpack.c.b16 %v1126, %v1122
    %v1183 = vpack.c.b16 %v1127, %v1123
    %v1184 = vpack.c.b16 %v1128, %v1124
    %v1185 = vpack.c.b16 %v1133, %v1129
    %v1186 = vpack.c.b16 %v1134, %v1130
    %v1187 = vpack.c.b16 %v1135, %v1131
    %v1188 = vpack.c.b16 %v1136, %v1132
    %v1189 = vpack.c.b16 %v1141, %v1137
    %v1190 = vpack.c.b16 %v1142, %v1138
    %v1191 = vpack.c.b16 %v1143, %v1139
    %v1192 = vpack.c.b16 %v1144, %v1140
    %v1193 = vpack.c.b16 %v1149, %v1145
    %v1194 = vpack.c.b16 %v1150, %v1146
    %v1195 = vpack.c.b16 %v1151, %v1147
    %v1196 = vpack.c.b16 %v1152, %v1148
    %v1197 = vpack.c.b16 %v1157, %v1153
    %v1198 = vpack.c.b16 %v1158, %v1154
    %v1199 = vpack.c.b16 %v1159, %v1155
    %v1200 = vpack.c.b16 %v1160, %v1156
    %v1201 = vpack.c.b16 %v1165, %v1161
    %v1202 = vpack.c.b16 %v1166, %v1162
    %v1203 = vpack.c.b16 %v1167, %v1163
    %v1204 = vpack.c.b16 %v1168, %v1164
    %v1205 = vpack.c.b16 %v1173, %v1169
    %v1206 = vpack.c.b16 %v1174, %v1170
    %v1207 = vpack.c.b16 %v1175, %v1171
    %v1208 = vpack.c.b16 %v1176, %v1172
    %1241 = vmatprep.subr.bf16.mxu0 %v1206
    %1242 = vmatpush1.bf16.msra.mxu0 %v1205
    %1243 = vmatprep.subr.bf16.mxu0 %v1202
    %1244 = vmatpush1.bf16.msra.mxu0 %v1201
    %1245 = vmatprep.subr.bf16.mxu0 %v1198
    %1246 = vmatpush1.bf16.msra.mxu0 %v1197
    %1247 = vmatprep.subr.bf16.mxu0 %v1194
    %1248 = vmatpush1.bf16.msra.mxu0 %v1193
    %1249 = vmatprep.subr.bf16.mxu0 %v1190
    %1250 = vmatpush1.bf16.msra.mxu0 %v1189
    %1251 = vmatprep.subr.bf16.mxu0 %v1186
    %1252 = vmatpush1.bf16.msra.mxu0 %v1185
    %1253 = vmatprep.subr.bf16.mxu0 %v1182
    %1254 = vmatpush1.bf16.msra.mxu0 %v1181
    %1255 = vmatprep.subr.bf16.mxu0 %v1178
    %1256 = vmatpush1.bf16.msra.mxu0 %v1177
    %1257 = vmatprep.subr.bf16.mxu0 0
    %1258 = vmatpush2.bf16.msra.mxu0 0
    %1259 = vmatprep.subr.bf16.mxu0 0
    %1260 = vmatpush2.bf16.msra.mxu0 0
    %1261 = vmatprep.subr.bf16.mxu0 0
    %1262 = vmatpush2.bf16.msra.mxu0 0
    %1263 = vmatprep.subr.bf16.mxu0 0
    %1264 = vmatpush2.bf16.msra.mxu0 0
    %1265 = vmatprep.subr.bf16.mxu0 0
    %1266 = vmatpush2.bf16.msra.mxu0 0
    %1267 = vmatprep.subr.bf16.mxu0 0
    %1268 = vmatpush2.bf16.msra.mxu0 0
    %1269 = vmatprep.subr.bf16.mxu0 0
    %1270 = vmatpush2.bf16.msra.mxu0 0
    %1271 = vmatprep.subr.bf16.mxu0 0
    %1272 = vmatpush2.bf16.msra.mxu0 0
    %1273 = vmatprep.mubr.bf16.mxu0 0
    %1274 = vmatmul.mubr.bf16.gmra.mxu0 %v1048
    %v1275 = vpop.f32.mrf.mxu0
    %v1276 = vadd.f32 0.0, %v1275
    %v1277 = vpop.f32.mrf.mxu0
    %v1278 = vadd.f32 0.0, %v1277
    %v1279 = vpop.f32.mrf.mxu0
    %v1280 = vpop.f32.mrf.mxu0
    %1281 = vdwg.mxu0
    %1282 = vmatprep.subr.bf16.mxu0 %v1208
    %1283 = vmatpush1.bf16.msra.mxu0 %v1207
    %1284 = vmatprep.subr.bf16.mxu0 %v1204
    %1285 = vmatpush1.bf16.msra.mxu0 %v1203
    %1286 = vmatprep.subr.bf16.mxu0 %v1200
    %1287 = vmatpush1.bf16.msra.mxu0 %v1199
    %1288 = vmatprep.subr.bf16.mxu0 %v1196
    %1289 = vmatpush1.bf16.msra.mxu0 %v1195
    %1290 = vmatprep.subr.bf16.mxu0 %v1192
    %1291 = vmatpush1.bf16.msra.mxu0 %v1191
    %1292 = vmatprep.subr.bf16.mxu0 %v1188
    %1293 = vmatpush1.bf16.msra.mxu0 %v1187
    %1294 = vmatprep.subr.bf16.mxu0 %v1184
    %1295 = vmatpush1.bf16.msra.mxu0 %v1183
    %1296 = vmatprep.subr.bf16.mxu0 %v1180
    %1297 = vmatpush1.bf16.msra.mxu0 %v1179
    %1298 = vmatprep.subr.bf16.mxu0 0
    %1299 = vmatpush2.bf16.msra.mxu0 0
    %1300 = vmatprep.subr.bf16.mxu0 0
    %1301 = vmatpush2.bf16.msra.mxu0 0
    %1302 = vmatprep.subr.bf16.mxu0 0
    %1303 = vmatpush2.bf16.msra.mxu0 0
    %1304 = vmatprep.subr.bf16.mxu0 0
    %1305 = vmatpush2.bf16.msra.mxu0 0
    %1306 = vmatprep.subr.bf16.mxu0 0
    %1307 = vmatpush2.bf16.msra.mxu0 0
    %1308 = vmatprep.subr.bf16.mxu0 0
    %1309 = vmatpush2.bf16.msra.mxu0 0
    %1310 = vmatprep.subr.bf16.mxu0 0
    %1311 = vmatpush2.bf16.msra.mxu0 0
    %1312 = vmatprep.subr.bf16.mxu0 0
    %1313 = vmatpush2.bf16.msra.mxu0 0
    %1314 = vmatprep.mubr.bf16.mxu0 0
    %1315 = vmatmul.mubr.bf16.gmra.mxu0 %v1048
    %v1316 = vpop.f32.mrf.mxu0
    %v1317 = vadd.f32 0.0, %v1316
    %v1318 = vpop.f32.mrf.mxu0
    %v1319 = vadd.f32 0.0, %v1318
    %v1320 = vpop.f32.mrf.mxu0
    %v1321 = vpop.f32.mrf.mxu0
    %1322 = vdwg.mxu0
    %v1327 = vrot.slane %v1276, 4
    %v1328 = vrot.slane %v1278, 4
    %v1329 = vrot.slane %v1317, 4
    %v1330 = vrot.slane %v1319, 4
    %v1335 = vadd.f32 %v1044, %v1327
    %v1336 = vadd.f32 %v1045, %v1328
    %v1337 = vadd.f32 %v1046, %v1329
    %v1338 = vadd.f32 %v1047, %v1330
    %v1339 = vxor.u32 %v1335, 2147483648
    %v1340 = vmul.f32 %v1339, 1.442695
    %v1341 = vpow.pop %v1340
    %v1342 = vadd.f32 %v1341, 1.0
    %v1343 = vrcp.pop %v1342
    %v1344 = vmul.f32 1.0, %v1343
    %v1345 = vxor.u32 %v1336, 2147483648
    %v1346 = vmul.f32 %v1345, 1.442695
    %v1347 = vpow.pop %v1346
    %v1348 = vadd.f32 %v1347, 1.0
    %v1349 = vrcp.pop %v1348
    %v1350 = vmul.f32 1.0, %v1349
    %v1351 = vtanh.pop %v1337
    %v1352 = vxor.u32 %v1338, 2147483648
    %v1353 = vmul.f32 %v1352, 1.442695
    %v1354 = vpow.pop %v1353
    %v1355 = vadd.f32 %v1354, 1.0
    %v1356 = vrcp.pop %v1355
    %v1357 = vmul.f32 1.0, %v1356
    %v1359 = vrot.slane %v1043, 4
    %v1361 = vmul.f32 %v1350, %v1359
    %v1362 = vmul.f32 %v1344, %v1351
    %v1363 = vadd.f32 %v1361, %v1362
    %v1364 = vtanh.pop %v1363
    %v1365 = vmul.f32 %v1357, %v1364
    %1366 = vst [vmem:[#allocation4 - $0x4] sm:$0x30] %v1365
    %1367 = vst [vmem:[#allocation5 - $0x4] sm:$0x30] %v1363
    %1368 = vst [vmem:[#allocation3] sm:$0x30] %v1365
    %v1369 = vld [vmem:[#allocation4] sm:$0x3]
    %v1370 = vld [vmem:[#allocation5] sm:$0x3]
    %v1371 = vld [vmem:[#allocation2] sm:$0xc0]
    %v1372 = vld [vmem:[#allocation2 + $0x8] sm:$0xc0]
    %v1373 = vld [vmem:[#allocation2 + $0x10] sm:$0xc0]
    %v1374 = vld [vmem:[#allocation2 + $0x18] sm:$0xc0]
    %v1375 = vpack.c.bf16 %v1369, %v1369
    %v1376 = vld [vmem:[#allocation9] sm:$0xff]
    %v1377 = vld [vmem:[#allocation9 + $0x8] sm:$0xff]
    %v1378 = vld [vmem:[#allocation9 + $0x10] sm:$0xff]
    %v1379 = vld [vmem:[#allocation9 + $0x18] sm:$0xff]
    %v1380 = vld [vmem:[#allocation9 + $0x20] sm:$0xff]
    %v1381 = vld [vmem:[#allocation9 + $0x28] sm:$0xff]
    %v1382 = vld [vmem:[#allocation9 + $0x30] sm:$0xff]
    %v1383 = vld [vmem:[#allocation9 + $0x38] sm:$0xff]
    %v1384 = vld [vmem:[#allocation9 + $0x40] sm:$0xff]
    %v1385 = vld [vmem:[#allocation9 + $0x48] sm:$0xff]
    %v1386 = vld [vmem:[#allocation9 + $0x50] sm:$0xff]
    %v1387 = vld [vmem:[#allocation9 + $0x58] sm:$0xff]
    %v1388 = vld [vmem:[#allocation9 + $0x60] sm:$0xff]
    %v1389 = vld [vmem:[#allocation9 + $0x68] sm:$0xff]
    %v1390 = vld [vmem:[#allocation9 + $0x70] sm:$0xff]
    %v1391 = vld [vmem:[#allocation9 + $0x78] sm:$0xff]
    %v1392 = vld [vmem:[#allocation9 + $0x80] sm:$0xff]
    %v1393 = vld [vmem:[#allocation9 + $0x88] sm:$0xff]
    %v1394 = vld [vmem:[#allocation9 + $0x90] sm:$0xff]
    %v1395 = vld [vmem:[#allocation9 + $0x98] sm:$0xff]
    %v1396 = vld [vmem:[#allocation9 + $0xa0] sm:$0xff]
    %v1397 = vld [vmem:[#allocation9 + $0xa8] sm:$0xff]
    %v1398 = vld [vmem:[#allocation9 + $0xb0] sm:$0xff]
    %v1399 = vld [vmem:[#allocation9 + $0xb8] sm:$0xff]
    %v1400 = vld [vmem:[#allocation9 + $0xc0] sm:$0xff]
    %v1401 = vld [vmem:[#allocation9 + $0xc8] sm:$0xff]
    %v1402 = vld [vmem:[#allocation9 + $0xd0] sm:$0xff]
    %v1403 = vld [vmem:[#allocation9 + $0xd8] sm:$0xff]
    %v1404 = vld [vmem:[#allocation9 + $0xe0] sm:$0xff]
    %v1405 = vld [vmem:[#allocation9 + $0xe8] sm:$0xff]
    %v1406 = vld [vmem:[#allocation9 + $0xf0] sm:$0xff]
    %v1407 = vld [vmem:[#allocation9 + $0xf8] sm:$0xff]
    %v1440 = vunpack.c.l.b16 %v1376
    %v1441 = vunpack.c.h.b16 %v1376
    %v1442 = vunpack.c.l.b16 %v1377
    %v1443 = vunpack.c.h.b16 %v1377
    %v1444 = vunpack.c.l.b16 %v1378
    %v1445 = vunpack.c.h.b16 %v1378
    %v1446 = vunpack.c.l.b16 %v1379
    %v1447 = vunpack.c.h.b16 %v1379
    %v1448 = vunpack.c.l.b16 %v1380
    %v1449 = vunpack.c.h.b16 %v1380
    %v1450 = vunpack.c.l.b16 %v1381
    %v1451 = vunpack.c.h.b16 %v1381
    %v1452 = vunpack.c.l.b16 %v1382
    %v1453 = vunpack.c.h.b16 %v1382
    %v1454 = vunpack.c.l.b16 %v1383
    %v1455 = vunpack.c.h.b16 %v1383
    %v1456 = vunpack.c.l.b16 %v1384
    %v1457 = vunpack.c.h.b16 %v1384
    %v1458 = vunpack.c.l.b16 %v1385
    %v1459 = vunpack.c.h.b16 %v1385
    %v1460 = vunpack.c.l.b16 %v1386
    %v1461 = vunpack.c.h.b16 %v1386
    %v1462 = vunpack.c.l.b16 %v1387
    %v1463 = vunpack.c.h.b16 %v1387
    %v1464 = vunpack.c.l.b16 %v1388
    %v1465 = vunpack.c.h.b16 %v1388
    %v1466 = vunpack.c.l.b16 %v1389
    %v1467 = vunpack.c.h.b16 %v1389
    %v1468 = vunpack.c.l.b16 %v1390
    %v1469 = vunpack.c.h.b16 %v1390
    %v1470 = vunpack.c.l.b16 %v1391
    %v1471 = vunpack.c.h.b16 %v1391
    %v1472 = vunpack.c.l.b16 %v1392
    %v1473 = vunpack.c.h.b16 %v1392
    %v1474 = vunpack.c.l.b16 %v1393
    %v1475 = vunpack.c.h.b16 %v1393
    %v1476 = vunpack.c.l.b16 %v1394
    %v1477 = vunpack.c.h.b16 %v1394
    %v1478 = vunpack.c.l.b16 %v1395
    %v1479 = vunpack.c.h.b16 %v1395
    %v1480 = vunpack.c.l.b16 %v1396
    %v1481 = vunpack.c.h.b16 %v1396
    %v1482 = vunpack.c.l.b16 %v1397
    %v1483 = vunpack.c.h.b16 %v1397
    %v1484 = vunpack.c.l.b16 %v1398
    %v1485 = vunpack.c.h.b16 %v1398
    %v1486 = vunpack.c.l.b16 %v1399
    %v1487 = vunpack.c.h.b16 %v1399
    %v1488 = vunpack.c.l.b16 %v1400
    %v1489 = vunpack.c.h.b16 %v1400
    %v1490 = vunpack.c.l.b16 %v1401
    %v1491 = vunpack.c.h.b16 %v1401
    %v1492 = vunpack.c.l.b16 %v1402
    %v1493 = vunpack.c.h.b16 %v1402
    %v1494 = vunpack.c.l.b16 %v1403
    %v1495 = vunpack.c.h.b16 %v1403
    %v1496 = vunpack.c.l.b16 %v1404
    %v1497 = vunpack.c.h.b16 %v1404
    %v1498 = vunpack.c.l.b16 %v1405
    %v1499 = vunpack.c.h.b16 %v1405
    %v1500 = vunpack.c.l.b16 %v1406
    %v1501 = vunpack.c.h.b16 %v1406
    %v1502 = vunpack.c.l.b16 %v1407
    %v1503 = vunpack.c.h.b16 %v1407
    %v1504 = vpack.c.b16 %v1444, %v1440
    %v1505 = vpack.c.b16 %v1445, %v1441
    %v1506 = vpack.c.b16 %v1446, %v1442
    %v1507 = vpack.c.b16 %v1447, %v1443
    %v1508 = vpack.c.b16 %v1452, %v1448
    %v1509 = vpack.c.b16 %v1453, %v1449
    %v1510 = vpack.c.b16 %v1454, %v1450
    %v1511 = vpack.c.b16 %v1455, %v1451
    %v1512 = vpack.c.b16 %v1460, %v1456
    %v1513 = vpack.c.b16 %v1461, %v1457
    %v1514 = vpack.c.b16 %v1462, %v1458
    %v1515 = vpack.c.b16 %v1463, %v1459
    %v1516 = vpack.c.b16 %v1468, %v1464
    %v1517 = vpack.c.b16 %v1469, %v1465
    %v1518 = vpack.c.b16 %v1470, %v1466
    %v1519 = vpack.c.b16 %v1471, %v1467
    %v1520 = vpack.c.b16 %v1476, %v1472
    %v1521 = vpack.c.b16 %v1477, %v1473
    %v1522 = vpack.c.b16 %v1478, %v1474
    %v1523 = vpack.c.b16 %v1479, %v1475
    %v1524 = vpack.c.b16 %v1484, %v1480
    %v1525 = vpack.c.b16 %v1485, %v1481
    %v1526 = vpack.c.b16 %v1486, %v1482
    %v1527 = vpack.c.b16 %v1487, %v1483
    %v1528 = vpack.c.b16 %v1492, %v1488
    %v1529 = vpack.c.b16 %v1493, %v1489
    %v1530 = vpack.c.b16 %v1494, %v1490
    %v1531 = vpack.c.b16 %v1495, %v1491
    %v1532 = vpack.c.b16 %v1500, %v1496
    %v1533 = vpack.c.b16 %v1501, %v1497
    %v1534 = vpack.c.b16 %v1502, %v1498
    %v1535 = vpack.c.b16 %v1503, %v1499
    %1568 = vmatprep.subr.bf16.mxu0 %v1533
    %1569 = vmatpush1.bf16.msra.mxu0 %v1532
    %1570 = vmatprep.subr.bf16.mxu0 %v1529
    %1571 = vmatpush1.bf16.msra.mxu0 %v1528
    %1572 = vmatprep.subr.bf16.mxu0 %v1525
    %1573 = vmatpush1.bf16.msra.mxu0 %v1524
    %1574 = vmatprep.subr.bf16.mxu0 %v1521
    %1575 = vmatpush1.bf16.msra.mxu0 %v1520
    %1576 = vmatprep.subr.bf16.mxu0 %v1517
    %1577 = vmatpush1.bf16.msra.mxu0 %v1516
    %1578 = vmatprep.subr.bf16.mxu0 %v1513
    %1579 = vmatpush1.bf16.msra.mxu0 %v1512
    %1580 = vmatprep.subr.bf16.mxu0 %v1509
    %1581 = vmatpush1.bf16.msra.mxu0 %v1508
    %1582 = vmatprep.subr.bf16.mxu0 %v1505
    %1583 = vmatpush1.bf16.msra.mxu0 %v1504
    %1584 = vmatprep.subr.bf16.mxu0 0
    %1585 = vmatpush2.bf16.msra.mxu0 0
    %1586 = vmatprep.subr.bf16.mxu0 0
    %1587 = vmatpush2.bf16.msra.mxu0 0
    %1588 = vmatprep.subr.bf16.mxu0 0
    %1589 = vmatpush2.bf16.msra.mxu0 0
    %1590 = vmatprep.subr.bf16.mxu0 0
    %1591 = vmatpush2.bf16.msra.mxu0 0
    %1592 = vmatprep.subr.bf16.mxu0 0
    %1593 = vmatpush2.bf16.msra.mxu0 0
    %1594 = vmatprep.subr.bf16.mxu0 0
    %1595 = vmatpush2.bf16.msra.mxu0 0
    %1596 = vmatprep.subr.bf16.mxu0 0
    %1597 = vmatpush2.bf16.msra.mxu0 0
    %1598 = vmatprep.subr.bf16.mxu0 0
    %1599 = vmatpush2.bf16.msra.mxu0 0
    %1600 = vmatprep.mubr.bf16.mxu0 0
    %1601 = vmatmul.mubr.bf16.gmra.mxu0 %v1375
    %v1602 = vpop.f32.mrf.mxu0
    %v1603 = vadd.f32 0.0, %v1602
    %v1604 = vpop.f32.mrf.mxu0
    %v1605 = vadd.f32 0.0, %v1604
    %v1606 = vpop.f32.mrf.mxu0
    %v1607 = vpop.f32.mrf.mxu0
    %1608 = vdwg.mxu0
    %1609 = vmatprep.subr.bf16.mxu0 %v1535
    %1610 = vmatpush1.bf16.msra.mxu0 %v1534
    %1611 = vmatprep.subr.bf16.mxu0 %v1531
    %1612 = vmatpush1.bf16.msra.mxu0 %v1530
    %1613 = vmatprep.subr.bf16.mxu0 %v1527
    %1614 = vmatpush1.bf16.msra.mxu0 %v1526
    %1615 = vmatprep.subr.bf16.mxu0 %v1523
    %1616 = vmatpush1.bf16.msra.mxu0 %v1522
    %1617 = vmatprep.subr.bf16.mxu0 %v1519
    %1618 = vmatpush1.bf16.msra.mxu0 %v1518
    %1619 = vmatprep.subr.bf16.mxu0 %v1515
    %1620 = vmatpush1.bf16.msra.mxu0 %v1514
    %1621 = vmatprep.subr.bf16.mxu0 %v1511
    %1622 = vmatpush1.bf16.msra.mxu0 %v1510
    %1623 = vmatprep.subr.bf16.mxu0 %v1507
    %1624 = vmatpush1.bf16.msra.mxu0 %v1506
    %1625 = vmatprep.subr.bf16.mxu0 0
    %1626 = vmatpush2.bf16.msra.mxu0 0
    %1627 = vmatprep.subr.bf16.mxu0 0
    %1628 = vmatpush2.bf16.msra.mxu0 0
    %1629 = vmatprep.subr.bf16.mxu0 0
    %1630 = vmatpush2.bf16.msra.mxu0 0
    %1631 = vmatprep.subr.bf16.mxu0 0
    %1632 = vmatpush2.bf16.msra.mxu0 0
    %1633 = vmatprep.subr.bf16.mxu0 0
    %1634 = vmatpush2.bf16.msra.mxu0 0
    %1635 = vmatprep.subr.bf16.mxu0 0
    %1636 = vmatpush2.bf16.msra.mxu0 0
    %1637 = vmatprep.subr.bf16.mxu0 0
    %1638 = vmatpush2.bf16.msra.mxu0 0
    %1639 = vmatprep.subr.bf16.mxu0 0
    %1640 = vmatpush2.bf16.msra.mxu0 0
    %1641 = vmatprep.mubr.bf16.mxu0 0
    %1642 = vmatmul.mubr.bf16.gmra.mxu0 %v1375
    %v1643 = vpop.f32.mrf.mxu0
    %v1644 = vadd.f32 0.0, %v1643
    %v1645 = vpop.f32.mrf.mxu0
    %v1646 = vadd.f32 0.0, %v1645
    %v1647 = vpop.f32.mrf.mxu0
    %v1648 = vpop.f32.mrf.mxu0
    %1649 = vdwg.mxu0
    %v1654 = vrot.slane %v1603, 2
    %v1655 = vrot.slane %v1605, 2
    %v1656 = vrot.slane %v1644, 2
    %v1657 = vrot.slane %v1646, 2
    %v1662 = vadd.f32 %v1371, %v1654
    %v1663 = vadd.f32 %v1372, %v1655
    %v1664 = vadd.f32 %v1373, %v1656
    %v1665 = vadd.f32 %v1374, %v1657
    %v1666 = vxor.u32 %v1662, 2147483648
    %v1667 = vmul.f32 %v1666, 1.442695
    %v1668 = vpow.pop %v1667
    %v1669 = vadd.f32 %v1668, 1.0
    %v1670 = vrcp.pop %v1669
    %v1671 = vmul.f32 1.0, %v1670
    %v1672 = vxor.u32 %v1663, 2147483648
    %v1673 = vmul.f32 %v1672, 1.442695
    %v1674 = vpow.pop %v1673
    %v1675 = vadd.f32 %v1674, 1.0
    %v1676 = vrcp.pop %v1675
    %v1677 = vmul.f32 1.0, %v1676
    %v1678 = vtanh.pop %v1664
    %v1679 = vxor.u32 %v1665, 2147483648
    %v1680 = vmul.f32 %v1679, 1.442695
    %v1681 = vpow.pop %v1680
    %v1682 = vadd.f32 %v1681, 1.0
    %v1683 = vrcp.pop %v1682
    %v1684 = vmul.f32 1.0, %v1683
    %v1686 = vrot.slane %v1370, 2
    %v1688 = vmul.f32 %v1677, %v1686
    %v1689 = vmul.f32 %v1671, %v1678
    %v1690 = vadd.f32 %v1688, %v1689
    %v1691 = vtanh.pop %v1690
    %v1692 = vmul.f32 %v1684, %v1691
    %1693 = vst [vmem:[#allocation4 - $0x6] sm:$0xc0] %v1692
    %1694 = vst [vmem:[#allocation5 - $0x6] sm:$0xc0] %v1690
    %1695 = vst [vmem:[#allocation3] sm:$0xc0] %v1692
    %v1696 = vld [vmem:[#allocation4] sm:$0x3]
    %v1697 = vld [vmem:[#allocation5] sm:$0x3]
    %v1698 = vld [vmem:[#allocation2 + $0x20] sm:$0x3]
    %v1699 = vld [vmem:[#allocation2 + $0x28] sm:$0x3]
    %v1700 = vld [vmem:[#allocation2 + $0x30] sm:$0x3]
    %v1701 = vld [vmem:[#allocation2 + $0x38] sm:$0x3]
    %v1702 = vpack.c.bf16 %v1696, %v1696
    %v1703 = vld [vmem:[#allocation9] sm:$0xff]
    %v1704 = vld [vmem:[#allocation9 + $0x8] sm:$0xff]
    %v1705 = vld [vmem:[#allocation9 + $0x10] sm:$0xff]
    %v1706 = vld [vmem:[#allocation9 + $0x18] sm:$0xff]
    %v1707 = vld [vmem:[#allocation9 + $0x20] sm:$0xff]
    %v1708 = vld [vmem:[#allocation9 + $0x28] sm:$0xff]
    %v1709 = vld [vmem:[#allocation9 + $0x30] sm:$0xff]
    %v1710 = vld [vmem:[#allocation9 + $0x38] sm:$0xff]
    %v1711 = vld [vmem:[#allocation9 + $0x40] sm:$0xff]
    %v1712 = vld [vmem:[#allocation9 + $0x48] sm:$0xff]
    %v1713 = vld [vmem:[#allocation9 + $0x50] sm:$0xff]
    %v1714 = vld [vmem:[#allocation9 + $0x58] sm:$0xff]
    %v1715 = vld [vmem:[#allocation9 + $0x60] sm:$0xff]
    %v1716 = vld [vmem:[#allocation9 + $0x68] sm:$0xff]
    %v1717 = vld [vmem:[#allocation9 + $0x70] sm:$0xff]
    %v1718 = vld [vmem:[#allocation9 + $0x78] sm:$0xff]
    %v1719 = vld [vmem:[#allocation9 + $0x80] sm:$0xff]
    %v1720 = vld [vmem:[#allocation9 + $0x88] sm:$0xff]
    %v1721 = vld [vmem:[#allocation9 + $0x90] sm:$0xff]
    %v1722 = vld [vmem:[#allocation9 + $0x98] sm:$0xff]
    %v1723 = vld [vmem:[#allocation9 + $0xa0] sm:$0xff]
    %v1724 = vld [vmem:[#allocation9 + $0xa8] sm:$0xff]
    %v1725 = vld [vmem:[#allocation9 + $0xb0] sm:$0xff]
    %v1726 = vld [vmem:[#allocation9 + $0xb8] sm:$0xff]
    %v1727 = vld [vmem:[#allocation9 + $0xc0] sm:$0xff]
    %v1728 = vld [vmem:[#allocation9 + $0xc8] sm:$0xff]
    %v1729 = vld [vmem:[#allocation9 + $0xd0] sm:$0xff]
    %v1730 = vld [vmem:[#allocation9 + $0xd8] sm:$0xff]
    %v1731 = vld [vmem:[#allocation9 + $0xe0] sm:$0xff]
    %v1732 = vld [vmem:[#allocation9 + $0xe8] sm:$0xff]
    %v1733 = vld [vmem:[#allocation9 + $0xf0] sm:$0xff]
    %v1734 = vld [vmem:[#allocation9 + $0xf8] sm:$0xff]
    %v1767 = vunpack.c.l.b16 %v1703
    %v1768 = vunpack.c.h.b16 %v1703
    %v1769 = vunpack.c.l.b16 %v1704
    %v1770 = vunpack.c.h.b16 %v1704
    %v1771 = vunpack.c.l.b16 %v1705
    %v1772 = vunpack.c.h.b16 %v1705
    %v1773 = vunpack.c.l.b16 %v1706
    %v1774 = vunpack.c.h.b16 %v1706
    %v1775 = vunpack.c.l.b16 %v1707
    %v1776 = vunpack.c.h.b16 %v1707
    %v1777 = vunpack.c.l.b16 %v1708
    %v1778 = vunpack.c.h.b16 %v1708
    %v1779 = vunpack.c.l.b16 %v1709
    %v1780 = vunpack.c.h.b16 %v1709
    %v1781 = vunpack.c.l.b16 %v1710
    %v1782 = vunpack.c.h.b16 %v1710
    %v1783 = vunpack.c.l.b16 %v1711
    %v1784 = vunpack.c.h.b16 %v1711
    %v1785 = vunpack.c.l.b16 %v1712
    %v1786 = vunpack.c.h.b16 %v1712
    %v1787 = vunpack.c.l.b16 %v1713
    %v1788 = vunpack.c.h.b16 %v1713
    %v1789 = vunpack.c.l.b16 %v1714
    %v1790 = vunpack.c.h.b16 %v1714
    %v1791 = vunpack.c.l.b16 %v1715
    %v1792 = vunpack.c.h.b16 %v1715
    %v1793 = vunpack.c.l.b16 %v1716
    %v1794 = vunpack.c.h.b16 %v1716
    %v1795 = vunpack.c.l.b16 %v1717
    %v1796 = vunpack.c.h.b16 %v1717
    %v1797 = vunpack.c.l.b16 %v1718
    %v1798 = vunpack.c.h.b16 %v1718
    %v1799 = vunpack.c.l.b16 %v1719
    %v1800 = vunpack.c.h.b16 %v1719
    %v1801 = vunpack.c.l.b16 %v1720
    %v1802 = vunpack.c.h.b16 %v1720
    %v1803 = vunpack.c.l.b16 %v1721
    %v1804 = vunpack.c.h.b16 %v1721
    %v1805 = vunpack.c.l.b16 %v1722
    %v1806 = vunpack.c.h.b16 %v1722
    %v1807 = vunpack.c.l.b16 %v1723
    %v1808 = vunpack.c.h.b16 %v1723
    %v1809 = vunpack.c.l.b16 %v1724
    %v1810 = vunpack.c.h.b16 %v1724
    %v1811 = vunpack.c.l.b16 %v1725
    %v1812 = vunpack.c.h.b16 %v1725
    %v1813 = vunpack.c.l.b16 %v1726
    %v1814 = vunpack.c.h.b16 %v1726
    %v1815 = vunpack.c.l.b16 %v1727
    %v1816 = vunpack.c.h.b16 %v1727
    %v1817 = vunpack.c.l.b16 %v1728
    %v1818 = vunpack.c.h.b16 %v1728
    %v1819 = vunpack.c.l.b16 %v1729
    %v1820 = vunpack.c.h.b16 %v1729
    %v1821 = vunpack.c.l.b16 %v1730
    %v1822 = vunpack.c.h.b16 %v1730
    %v1823 = vunpack.c.l.b16 %v1731
    %v1824 = vunpack.c.h.b16 %v1731
    %v1825 = vunpack.c.l.b16 %v1732
    %v1826 = vunpack.c.h.b16 %v1732
    %v1827 = vunpack.c.l.b16 %v1733
    %v1828 = vunpack.c.h.b16 %v1733
    %v1829 = vunpack.c.l.b16 %v1734
    %v1830 = vunpack.c.h.b16 %v1734
    %v1831 = vpack.c.b16 %v1771, %v1767
    %v1832 = vpack.c.b16 %v1772, %v1768
    %v1833 = vpack.c.b16 %v1773, %v1769
    %v1834 = vpack.c.b16 %v1774, %v1770
    %v1835 = vpack.c.b16 %v1779, %v1775
    %v1836 = vpack.c.b16 %v1780, %v1776
    %v1837 = vpack.c.b16 %v1781, %v1777
    %v1838 = vpack.c.b16 %v1782, %v1778
    %v1839 = vpack.c.b16 %v1787, %v1783
    %v1840 = vpack.c.b16 %v1788, %v1784
    %v1841 = vpack.c.b16 %v1789, %v1785
    %v1842 = vpack.c.b16 %v1790, %v1786
    %v1843 = vpack.c.b16 %v1795, %v1791
    %v1844 = vpack.c.b16 %v1796, %v1792
    %v1845 = vpack.c.b16 %v1797, %v1793
    %v1846 = vpack.c.b16 %v1798, %v1794
    %v1847 = vpack.c.b16 %v1803, %v1799
    %v1848 = vpack.c.b16 %v1804, %v1800
    %v1849 = vpack.c.b16 %v1805, %v1801
    %v1850 = vpack.c.b16 %v1806, %v1802
    %v1851 = vpack.c.b16 %v1811, %v1807
    %v1852 = vpack.c.b16 %v1812, %v1808
    %v1853 = vpack.c.b16 %v1813, %v1809
    %v1854 = vpack.c.b16 %v1814, %v1810
    %v1855 = vpack.c.b16 %v1819, %v1815
    %v1856 = vpack.c.b16 %v1820, %v1816
    %v1857 = vpack.c.b16 %v1821, %v1817
    %v1858 = vpack.c.b16 %v1822, %v1818
    %v1859 = vpack.c.b16 %v1827, %v1823
    %v1860 = vpack.c.b16 %v1828, %v1824
    %v1861 = vpack.c.b16 %v1829, %v1825
    %v1862 = vpack.c.b16 %v1830, %v1826
    %1895 = vmatprep.subr.bf16.mxu0 %v1860
    %1896 = vmatpush1.bf16.msra.mxu0 %v1859
    %1897 = vmatprep.subr.bf16.mxu0 %v1856
    %1898 = vmatpush1.bf16.msra.mxu0 %v1855
    %1899 = vmatprep.subr.bf16.mxu0 %v1852
    %1900 = vmatpush1.bf16.msra.mxu0 %v1851
    %1901 = vmatprep.subr.bf16.mxu0 %v1848
    %1902 = vmatpush1.bf16.msra.mxu0 %v1847
    %1903 = vmatprep.subr.bf16.mxu0 %v1844
    %1904 = vmatpush1.bf16.msra.mxu0 %v1843
    %1905 = vmatprep.subr.bf16.mxu0 %v1840
    %1906 = vmatpush1.bf16.msra.mxu0 %v1839
    %1907 = vmatprep.subr.bf16.mxu0 %v1836
    %1908 = vmatpush1.bf16.msra.mxu0 %v1835
    %1909 = vmatprep.subr.bf16.mxu0 %v1832
    %1910 = vmatpush1.bf16.msra.mxu0 %v1831
    %1911 = vmatprep.subr.bf16.mxu0 0
    %1912 = vmatpush2.bf16.msra.mxu0 0
    %1913 = vmatprep.subr.bf16.mxu0 0
    %1914 = vmatpush2.bf16.msra.mxu0 0
    %1915 = vmatprep.subr.bf16.mxu0 0
    %1916 = vmatpush2.bf16.msra.mxu0 0
    %1917 = vmatprep.subr.bf16.mxu0 0
    %1918 = vmatpush2.bf16.msra.mxu0 0
    %1919 = vmatprep.subr.bf16.mxu0 0
    %1920 = vmatpush2.bf16.msra.mxu0 0
    %1921 = vmatprep.subr.bf16.mxu0 0
    %1922 = vmatpush2.bf16.msra.mxu0 0
    %1923 = vmatprep.subr.bf16.mxu0 0
    %1924 = vmatpush2.bf16.msra.mxu0 0
    %1925 = vmatprep.subr.bf16.mxu0 0
    %1926 = vmatpush2.bf16.msra.mxu0 0
    %1927 = vmatprep.mubr.bf16.mxu0 0
    %1928 = vmatmul.mubr.bf16.gmra.mxu0 %v1702
    %v1929 = vpop.f32.mrf.mxu0
    %v1930 = vadd.f32 0.0, %v1929
    %v1931 = vpop.f32.mrf.mxu0
    %v1932 = vadd.f32 0.0, %v1931
    %v1933 = vpop.f32.mrf.mxu0
    %v1934 = vpop.f32.mrf.mxu0
    %1935 = vdwg.mxu0
    %1936 = vmatprep.subr.bf16.mxu0 %v1862
    %1937 = vmatpush1.bf16.msra.mxu0 %v1861
    %1938 = vmatprep.subr.bf16.mxu0 %v1858
    %1939 = vmatpush1.bf16.msra.mxu0 %v1857
    %1940 = vmatprep.subr.bf16.mxu0 %v1854
    %1941 = vmatpush1.bf16.msra.mxu0 %v1853
    %1942 = vmatprep.subr.bf16.mxu0 %v1850
    %1943 = vmatpush1.bf16.msra.mxu0 %v1849
    %1944 = vmatprep.subr.bf16.mxu0 %v1846
    %1945 = vmatpush1.bf16.msra.mxu0 %v1845
    %1946 = vmatprep.subr.bf16.mxu0 %v1842
    %1947 = vmatpush1.bf16.msra.mxu0 %v1841
    %1948 = vmatprep.subr.bf16.mxu0 %v1838
    %1949 = vmatpush1.bf16.msra.mxu0 %v1837
    %1950 = vmatprep.subr.bf16.mxu0 %v1834
    %1951 = vmatpush1.bf16.msra.mxu0 %v1833
    %1952 = vmatprep.subr.bf16.mxu0 0
    %1953 = vmatpush2.bf16.msra.mxu0 0
    %1954 = vmatprep.subr.bf16.mxu0 0
    %1955 = vmatpush2.bf16.msra.mxu0 0
    %1956 = vmatprep.subr.bf16.mxu0 0
    %1957 = vmatpush2.bf16.msra.mxu0 0
    %1958 = vmatprep.subr.bf16.mxu0 0
    %1959 = vmatpush2.bf16.msra.mxu0 0
    %1960 = vmatprep.subr.bf16.mxu0 0
    %1961 = vmatpush2.bf16.msra.mxu0 0
    %1962 = vmatprep.subr.bf16.mxu0 0
    %1963 = vmatpush2.bf16.msra.mxu0 0
    %1964 = vmatprep.subr.bf16.mxu0 0
    %1965 = vmatpush2.bf16.msra.mxu0 0
    %1966 = vmatprep.subr.bf16.mxu0 0
    %1967 = vmatpush2.bf16.msra.mxu0 0
    %1968 = vmatprep.mubr.bf16.mxu0 0
    %1969 = vmatmul.mubr.bf16.gmra.mxu0 %v1702
    %v1970 = vpop.f32.mrf.mxu0
    %v1971 = vadd.f32 0.0, %v1970
    %v1972 = vpop.f32.mrf.mxu0
    %v1973 = vadd.f32 0.0, %v1972
    %v1974 = vpop.f32.mrf.mxu0
    %v1975 = vpop.f32.mrf.mxu0
    %1976 = vdwg.mxu0
    %v1977 = vadd.f32 %v1698, %v1930
    %v1978 = vadd.f32 %v1699, %v1932
    %v1979 = vadd.f32 %v1700, %v1971
    %v1980 = vadd.f32 %v1701, %v1973
    %v1981 = vxor.u32 %v1977, 2147483648
    %v1982 = vmul.f32 %v1981, 1.442695
    %v1983 = vpow.pop %v1982
    %v1984 = vadd.f32 %v1983, 1.0
    %v1985 = vrcp.pop %v1984
    %v1986 = vmul.f32 1.0, %v1985
    %v1987 = vxor.u32 %v1978, 2147483648
    %v1988 = vmul.f32 %v1987, 1.442695
    %v1989 = vpow.pop %v1988
    %v1990 = vadd.f32 %v1989, 1.0
    %v1991 = vrcp.pop %v1990
    %v1992 = vmul.f32 1.0, %v1991
    %v1993 = vtanh.pop %v1979
    %v1994 = vxor.u32 %v1980, 2147483648
    %v1995 = vmul.f32 %v1994, 1.442695
    %v1996 = vpow.pop %v1995
    %v1997 = vadd.f32 %v1996, 1.0
    %v1998 = vrcp.pop %v1997
    %v1999 = vmul.f32 1.0, %v1998
    %v2000 = vmul.f32 %v1992, %v1697
    %v2001 = vmul.f32 %v1986, %v1993
    %v2002 = vadd.f32 %v2000, %v2001
    %v2003 = vtanh.pop %v2002
    %v2004 = vmul.f32 %v1999, %v2003
    %2005 = vst [vmem:[#allocation4] sm:$0x3] %v2004
    %2006 = vst [vmem:[#allocation5] sm:$0x3] %v2002
    %2007 = vst [vmem:[#allocation3 + $0x8] sm:$0x3] %v2004
    %v2008 = vld [vmem:[#allocation4] sm:$0x3]
    %v2009 = vld [vmem:[#allocation5] sm:$0x3]
    %v2010 = vld [vmem:[#allocation2 + $0x20] sm:$0xc]
    %v2011 = vld [vmem:[#allocation2 + $0x28] sm:$0xc]
    %v2012 = vld [vmem:[#allocation2 + $0x30] sm:$0xc]
    %v2013 = vld [vmem:[#allocation2 + $0x38] sm:$0xc]
    %v2014 = vpack.c.bf16 %v2008, %v2008
    %v2015 = vld [vmem:[#allocation9] sm:$0xff]
    %v2016 = vld [vmem:[#allocation9 + $0x8] sm:$0xff]
    %v2017 = vld [vmem:[#allocation9 + $0x10] sm:$0xff]
    %v2018 = vld [vmem:[#allocation9 + $0x18] sm:$0xff]
    %v2019 = vld [vmem:[#allocation9 + $0x20] sm:$0xff]
    %v2020 = vld [vmem:[#allocation9 + $0x28] sm:$0xff]
    %v2021 = vld [vmem:[#allocation9 + $0x30] sm:$0xff]
    %v2022 = vld [vmem:[#allocation9 + $0x38] sm:$0xff]
    %v2023 = vld [vmem:[#allocation9 + $0x40] sm:$0xff]
    %v2024 = vld [vmem:[#allocation9 + $0x48] sm:$0xff]
    %v2025 = vld [vmem:[#allocation9 + $0x50] sm:$0xff]
    %v2026 = vld [vmem:[#allocation9 + $0x58] sm:$0xff]
    %v2027 = vld [vmem:[#allocation9 + $0x60] sm:$0xff]
    %v2028 = vld [vmem:[#allocation9 + $0x68] sm:$0xff]
    %v2029 = vld [vmem:[#allocation9 + $0x70] sm:$0xff]
    %v2030 = vld [vmem:[#allocation9 + $0x78] sm:$0xff]
    %v2031 = vld [vmem:[#allocation9 + $0x80] sm:$0xff]
    %v2032 = vld [vmem:[#allocation9 + $0x88] sm:$0xff]
    %v2033 = vld [vmem:[#allocation9 + $0x90] sm:$0xff]
    %v2034 = vld [vmem:[#allocation9 + $0x98] sm:$0xff]
    %v2035 = vld [vmem:[#allocation9 + $0xa0] sm:$0xff]
    %v2036 = vld [vmem:[#allocation9 + $0xa8] sm:$0xff]
    %v2037 = vld [vmem:[#allocation9 + $0xb0] sm:$0xff]
    %v2038 = vld [vmem:[#allocation9 + $0xb8] sm:$0xff]
    %v2039 = vld [vmem:[#allocation9 + $0xc0] sm:$0xff]
    %v2040 = vld [vmem:[#allocation9 + $0xc8] sm:$0xff]
    %v2041 = vld [vmem:[#allocation9 + $0xd0] sm:$0xff]
    %v2042 = vld [vmem:[#allocation9 + $0xd8] sm:$0xff]
    %v2043 = vld [vmem:[#allocation9 + $0xe0] sm:$0xff]
    %v2044 = vld [vmem:[#allocation9 + $0xe8] sm:$0xff]
    %v2045 = vld [vmem:[#allocation9 + $0xf0] sm:$0xff]
    %v2046 = vld [vmem:[#allocation9 + $0xf8] sm:$0xff]
    %v2079 = vunpack.c.l.b16 %v2015
    %v2080 = vunpack.c.h.b16 %v2015
    %v2081 = vunpack.c.l.b16 %v2016
    %v2082 = vunpack.c.h.b16 %v2016
    %v2083 = vunpack.c.l.b16 %v2017
    %v2084 = vunpack.c.h.b16 %v2017
    %v2085 = vunpack.c.l.b16 %v2018
    %v2086 = vunpack.c.h.b16 %v2018
    %v2087 = vunpack.c.l.b16 %v2019
    %v2088 = vunpack.c.h.b16 %v2019
    %v2089 = vunpack.c.l.b16 %v2020
    %v2090 = vunpack.c.h.b16 %v2020
    %v2091 = vunpack.c.l.b16 %v2021
    %v2092 = vunpack.c.h.b16 %v2021
    %v2093 = vunpack.c.l.b16 %v2022
    %v2094 = vunpack.c.h.b16 %v2022
    %v2095 = vunpack.c.l.b16 %v2023
    %v2096 = vunpack.c.h.b16 %v2023
    %v2097 = vunpack.c.l.b16 %v2024
    %v2098 = vunpack.c.h.b16 %v2024
    %v2099 = vunpack.c.l.b16 %v2025
    %v2100 = vunpack.c.h.b16 %v2025
    %v2101 = vunpack.c.l.b16 %v2026
    %v2102 = vunpack.c.h.b16 %v2026
    %v2103 = vunpack.c.l.b16 %v2027
    %v2104 = vunpack.c.h.b16 %v2027
    %v2105 = vunpack.c.l.b16 %v2028
    %v2106 = vunpack.c.h.b16 %v2028
    %v2107 = vunpack.c.l.b16 %v2029
    %v2108 = vunpack.c.h.b16 %v2029
    %v2109 = vunpack.c.l.b16 %v2030
    %v2110 = vunpack.c.h.b16 %v2030
    %v2111 = vunpack.c.l.b16 %v2031
    %v2112 = vunpack.c.h.b16 %v2031
    %v2113 = vunpack.c.l.b16 %v2032
    %v2114 = vunpack.c.h.b16 %v2032
    %v2115 = vunpack.c.l.b16 %v2033
    %v2116 = vunpack.c.h.b16 %v2033
    %v2117 = vunpack.c.l.b16 %v2034
    %v2118 = vunpack.c.h.b16 %v2034
    %v2119 = vunpack.c.l.b16 %v2035
    %v2120 = vunpack.c.h.b16 %v2035
    %v2121 = vunpack.c.l.b16 %v2036
    %v2122 = vunpack.c.h.b16 %v2036
    %v2123 = vunpack.c.l.b16 %v2037
    %v2124 = vunpack.c.h.b16 %v2037
    %v2125 = vunpack.c.l.b16 %v2038
    %v2126 = vunpack.c.h.b16 %v2038
    %v2127 = vunpack.c.l.b16 %v2039
    %v2128 = vunpack.c.h.b16 %v2039
    %v2129 = vunpack.c.l.b16 %v2040
    %v2130 = vunpack.c.h.b16 %v2040
    %v2131 = vunpack.c.l.b16 %v2041
    %v2132 = vunpack.c.h.b16 %v2041
    %v2133 = vunpack.c.l.b16 %v2042
    %v2134 = vunpack.c.h.b16 %v2042
    %v2135 = vunpack.c.l.b16 %v2043
    %v2136 = vunpack.c.h.b16 %v2043
    %v2137 = vunpack.c.l.b16 %v2044
    %v2138 = vunpack.c.h.b16 %v2044
    %v2139 = vunpack.c.l.b16 %v2045
    %v2140 = vunpack.c.h.b16 %v2045
    %v2141 = vunpack.c.l.b16 %v2046
    %v2142 = vunpack.c.h.b16 %v2046
    %v2143 = vpack.c.b16 %v2083, %v2079
    %v2144 = vpack.c.b16 %v2084, %v2080
    %v2145 = vpack.c.b16 %v2085, %v2081
    %v2146 = vpack.c.b16 %v2086, %v2082
    %v2147 = vpack.c.b16 %v2091, %v2087
    %v2148 = vpack.c.b16 %v2092, %v2088
    %v2149 = vpack.c.b16 %v2093, %v2089
    %v2150 = vpack.c.b16 %v2094, %v2090
    %v2151 = vpack.c.b16 %v2099, %v2095
    %v2152 = vpack.c.b16 %v2100, %v2096
    %v2153 = vpack.c.b16 %v2101, %v2097
    %v2154 = vpack.c.b16 %v2102, %v2098
    %v2155 = vpack.c.b16 %v2107, %v2103
    %v2156 = vpack.c.b16 %v2108, %v2104
    %v2157 = vpack.c.b16 %v2109, %v2105
    %v2158 = vpack.c.b16 %v2110, %v2106
    %v2159 = vpack.c.b16 %v2115, %v2111
    %v2160 = vpack.c.b16 %v2116, %v2112
    %v2161 = vpack.c.b16 %v2117, %v2113
    %v2162 = vpack.c.b16 %v2118, %v2114
    %v2163 = vpack.c.b16 %v2123, %v2119
    %v2164 = vpack.c.b16 %v2124, %v2120
    %v2165 = vpack.c.b16 %v2125, %v2121
    %v2166 = vpack.c.b16 %v2126, %v2122
    %v2167 = vpack.c.b16 %v2131, %v2127
    %v2168 = vpack.c.b16 %v2132, %v2128
    %v2169 = vpack.c.b16 %v2133, %v2129
    %v2170 = vpack.c.b16 %v2134, %v2130
    %v2171 = vpack.c.b16 %v2139, %v2135
    %v2172 = vpack.c.b16 %v2140, %v2136
    %v2173 = vpack.c.b16 %v2141, %v2137
    %v2174 = vpack.c.b16 %v2142, %v2138
    %2207 = vmatprep.subr.bf16.mxu0 %v2172
    %2208 = vmatpush1.bf16.msra.mxu0 %v2171
    %2209 = vmatprep.subr.bf16.mxu0 %v2168
    %2210 = vmatpush1.bf16.msra.mxu0 %v2167
    %2211 = vmatprep.subr.bf16.mxu0 %v2164
    %2212 = vmatpush1.bf16.msra.mxu0 %v2163
    %2213 = vmatprep.subr.bf16.mxu0 %v2160
    %2214 = vmatpush1.bf16.msra.mxu0 %v2159
    %2215 = vmatprep.subr.bf16.mxu0 %v2156
    %2216 = vmatpush1.bf16.msra.mxu0 %v2155
    %2217 = vmatprep.subr.bf16.mxu0 %v2152
    %2218 = vmatpush1.bf16.msra.mxu0 %v2151
    %2219 = vmatprep.subr.bf16.mxu0 %v2148
    %2220 = vmatpush1.bf16.msra.mxu0 %v2147
    %2221 = vmatprep.subr.bf16.mxu0 %v2144
    %2222 = vmatpush1.bf16.msra.mxu0 %v2143
    %2223 = vmatprep.subr.bf16.mxu0 0
    %2224 = vmatpush2.bf16.msra.mxu0 0
    %2225 = vmatprep.subr.bf16.mxu0 0
    %2226 = vmatpush2.bf16.msra.mxu0 0
    %2227 = vmatprep.subr.bf16.mxu0 0
    %2228 = vmatpush2.bf16.msra.mxu0 0
    %2229 = vmatprep.subr.bf16.mxu0 0
    %2230 = vmatpush2.bf16.msra.mxu0 0
    %2231 = vmatprep.subr.bf16.mxu0 0
    %2232 = vmatpush2.bf16.msra.mxu0 0
    %2233 = vmatprep.subr.bf16.mxu0 0
    %2234 = vmatpush2.bf16.msra.mxu0 0
    %2235 = vmatprep.subr.bf16.mxu0 0
    %2236 = vmatpush2.bf16.msra.mxu0 0
    %2237 = vmatprep.subr.bf16.mxu0 0
    %2238 = vmatpush2.bf16.msra.mxu0 0
    %2239 = vmatprep.mubr.bf16.mxu0 0
    %2240 = vmatmul.mubr.bf16.gmra.mxu0 %v2014
    %v2241 = vpop.f32.mrf.mxu0
    %v2242 = vadd.f32 0.0, %v2241
    %v2243 = vpop.f32.mrf.mxu0
    %v2244 = vadd.f32 0.0, %v2243
    %v2245 = vpop.f32.mrf.mxu0
    %v2246 = vpop.f32.mrf.mxu0
    %2247 = vdwg.mxu0
    %2248 = vmatprep.subr.bf16.mxu0 %v2174
    %2249 = vmatpush1.bf16.msra.mxu0 %v2173
    %2250 = vmatprep.subr.bf16.mxu0 %v2170
    %2251 = vmatpush1.bf16.msra.mxu0 %v2169
    %2252 = vmatprep.subr.bf16.mxu0 %v2166
    %2253 = vmatpush1.bf16.msra.mxu0 %v2165
    %2254 = vmatprep.subr.bf16.mxu0 %v2162
    %2255 = vmatpush1.bf16.msra.mxu0 %v2161
    %2256 = vmatprep.subr.bf16.mxu0 %v2158
    %2257 = vmatpush1.bf16.msra.mxu0 %v2157
    %2258 = vmatprep.subr.bf16.mxu0 %v2154
    %2259 = vmatpush1.bf16.msra.mxu0 %v2153
    %2260 = vmatprep.subr.bf16.mxu0 %v2150
    %2261 = vmatpush1.bf16.msra.mxu0 %v2149
    %2262 = vmatprep.subr.bf16.mxu0 %v2146
    %2263 = vmatpush1.bf16.msra.mxu0 %v2145
    %2264 = vmatprep.subr.bf16.mxu0 0
    %2265 = vmatpush2.bf16.msra.mxu0 0
    %2266 = vmatprep.subr.bf16.mxu0 0
    %2267 = vmatpush2.bf16.msra.mxu0 0
    %2268 = vmatprep.subr.bf16.mxu0 0
    %2269 = vmatpush2.bf16.msra.mxu0 0
    %2270 = vmatprep.subr.bf16.mxu0 0
    %2271 = vmatpush2.bf16.msra.mxu0 0
    %2272 = vmatprep.subr.bf16.mxu0 0
    %2273 = vmatpush2.bf16.msra.mxu0 0
    %2274 = vmatprep.subr.bf16.mxu0 0
    %2275 = vmatpush2.bf16.msra.mxu0 0
    %2276 = vmatprep.subr.bf16.mxu0 0
    %2277 = vmatpush2.bf16.msra.mxu0 0
    %2278 = vmatprep.subr.bf16.mxu0 0
    %2279 = vmatpush2.bf16.msra.mxu0 0
    %2280 = vmatprep.mubr.bf16.mxu0 0
    %2281 = vmatmul.mubr.bf16.gmra.mxu0 %v2014
    %v2282 = vpop.f32.mrf.mxu0
    %v2283 = vadd.f32 0.0, %v2282
    %v2284 = vpop.f32.mrf.mxu0
    %v2285 = vadd.f32 0.0, %v2284
    %v2286 = vpop.f32.mrf.mxu0
    %v2287 = vpop.f32.mrf.mxu0
    %2288 = vdwg.mxu0
    %v2293 = vrot.slane %v2242, 6
    %v2294 = vrot.slane %v2244, 6
    %v2295 = vrot.slane %v2283, 6
    %v2296 = vrot.slane %v2285, 6
    %v2301 = vadd.f32 %v2010, %v2293
    %v2302 = vadd.f32 %v2011, %v2294
    %v2303 = vadd.f32 %v2012, %v2295
    %v2304 = vadd.f32 %v2013, %v2296
    %v2305 = vxor.u32 %v2301, 2147483648
    %v2306 = vmul.f32 %v2305, 1.442695
    %v2307 = vpow.pop %v2306
    %v2308 = vadd.f32 %v2307, 1.0
    %v2309 = vrcp.pop %v2308
    %v2310 = vmul.f32 1.0, %v2309
    %v2311 = vxor.u32 %v2302, 2147483648
    %v2312 = vmul.f32 %v2311, 1.442695
    %v2313 = vpow.pop %v2312
    %v2314 = vadd.f32 %v2313, 1.0
    %v2315 = vrcp.pop %v2314
    %v2316 = vmul.f32 1.0, %v2315
    %v2317 = vtanh.pop %v2303
    %v2318 = vxor.u32 %v2304, 2147483648
    %v2319 = vmul.f32 %v2318, 1.442695
    %v2320 = vpow.pop %v2319
    %v2321 = vadd.f32 %v2320, 1.0
    %v2322 = vrcp.pop %v2321
    %v2323 = vmul.f32 1.0, %v2322
    %v2325 = vrot.slane %v2009, 6
    %v2327 = vmul.f32 %v2316, %v2325
    %v2328 = vmul.f32 %v2310, %v2317
    %v2329 = vadd.f32 %v2327, %v2328
    %v2330 = vtanh.pop %v2329
    %v2331 = vmul.f32 %v2323, %v2330
    %2332 = vst [vmem:[#allocation4 - $0x2] sm:$0xc] %v2331
    %2333 = vst [vmem:[#allocation5 - $0x2] sm:$0xc] %v2329
    %2334 = vst [vmem:[#allocation3 + $0x8] sm:$0xc] %v2331
    %v2335 = vld [vmem:[#allocation4] sm:$0x3]
    %v2336 = vld [vmem:[#allocation5] sm:$0x3]
    %v2337 = vld [vmem:[#allocation2 + $0x20] sm:$0x30]
    %v2338 = vld [vmem:[#allocation2 + $0x28] sm:$0x30]
    %v2339 = vld [vmem:[#allocation2 + $0x30] sm:$0x30]
    %v2340 = vld [vmem:[#allocation2 + $0x38] sm:$0x30]
    %v2341 = vpack.c.bf16 %v2335, %v2335
    %v2342 = vld [vmem:[#allocation9] sm:$0xff]
    %v2343 = vld [vmem:[#allocation9 + $0x8] sm:$0xff]
    %v2344 = vld [vmem:[#allocation9 + $0x10] sm:$0xff]
    %v2345 = vld [vmem:[#allocation9 + $0x18] sm:$0xff]
    %v2346 = vld [vmem:[#allocation9 + $0x20] sm:$0xff]
    %v2347 = vld [vmem:[#allocation9 + $0x28] sm:$0xff]
    %v2348 = vld [vmem:[#allocation9 + $0x30] sm:$0xff]
    %v2349 = vld [vmem:[#allocation9 + $0x38] sm:$0xff]
    %v2350 = vld [vmem:[#allocation9 + $0x40] sm:$0xff]
    %v2351 = vld [vmem:[#allocation9 + $0x48] sm:$0xff]
    %v2352 = vld [vmem:[#allocation9 + $0x50] sm:$0xff]
    %v2353 = vld [vmem:[#allocation9 + $0x58] sm:$0xff]
    %v2354 = vld [vmem:[#allocation9 + $0x60] sm:$0xff]
    %v2355 = vld [vmem:[#allocation9 + $0x68] sm:$0xff]
    %v2356 = vld [vmem:[#allocation9 + $0x70] sm:$0xff]
    %v2357 = vld [vmem:[#allocation9 + $0x78] sm:$0xff]
    %v2358 = vld [vmem:[#allocation9 + $0x80] sm:$0xff]
    %v2359 = vld [vmem:[#allocation9 + $0x88] sm:$0xff]
    %v2360 = vld [vmem:[#allocation9 + $0x90] sm:$0xff]
    %v2361 = vld [vmem:[#allocation9 + $0x98] sm:$0xff]
    %v2362 = vld [vmem:[#allocation9 + $0xa0] sm:$0xff]
    %v2363 = vld [vmem:[#allocation9 + $0xa8] sm:$0xff]
    %v2364 = vld [vmem:[#allocation9 + $0xb0] sm:$0xff]
    %v2365 = vld [vmem:[#allocation9 + $0xb8] sm:$0xff]
    %v2366 = vld [vmem:[#allocation9 + $0xc0] sm:$0xff]
    %v2367 = vld [vmem:[#allocation9 + $0xc8] sm:$0xff]
    %v2368 = vld [vmem:[#allocation9 + $0xd0] sm:$0xff]
    %v2369 = vld [vmem:[#allocation9 + $0xd8] sm:$0xff]
    %v2370 = vld [vmem:[#allocation9 + $0xe0] sm:$0xff]
    %v2371 = vld [vmem:[#allocation9 + $0xe8] sm:$0xff]
    %v2372 = vld [vmem:[#allocation9 + $0xf0] sm:$0xff]
    %v2373 = vld [vmem:[#allocation9 + $0xf8] sm:$0xff]
    %v2406 = vunpack.c.l.b16 %v2342
    %v2407 = vunpack.c.h.b16 %v2342
    %v2408 = vunpack.c.l.b16 %v2343
    %v2409 = vunpack.c.h.b16 %v2343
    %v2410 = vunpack.c.l.b16 %v2344
    %v2411 = vunpack.c.h.b16 %v2344
    %v2412 = vunpack.c.l.b16 %v2345
    %v2413 = vunpack.c.h.b16 %v2345
    %v2414 = vunpack.c.l.b16 %v2346
    %v2415 = vunpack.c.h.b16 %v2346
    %v2416 = vunpack.c.l.b16 %v2347
    %v2417 = vunpack.c.h.b16 %v2347
    %v2418 = vunpack.c.l.b16 %v2348
    %v2419 = vunpack.c.h.b16 %v2348
    %v2420 = vunpack.c.l.b16 %v2349
    %v2421 = vunpack.c.h.b16 %v2349
    %v2422 = vunpack.c.l.b16 %v2350
    %v2423 = vunpack.c.h.b16 %v2350
    %v2424 = vunpack.c.l.b16 %v2351
    %v2425 = vunpack.c.h.b16 %v2351
    %v2426 = vunpack.c.l.b16 %v2352
    %v2427 = vunpack.c.h.b16 %v2352
    %v2428 = vunpack.c.l.b16 %v2353
    %v2429 = vunpack.c.h.b16 %v2353
    %v2430 = vunpack.c.l.b16 %v2354
    %v2431 = vunpack.c.h.b16 %v2354
    %v2432 = vunpack.c.l.b16 %v2355
    %v2433 = vunpack.c.h.b16 %v2355
    %v2434 = vunpack.c.l.b16 %v2356
    %v2435 = vunpack.c.h.b16 %v2356
    %v2436 = vunpack.c.l.b16 %v2357
    %v2437 = vunpack.c.h.b16 %v2357
    %v2438 = vunpack.c.l.b16 %v2358
    %v2439 = vunpack.c.h.b16 %v2358
    %v2440 = vunpack.c.l.b16 %v2359
    %v2441 = vunpack.c.h.b16 %v2359
    %v2442 = vunpack.c.l.b16 %v2360
    %v2443 = vunpack.c.h.b16 %v2360
    %v2444 = vunpack.c.l.b16 %v2361
    %v2445 = vunpack.c.h.b16 %v2361
    %v2446 = vunpack.c.l.b16 %v2362
    %v2447 = vunpack.c.h.b16 %v2362
    %v2448 = vunpack.c.l.b16 %v2363
    %v2449 = vunpack.c.h.b16 %v2363
    %v2450 = vunpack.c.l.b16 %v2364
    %v2451 = vunpack.c.h.b16 %v2364
    %v2452 = vunpack.c.l.b16 %v2365
    %v2453 = vunpack.c.h.b16 %v2365
    %v2454 = vunpack.c.l.b16 %v2366
    %v2455 = vunpack.c.h.b16 %v2366
    %v2456 = vunpack.c.l.b16 %v2367
    %v2457 = vunpack.c.h.b16 %v2367
    %v2458 = vunpack.c.l.b16 %v2368
    %v2459 = vunpack.c.h.b16 %v2368
    %v2460 = vunpack.c.l.b16 %v2369
    %v2461 = vunpack.c.h.b16 %v2369
    %v2462 = vunpack.c.l.b16 %v2370
    %v2463 = vunpack.c.h.b16 %v2370
    %v2464 = vunpack.c.l.b16 %v2371
    %v2465 = vunpack.c.h.b16 %v2371
    %v2466 = vunpack.c.l.b16 %v2372
    %v2467 = vunpack.c.h.b16 %v2372
    %v2468 = vunpack.c.l.b16 %v2373
    %v2469 = vunpack.c.h.b16 %v2373
    %v2470 = vpack.c.b16 %v2410, %v2406
    %v2471 = vpack.c.b16 %v2411, %v2407
    %v2472 = vpack.c.b16 %v2412, %v2408
    %v2473 = vpack.c.b16 %v2413, %v2409
    %v2474 = vpack.c.b16 %v2418, %v2414
    %v2475 = vpack.c.b16 %v2419, %v2415
    %v2476 = vpack.c.b16 %v2420, %v2416
    %v2477 = vpack.c.b16 %v2421, %v2417
    %v2478 = vpack.c.b16 %v2426, %v2422
    %v2479 = vpack.c.b16 %v2427, %v2423
    %v2480 = vpack.c.b16 %v2428, %v2424
    %v2481 = vpack.c.b16 %v2429, %v2425
    %v2482 = vpack.c.b16 %v2434, %v2430
    %v2483 = vpack.c.b16 %v2435, %v2431
    %v2484 = vpack.c.b16 %v2436, %v2432
    %v2485 = vpack.c.b16 %v2437, %v2433
    %v2486 = vpack.c.b16 %v2442, %v2438
    %v2487 = vpack.c.b16 %v2443, %v2439
    %v2488 = vpack.c.b16 %v2444, %v2440
    %v2489 = vpack.c.b16 %v2445, %v2441
    %v2490 = vpack.c.b16 %v2450, %v2446
    %v2491 = vpack.c.b16 %v2451, %v2447
    %v2492 = vpack.c.b16 %v2452, %v2448
    %v2493 = vpack.c.b16 %v2453, %v2449
    %v2494 = vpack.c.b16 %v2458, %v2454
    %v2495 = vpack.c.b16 %v2459, %v2455
    %v2496 = vpack.c.b16 %v2460, %v2456
    %v2497 = vpack.c.b16 %v2461, %v2457
    %v2498 = vpack.c.b16 %v2466, %v2462
    %v2499 = vpack.c.b16 %v2467, %v2463
    %v2500 = vpack.c.b16 %v2468, %v2464
    %v2501 = vpack.c.b16 %v2469, %v2465
    %2534 = vmatprep.subr.bf16.mxu0 %v2499
    %2535 = vmatpush1.bf16.msra.mxu0 %v2498
    %2536 = vmatprep.subr.bf16.mxu0 %v2495
    %2537 = vmatpush1.bf16.msra.mxu0 %v2494
    %2538 = vmatprep.subr.bf16.mxu0 %v2491
    %2539 = vmatpush1.bf16.msra.mxu0 %v2490
    %2540 = vmatprep.subr.bf16.mxu0 %v2487
    %2541 = vmatpush1.bf16.msra.mxu0 %v2486
    %2542 = vmatprep.subr.bf16.mxu0 %v2483
    %2543 = vmatpush1.bf16.msra.mxu0 %v2482
    %2544 = vmatprep.subr.bf16.mxu0 %v2479
    %2545 = vmatpush1.bf16.msra.mxu0 %v2478
    %2546 = vmatprep.subr.bf16.mxu0 %v2475
    %2547 = vmatpush1.bf16.msra.mxu0 %v2474
    %2548 = vmatprep.subr.bf16.mxu0 %v2471
    %2549 = vmatpush1.bf16.msra.mxu0 %v2470
    %2550 = vmatprep.subr.bf16.mxu0 0
    %2551 = vmatpush2.bf16.msra.mxu0 0
    %2552 = vmatprep.subr.bf16.mxu0 0
    %2553 = vmatpush2.bf16.msra.mxu0 0
    %2554 = vmatprep.subr.bf16.mxu0 0
    %2555 = vmatpush2.bf16.msra.mxu0 0
    %2556 = vmatprep.subr.bf16.mxu0 0
    %2557 = vmatpush2.bf16.msra.mxu0 0
    %2558 = vmatprep.subr.bf16.mxu0 0
    %2559 = vmatpush2.bf16.msra.mxu0 0
    %2560 = vmatprep.subr.bf16.mxu0 0
    %2561 = vmatpush2.bf16.msra.mxu0 0
    %2562 = vmatprep.subr.bf16.mxu0 0
    %2563 = vmatpush2.bf16.msra.mxu0 0
    %2564 = vmatprep.subr.bf16.mxu0 0
    %2565 = vmatpush2.bf16.msra.mxu0 0
    %2566 = vmatprep.mubr.bf16.mxu0 0
    %2567 = vmatmul.mubr.bf16.gmra.mxu0 %v2341
    %v2568 = vpop.f32.mrf.mxu0
    %v2569 = vadd.f32 0.0, %v2568
    %v2570 = vpop.f32.mrf.mxu0
    %v2571 = vadd.f32 0.0, %v2570
    %v2572 = vpop.f32.mrf.mxu0
    %v2573 = vpop.f32.mrf.mxu0
    %2574 = vdwg.mxu0
    %2575 = vmatprep.subr.bf16.mxu0 %v2501
    %2576 = vmatpush1.bf16.msra.mxu0 %v2500
    %2577 = vmatprep.subr.bf16.mxu0 %v2497
    %2578 = vmatpush1.bf16.msra.mxu0 %v2496
    %2579 = vmatprep.subr.bf16.mxu0 %v2493
    %2580 = vmatpush1.bf16.msra.mxu0 %v2492
    %2581 = vmatprep.subr.bf16.mxu0 %v2489
    %2582 = vmatpush1.bf16.msra.mxu0 %v2488
    %2583 = vmatprep.subr.bf16.mxu0 %v2485
    %2584 = vmatpush1.bf16.msra.mxu0 %v2484
    %2585 = vmatprep.subr.bf16.mxu0 %v2481
    %2586 = vmatpush1.bf16.msra.mxu0 %v2480
    %2587 = vmatprep.subr.bf16.mxu0 %v2477
    %2588 = vmatpush1.bf16.msra.mxu0 %v2476
    %2589 = vmatprep.subr.bf16.mxu0 %v2473
    %2590 = vmatpush1.bf16.msra.mxu0 %v2472
    %2591 = vmatprep.subr.bf16.mxu0 0
    %2592 = vmatpush2.bf16.msra.mxu0 0
    %2593 = vmatprep.subr.bf16.mxu0 0
    %2594 = vmatpush2.bf16.msra.mxu0 0
    %2595 = vmatprep.subr.bf16.mxu0 0
    %2596 = vmatpush2.bf16.msra.mxu0 0
    %2597 = vmatprep.subr.bf16.mxu0 0
    %2598 = vmatpush2.bf16.msra.mxu0 0
    %2599 = vmatprep.subr.bf16.mxu0 0
    %2600 = vmatpush2.bf16.msra.mxu0 0
    %2601 = vmatprep.subr.bf16.mxu0 0
    %2602 = vmatpush2.bf16.msra.mxu0 0
    %2603 = vmatprep.subr.bf16.mxu0 0
    %2604 = vmatpush2.bf16.msra.mxu0 0
    %2605 = vmatprep.subr.bf16.mxu0 0
    %2606 = vmatpush2.bf16.msra.mxu0 0
    %2607 = vmatprep.mubr.bf16.mxu0 0
    %2608 = vmatmul.mubr.bf16.gmra.mxu0 %v2341
    %v2609 = vpop.f32.mrf.mxu0
    %v2610 = vadd.f32 0.0, %v2609
    %v2611 = vpop.f32.mrf.mxu0
    %v2612 = vadd.f32 0.0, %v2611
    %v2613 = vpop.f32.mrf.mxu0
    %v2614 = vpop.f32.mrf.mxu0
    %2615 = vdwg.mxu0
    %v2620 = vrot.slane %v2569, 4
    %v2621 = vrot.slane %v2571, 4
    %v2622 = vrot.slane %v2610, 4
    %v2623 = vrot.slane %v2612, 4
    %v2628 = vadd.f32 %v2337, %v2620
    %v2629 = vadd.f32 %v2338, %v2621
    %v2630 = vadd.f32 %v2339, %v2622
    %v2631 = vadd.f32 %v2340, %v2623
    %v2632 = vxor.u32 %v2628, 2147483648
    %v2633 = vmul.f32 %v2632, 1.442695
    %v2634 = vpow.pop %v2633
    %v2635 = vadd.f32 %v2634, 1.0
    %v2636 = vrcp.pop %v2635
    %v2637 = vmul.f32 1.0, %v2636
    %v2638 = vxor.u32 %v2629, 2147483648
    %v2639 = vmul.f32 %v2638, 1.442695
    %v2640 = vpow.pop %v2639
    %v2641 = vadd.f32 %v2640, 1.0
    %v2642 = vrcp.pop %v2641
    %v2643 = vmul.f32 1.0, %v2642
    %v2644 = vtanh.pop %v2630
    %v2645 = vxor.u32 %v2631, 2147483648
    %v2646 = vmul.f32 %v2645, 1.442695
    %v2647 = vpow.pop %v2646
    %v2648 = vadd.f32 %v2647, 1.0
    %v2649 = vrcp.pop %v2648
    %v2650 = vmul.f32 1.0, %v2649
    %v2652 = vrot.slane %v2336, 4
    %v2654 = vmul.f32 %v2643, %v2652
    %v2655 = vmul.f32 %v2637, %v2644
    %v2656 = vadd.f32 %v2654, %v2655
    %v2657 = vtanh.pop %v2656
    %v2658 = vmul.f32 %v2650, %v2657
    %2659 = vst [vmem:[#allocation4 - $0x4] sm:$0x30] %v2658
    %2660 = vst [vmem:[#allocation5 - $0x4] sm:$0x30] %v2656
    %2661 = vst [vmem:[#allocation3 + $0x8] sm:$0x30] %v2658
    %v2662 = vld [vmem:[#allocation4] sm:$0x3]
    %v2663 = vld [vmem:[#allocation5] sm:$0x3]
    %v2664 = vld [vmem:[#allocation2 + $0x20] sm:$0xc0]
    %v2665 = vld [vmem:[#allocation2 + $0x28] sm:$0xc0]
    %v2666 = vld [vmem:[#allocation2 + $0x30] sm:$0xc0]
    %v2667 = vld [vmem:[#allocation2 + $0x38] sm:$0xc0]
    %v2668 = vpack.c.bf16 %v2662, %v2662
    %v2669 = vld [vmem:[#allocation9] sm:$0xff]
    %v2670 = vld [vmem:[#allocation9 + $0x8] sm:$0xff]
    %v2671 = vld [vmem:[#allocation9 + $0x10] sm:$0xff]
    %v2672 = vld [vmem:[#allocation9 + $0x18] sm:$0xff]
    %v2673 = vld [vmem:[#allocation9 + $0x20] sm:$0xff]
    %v2674 = vld [vmem:[#allocation9 + $0x28] sm:$0xff]
    %v2675 = vld [vmem:[#allocation9 + $0x30] sm:$0xff]
    %v2676 = vld [vmem:[#allocation9 + $0x38] sm:$0xff]
    %v2677 = vld [vmem:[#allocation9 + $0x40] sm:$0xff]
    %v2678 = vld [vmem:[#allocation9 + $0x48] sm:$0xff]
    %v2679 = vld [vmem:[#allocation9 + $0x50] sm:$0xff]
    %v2680 = vld [vmem:[#allocation9 + $0x58] sm:$0xff]
    %v2681 = vld [vmem:[#allocation9 + $0x60] sm:$0xff]
    %v2682 = vld [vmem:[#allocation9 + $0x68] sm:$0xff]
    %v2683 = vld [vmem:[#allocation9 + $0x70] sm:$0xff]
    %v2684 = vld [vmem:[#allocation9 + $0x78] sm:$0xff]
    %v2685 = vld [vmem:[#allocation9 + $0x80] sm:$0xff]
    %v2686 = vld [vmem:[#allocation9 + $0x88] sm:$0xff]
    %v2687 = vld [vmem:[#allocation9 + $0x90] sm:$0xff]
    %v2688 = vld [vmem:[#allocation9 + $0x98] sm:$0xff]
    %v2689 = vld [vmem:[#allocation9 + $0xa0] sm:$0xff]
    %v2690 = vld [vmem:[#allocation9 + $0xa8] sm:$0xff]
    %v2691 = vld [vmem:[#allocation9 + $0xb0] sm:$0xff]
    %v2692 = vld [vmem:[#allocation9 + $0xb8] sm:$0xff]
    %v2693 = vld [vmem:[#allocation9 + $0xc0] sm:$0xff]
    %v2694 = vld [vmem:[#allocation9 + $0xc8] sm:$0xff]
    %v2695 = vld [vmem:[#allocation9 + $0xd0] sm:$0xff]
    %v2696 = vld [vmem:[#allocation9 + $0xd8] sm:$0xff]
    %v2697 = vld [vmem:[#allocation9 + $0xe0] sm:$0xff]
    %v2698 = vld [vmem:[#allocation9 + $0xe8] sm:$0xff]
    %v2699 = vld [vmem:[#allocation9 + $0xf0] sm:$0xff]
    %v2700 = vld [vmem:[#allocation9 + $0xf8] sm:$0xff]
    %v2733 = vunpack.c.l.b16 %v2669
    %v2734 = vunpack.c.h.b16 %v2669
    %v2735 = vunpack.c.l.b16 %v2670
    %v2736 = vunpack.c.h.b16 %v2670
    %v2737 = vunpack.c.l.b16 %v2671
    %v2738 = vunpack.c.h.b16 %v2671
    %v2739 = vunpack.c.l.b16 %v2672
    %v2740 = vunpack.c.h.b16 %v2672
    %v2741 = vunpack.c.l.b16 %v2673
    %v2742 = vunpack.c.h.b16 %v2673
    %v2743 = vunpack.c.l.b16 %v2674
    %v2744 = vunpack.c.h.b16 %v2674
    %v2745 = vunpack.c.l.b16 %v2675
    %v2746 = vunpack.c.h.b16 %v2675
    %v2747 = vunpack.c.l.b16 %v2676
    %v2748 = vunpack.c.h.b16 %v2676
    %v2749 = vunpack.c.l.b16 %v2677
    %v2750 = vunpack.c.h.b16 %v2677
    %v2751 = vunpack.c.l.b16 %v2678
    %v2752 = vunpack.c.h.b16 %v2678
    %v2753 = vunpack.c.l.b16 %v2679
    %v2754 = vunpack.c.h.b16 %v2679
    %v2755 = vunpack.c.l.b16 %v2680
    %v2756 = vunpack.c.h.b16 %v2680
    %v2757 = vunpack.c.l.b16 %v2681
    %v2758 = vunpack.c.h.b16 %v2681
    %v2759 = vunpack.c.l.b16 %v2682
    %v2760 = vunpack.c.h.b16 %v2682
    %v2761 = vunpack.c.l.b16 %v2683
    %v2762 = vunpack.c.h.b16 %v2683
    %v2763 = vunpack.c.l.b16 %v2684
    %v2764 = vunpack.c.h.b16 %v2684
    %v2765 = vunpack.c.l.b16 %v2685
    %v2766 = vunpack.c.h.b16 %v2685
    %v2767 = vunpack.c.l.b16 %v2686
    %v2768 = vunpack.c.h.b16 %v2686
    %v2769 = vunpack.c.l.b16 %v2687
    %v2770 = vunpack.c.h.b16 %v2687
    %v2771 = vunpack.c.l.b16 %v2688
    %v2772 = vunpack.c.h.b16 %v2688
    %v2773 = vunpack.c.l.b16 %v2689
    %v2774 = vunpack.c.h.b16 %v2689
    %v2775 = vunpack.c.l.b16 %v2690
    %v2776 = vunpack.c.h.b16 %v2690
    %v2777 = vunpack.c.l.b16 %v2691
    %v2778 = vunpack.c.h.b16 %v2691
    %v2779 = vunpack.c.l.b16 %v2692
    %v2780 = vunpack.c.h.b16 %v2692
    %v2781 = vunpack.c.l.b16 %v2693
    %v2782 = vunpack.c.h.b16 %v2693
    %v2783 = vunpack.c.l.b16 %v2694
    %v2784 = vunpack.c.h.b16 %v2694
    %v2785 = vunpack.c.l.b16 %v2695
    %v2786 = vunpack.c.h.b16 %v2695
    %v2787 = vunpack.c.l.b16 %v2696
    %v2788 = vunpack.c.h.b16 %v2696
    %v2789 = vunpack.c.l.b16 %v2697
    %v2790 = vunpack.c.h.b16 %v2697
    %v2791 = vunpack.c.l.b16 %v2698
    %v2792 = vunpack.c.h.b16 %v2698
    %v2793 = vunpack.c.l.b16 %v2699
    %v2794 = vunpack.c.h.b16 %v2699
    %v2795 = vunpack.c.l.b16 %v2700
    %v2796 = vunpack.c.h.b16 %v2700
    %v2797 = vpack.c.b16 %v2737, %v2733
    %v2798 = vpack.c.b16 %v2738, %v2734
    %v2799 = vpack.c.b16 %v2739, %v2735
    %v2800 = vpack.c.b16 %v2740, %v2736
    %v2801 = vpack.c.b16 %v2745, %v2741
    %v2802 = vpack.c.b16 %v2746, %v2742
    %v2803 = vpack.c.b16 %v2747, %v2743
    %v2804 = vpack.c.b16 %v2748, %v2744
    %v2805 = vpack.c.b16 %v2753, %v2749
    %v2806 = vpack.c.b16 %v2754, %v2750
    %v2807 = vpack.c.b16 %v2755, %v2751
    %v2808 = vpack.c.b16 %v2756, %v2752
    %v2809 = vpack.c.b16 %v2761, %v2757
    %v2810 = vpack.c.b16 %v2762, %v2758
    %v2811 = vpack.c.b16 %v2763, %v2759
    %v2812 = vpack.c.b16 %v2764, %v2760
    %v2813 = vpack.c.b16 %v2769, %v2765
    %v2814 = vpack.c.b16 %v2770, %v2766
    %v2815 = vpack.c.b16 %v2771, %v2767
    %v2816 = vpack.c.b16 %v2772, %v2768
    %v2817 = vpack.c.b16 %v2777, %v2773
    %v2818 = vpack.c.b16 %v2778, %v2774
    %v2819 = vpack.c.b16 %v2779, %v2775
    %v2820 = vpack.c.b16 %v2780, %v2776
    %v2821 = vpack.c.b16 %v2785, %v2781
    %v2822 = vpack.c.b16 %v2786, %v2782
    %v2823 = vpack.c.b16 %v2787, %v2783
    %v2824 = vpack.c.b16 %v2788, %v2784
    %v2825 = vpack.c.b16 %v2793, %v2789
    %v2826 = vpack.c.b16 %v2794, %v2790
    %v2827 = vpack.c.b16 %v2795, %v2791
    %v2828 = vpack.c.b16 %v2796, %v2792
    %2861 = vmatprep.subr.bf16.mxu0 %v2826
    %2862 = vmatpush1.bf16.msra.mxu0 %v2825
    %2863 = vmatprep.subr.bf16.mxu0 %v2822
    %2864 = vmatpush1.bf16.msra.mxu0 %v2821
    %2865 = vmatprep.subr.bf16.mxu0 %v2818
    %2866 = vmatpush1.bf16.msra.mxu0 %v2817
    %2867 = vmatprep.subr.bf16.mxu0 %v2814
    %2868 = vmatpush1.bf16.msra.mxu0 %v2813
    %2869 = vmatprep.subr.bf16.mxu0 %v2810
    %2870 = vmatpush1.bf16.msra.mxu0 %v2809
    %2871 = vmatprep.subr.bf16.mxu0 %v2806
    %2872 = vmatpush1.bf16.msra.mxu0 %v2805
    %2873 = vmatprep.subr.bf16.mxu0 %v2802
    %2874 = vmatpush1.bf16.msra.mxu0 %v2801
    %2875 = vmatprep.subr.bf16.mxu0 %v2798
    %2876 = vmatpush1.bf16.msra.mxu0 %v2797
    %2877 = vmatprep.subr.bf16.mxu0 0
    %2878 = vmatpush2.bf16.msra.mxu0 0
    %2879 = vmatprep.subr.bf16.mxu0 0
    %2880 = vmatpush2.bf16.msra.mxu0 0
    %2881 = vmatprep.subr.bf16.mxu0 0
    %2882 = vmatpush2.bf16.msra.mxu0 0
    %2883 = vmatprep.subr.bf16.mxu0 0
    %2884 = vmatpush2.bf16.msra.mxu0 0
    %2885 = vmatprep.subr.bf16.mxu0 0
    %2886 = vmatpush2.bf16.msra.mxu0 0
    %2887 = vmatprep.subr.bf16.mxu0 0
    %2888 = vmatpush2.bf16.msra.mxu0 0
    %2889 = vmatprep.subr.bf16.mxu0 0
    %2890 = vmatpush2.bf16.msra.mxu0 0
    %2891 = vmatprep.subr.bf16.mxu0 0
    %2892 = vmatpush2.bf16.msra.mxu0 0
    %2893 = vmatprep.mubr.bf16.mxu0 0
    %2894 = vmatmul.mubr.bf16.gmra.mxu0 %v2668
    %v2895 = vpop.f32.mrf.mxu0
    %v2896 = vadd.f32 0.0, %v2895
    %v2897 = vpop.f32.mrf.mxu0
    %v2898 = vadd.f32 0.0, %v2897
    %v2899 = vpop.f32.mrf.mxu0
    %v2900 = vpop.f32.mrf.mxu0
    %2901 = vdwg.mxu0
    %2902 = vmatprep.subr.bf16.mxu0 %v2828
    %2903 = vmatpush1.bf16.msra.mxu0 %v2827
    %2904 = vmatprep.subr.bf16.mxu0 %v2824
    %2905 = vmatpush1.bf16.msra.mxu0 %v2823
    %2906 = vmatprep.subr.bf16.mxu0 %v2820
    %2907 = vmatpush1.bf16.msra.mxu0 %v2819
    %2908 = vmatprep.subr.bf16.mxu0 %v2816
    %2909 = vmatpush1.bf16.msra.mxu0 %v2815
    %2910 = vmatprep.subr.bf16.mxu0 %v2812
    %2911 = vmatpush1.bf16.msra.mxu0 %v2811
    %2912 = vmatprep.subr.bf16.mxu0 %v2808
    %2913 = vmatpush1.bf16.msra.mxu0 %v2807
    %2914 = vmatprep.subr.bf16.mxu0 %v2804
    %2915 = vmatpush1.bf16.msra.mxu0 %v2803
    %2916 = vmatprep.subr.bf16.mxu0 %v2800
    %2917 = vmatpush1.bf16.msra.mxu0 %v2799
    %2918 = vmatprep.subr.bf16.mxu0 0
    %2919 = vmatpush2.bf16.msra.mxu0 0
    %2920 = vmatprep.subr.bf16.mxu0 0
    %2921 = vmatpush2.bf16.msra.mxu0 0
    %2922 = vmatprep.subr.bf16.mxu0 0
    %2923 = vmatpush2.bf16.msra.mxu0 0
    %2924 = vmatprep.subr.bf16.mxu0 0
    %2925 = vmatpush2.bf16.msra.mxu0 0
    %2926 = vmatprep.subr.bf16.mxu0 0
    %2927 = vmatpush2.bf16.msra.mxu0 0
    %2928 = vmatprep.subr.bf16.mxu0 0
    %2929 = vmatpush2.bf16.msra.mxu0 0
    %2930 = vmatprep.subr.bf16.mxu0 0
    %2931 = vmatpush2.bf16.msra.mxu0 0
    %2932 = vmatprep.subr.bf16.mxu0 0
    %2933 = vmatpush2.bf16.msra.mxu0 0
    %2934 = vmatprep.mubr.bf16.mxu0 0
    %2935 = vmatmul.mubr.bf16.gmra.mxu0 %v2668
    %v2936 = vpop.f32.mrf.mxu0
    %v2937 = vadd.f32 0.0, %v2936
    %v2938 = vpop.f32.mrf.mxu0
    %v2939 = vadd.f32 0.0, %v2938
    %v2940 = vpop.f32.mrf.mxu0
    %v2941 = vpop.f32.mrf.mxu0
    %2942 = vdwg.mxu0
    %v2947 = vrot.slane %v2896, 2
    %v2948 = vrot.slane %v2898, 2
    %v2949 = vrot.slane %v2937, 2
    %v2950 = vrot.slane %v2939, 2
    %v2955 = vadd.f32 %v2664, %v2947
    %v2956 = vadd.f32 %v2665, %v2948
    %v2957 = vadd.f32 %v2666, %v2949
    %v2958 = vadd.f32 %v2667, %v2950
    %v2959 = vxor.u32 %v2955, 2147483648
    %v2960 = vmul.f32 %v2959, 1.442695
    %v2961 = vpow.pop %v2960
    %v2962 = vadd.f32 %v2961, 1.0
    %v2963 = vrcp.pop %v2962
    %v2964 = vmul.f32 1.0, %v2963
    %v2965 = vxor.u32 %v2956, 2147483648
    %v2966 = vmul.f32 %v2965, 1.442695
    %v2967 = vpow.pop %v2966
    %v2968 = vadd.f32 %v2967, 1.0
    %v2969 = vrcp.pop %v2968
    %v2970 = vmul.f32 1.0, %v2969
    %v2971 = vtanh.pop %v2957
    %v2972 = vxor.u32 %v2958, 2147483648
    %v2973 = vmul.f32 %v2972, 1.442695
    %v2974 = vpow.pop %v2973
    %v2975 = vadd.f32 %v2974, 1.0
    %v2976 = vrcp.pop %v2975
    %v2977 = vmul.f32 1.0, %v2976
    %v2979 = vrot.slane %v2663, 2
    %v2981 = vmul.f32 %v2970, %v2979
    %v2982 = vmul.f32 %v2964, %v2971
    %v2983 = vadd.f32 %v2981, %v2982
    %v2984 = vtanh.pop %v2983
    %v2985 = vmul.f32 %v2977, %v2984
    %2986 = vst [vmem:[#allocation4 - $0x6] sm:$0xc0] %v2985
    %2987 = vst [vmem:[#allocation5 - $0x6] sm:$0xc0] %v2983
    %2988 = vst [vmem:[#allocation3 + $0x8] sm:$0xc0] %v2985
    %v2989 = vld [vmem:[#allocation4] sm:$0x3]
    %2990 = vst [vmem:[#allocation13] sm:$0x3] %v2989
    %v2991 = vld [vmem:[#allocation5] sm:$0x3]
    %2992 = vst [vmem:[#allocation15] sm:$0x3] %v2991
    %v2993 = vld [vmem:[#allocation3] sm:$0xff]
    %v2994 = vld [vmem:[#allocation3 + $0x8] sm:$0xff]
    %v2995 = vpack.c.bf16 %v2994, %v2993
    %v2996 = vld [vmem:[#allocation11] sm:$0xf]
    %v2997 = vld [vmem:[#allocation11 + $0x4] sm:$0xf]
    %v2998 = vld [vmem:[#allocation11 + $0x8] sm:$0xf]
    %v2999 = vld [vmem:[#allocation11 + $0xc] sm:$0xf]
    %v3000 = vld [vmem:[#allocation11 + $0x10] sm:$0xf]
    %v3001 = vld [vmem:[#allocation11 + $0x14] sm:$0xf]
    %v3002 = vld [vmem:[#allocation11 + $0x18] sm:$0xf]
    %v3003 = vld [vmem:[#allocation11 + $0x1c] sm:$0xf]
    %v3004 = vld [vmem:[#allocation11 + $0x20] sm:$0xf]
    %v3005 = vld [vmem:[#allocation11 + $0x24] sm:$0xf]
    %v3006 = vld [vmem:[#allocation11 + $0x28] sm:$0xf]
    %v3007 = vld [vmem:[#allocation11 + $0x2c] sm:$0xf]
    %v3008 = vld [vmem:[#allocation11 + $0x30] sm:$0xf]
    %v3009 = vld [vmem:[#allocation11 + $0x34] sm:$0xf]
    %v3010 = vld [vmem:[#allocation11 + $0x38] sm:$0xf]
    %v3011 = vld [vmem:[#allocation11 + $0x3c] sm:$0xf]
    %v3012 = vld [vmem:[%s7] sm:$0x1]
    %v3014 = vlaneseq
    %v3015 = vshrl.u32 %v3014, 7
    %v3016 = vsub.s32 0, %v3015
    %v3017 = vrot.slane %v3012, %v3016
    %v3035 = vunpack.c.l.b16 %v2996
    %v3036 = vunpack.c.l.b16 %v2997
    %v3037 = vunpack.c.l.b16 %v2998
    %v3038 = vunpack.c.l.b16 %v2999
    %v3039 = vunpack.c.l.b16 %v3000
    %v3040 = vunpack.c.l.b16 %v3001
    %v3041 = vunpack.c.l.b16 %v3002
    %v3042 = vunpack.c.l.b16 %v3003
    %v3043 = vunpack.c.l.b16 %v3004
    %v3044 = vunpack.c.l.b16 %v3005
    %v3045 = vunpack.c.l.b16 %v3006
    %v3046 = vunpack.c.l.b16 %v3007
    %v3047 = vunpack.c.l.b16 %v3008
    %v3048 = vunpack.c.l.b16 %v3009
    %v3049 = vunpack.c.l.b16 %v3010
    %v3050 = vunpack.c.l.b16 %v3011
    %v3051 = vpack.c.b16 %v3036, %v3035
    %v3052 = vpack.c.b16 %v3038, %v3037
    %v3053 = vpack.c.b16 %v3040, %v3039
    %v3054 = vpack.c.b16 %v3042, %v3041
    %v3055 = vpack.c.b16 %v3044, %v3043
    %v3056 = vpack.c.b16 %v3046, %v3045
    %v3057 = vpack.c.b16 %v3048, %v3047
    %v3058 = vpack.c.b16 %v3050, %v3049
    %3067 = vmatprep.subr.bf16.mxu0 0
    %3068 = vmatpush1.bf16.msra.mxu0 %v3058
    %3069 = vmatprep.subr.bf16.mxu0 0
    %3070 = vmatpush1.bf16.msra.mxu0 %v3057
    %3071 = vmatprep.subr.bf16.mxu0 0
    %3072 = vmatpush1.bf16.msra.mxu0 %v3056
    %3073 = vmatprep.subr.bf16.mxu0 0
    %3074 = vmatpush1.bf16.msra.mxu0 %v3055
    %3075 = vmatprep.subr.bf16.mxu0 0
    %3076 = vmatpush1.bf16.msra.mxu0 %v3054
    %3077 = vmatprep.subr.bf16.mxu0 0
    %3078 = vmatpush1.bf16.msra.mxu0 %v3053
    %3079 = vmatprep.subr.bf16.mxu0 0
    %3080 = vmatpush1.bf16.msra.mxu0 %v3052
    %3081 = vmatprep.subr.bf16.mxu0 0
    %3082 = vmatpush1.bf16.msra.mxu0 %v3051
    %3083 = vmatprep.subr.bf16.mxu0 0
    %3084 = vmatpush2.bf16.msra.mxu0 0
    %3085 = vmatprep.subr.bf16.mxu0 0
    %3086 = vmatpush2.bf16.msra.mxu0 0
    %3087 = vmatprep.subr.bf16.mxu0 0
    %3088 = vmatpush2.bf16.msra.mxu0 0
    %3089 = vmatprep.subr.bf16.mxu0 0
    %3090 = vmatpush2.bf16.msra.mxu0 0
    %3091 = vmatprep.subr.bf16.mxu0 0
    %3092 = vmatpush2.bf16.msra.mxu0 0
    %3093 = vmatprep.subr.bf16.mxu0 0
    %3094 = vmatpush2.bf16.msra.mxu0 0
    %3095 = vmatprep.subr.bf16.mxu0 0
    %3096 = vmatpush2.bf16.msra.mxu0 0
    %3097 = vmatprep.subr.bf16.mxu0 0
    %3098 = vmatpush2.bf16.msra.mxu0 0
    %3099 = vmatprep.mubr.bf16.mxu0 0
    %3100 = vmatmul.mubr.bf16.gmra.mxu0 %v2995
    %v3101 = vpop.f32.mrf.mxu0
    %v3102 = vadd.f32 %v3017, %v3101
    %v3103 = vpop.f32.mrf.mxu0
    %v3104 = vpop.f32.mrf.mxu0
    %v3105 = vadd.f32 %v3017, %v3104
    %v3106 = vpop.f32.mrf.mxu0
    %3107 = vdwg.mxu0
    %3108 = vst [vmem:[#allocation12] sm:$0xff] %v3102
    %3109 = vst [vmem:[#allocation12 + $0x8] sm:$0xff] %v3105
    // Predicated region
    $region46: #{tpu_custom_call.1} parent=1 // pred_check
      _
    $region47: #{tpu_custom_call.1} parent=1 // pred_check_branch
      %3111 = sbr.rel (0) target = $region49
    $region48: #{tpu_custom_call.1} parent=1 // pred_region
      %s3113 = ssub.s32 256, 256
      %3114 = vsyncadd [#allocation8], %s3113
      %s3115 = sshll.u32 [#allocation12], 4
      %s3116 = int_to_ptr.vmem [resolvable:$true] %s3115
      %3121 = dma.vmem_to_hbm [thread:$0]  %s3116, 256, %s8, [#allocation8], 128, 128, 8
    $region49: #{tpu_custom_call.1} parent=1 // pred_fallthru
      _
    // Predicated region
    $region50: #{tpu_custom_call.1} parent=1 // pred_check
      _
    $region51: #{tpu_custom_call.1} parent=1 // pred_check_branch
      %3123 = sbr.rel (0) target = $region53
    $region52: #{tpu_custom_call.1} parent=1 // pred_region
      %s3125 = ssub.s32 32, 32
      %3126 = vsyncadd [#allocation14], %s3125
      %s3128 = sshll.u32 [#allocation13], 4
      %s3129 = int_to_ptr.vmem [resolvable:$true] %s3128
      %3131 = dma.vmem_to_hbm [thread:$0]  %s3129, 32, %s9, [#allocation14]
    $region53: #{tpu_custom_call.1} parent=1 // pred_fallthru
      _
    // Predicated region
    $region54: #{tpu_custom_call.1} parent=1 // pred_check
      _
    $region55: #{tpu_custom_call.1} parent=1 // pred_check_branch
      %3133 = sbr.rel (0) target = $region57
    $region56: #{tpu_custom_call.1} parent=1 // pred_region
      %s3135 = ssub.s32 32, 32
      %3136 = vsyncadd [#allocation14], %s3135
      %s3138 = sshll.u32 [#allocation15], 4
      %s3139 = int_to_ptr.vmem [resolvable:$true] %s3138
      %3141 = dma.vmem_to_hbm [thread:$0]  %s3139, 32, %s10, [#allocation14]
    $region57: #{tpu_custom_call.1} parent=1 // pred_fallthru
      _
    // Predicated region
    $region58: #{tpu_custom_call.1} parent=1 // pred_check
      _
    $region59: #{tpu_custom_call.1} parent=1 // pred_check_branch
      %3143 = sbr.rel (0) target = $region61
    $region60: #{tpu_custom_call.1} parent=1 // pred_region
      %3144 = dma.done [#allocation8], 256
    $region61: #{tpu_custom_call.1} parent=1 // pred_fallthru
      _
    // Predicated region
    $region62: #{tpu_custom_call.1} parent=1 // pred_check
      _
    $region63: #{tpu_custom_call.1} parent=1 // pred_check_branch
      %3146 = sbr.rel (0) target = $region65
    $region64: #{tpu_custom_call.1} parent=1 // pred_region
      %3147 = dma.done [#allocation14], 32
    $region65: #{tpu_custom_call.1} parent=1 // pred_fallthru
      _
    // Predicated region
    $region66: #{tpu_custom_call.1} parent=1 // pred_check
      _
    $region67: #{tpu_custom_call.1} parent=1 // pred_check_branch
      %3149 = sbr.rel (0) target = $region69
    $region68: #{tpu_custom_call.1} parent=1 // pred_region
      %3150 = dma.done [#allocation14], 32
    $region69: #{tpu_custom_call.1} parent=1 // pred_fallthru
      _
    %3151 = vsyncpa [#allocation7], 1
    %3152 = vsyncpa [#allocation10], 1
    %3153 = vsyncpa [#allocation8], 1
    %3154 = vsyncpa [#allocation14], 1

</llo_original>
